<compile_context>
chip_gen: v5e
topology: v5e:2x2
jax: 0.10.0
libtpu: 0.0.40
codegen_flags: <defaults>
</compile_context>

<pallas_src>
import functools
import math

import jax
import jax.numpy as jnp
from jax.experimental import pallas as pl
from jax.experimental.pallas import tpu as pltpu

# ---------------- model hyper-parameters (small synthetic RoBERTa) -----------
HIDDEN = 32
N_HEADS = 2
HEAD_DIM = HIDDEN // N_HEADS
INTERMEDIATE = 64
N_LAYERS = 2
SEQ = 8                     # max_length
BATCH = 2
BS = BATCH * SEQ
VOCAB = 64
PAD_IDX = 1                 # RoBERTa padding_idx
POS_ROWS = 16               # >= SEQ + PAD_IDX + 1 (padded up for layout)
NUM_LABELS = 2
LN_EPS = 1e-5
MASK_BIAS = -10000.0        # additive bias for masked positions


# ---------------- in-kernel helpers ------------------------------------------
def _layernorm(x, g, b):
    mu = jnp.mean(x, axis=-1, keepdims=True)
    var = jnp.mean(jnp.square(x - mu), axis=-1, keepdims=True)
    return (x - mu) * jax.lax.rsqrt(var + LN_EPS) * g + b


# ---------------- fused Pallas kernel -----------------------------------------
def fused_forward_kernel(word_ref, pos_ref, maskb_ref,
                         wemb_ref, pemb_ref, temb_ref, embg_ref, embb_ref,
                         wq_ref, bq_ref, wk_ref, bk_ref, wv_ref, bv_ref,
                         wo_ref, bo_ref, ln1g_ref, ln1b_ref,
                         wi_ref, bi_ref, wf_ref, bf_ref, ln2g_ref, ln2b_ref,
                         wd_ref, bd_ref, wp_ref, bp_ref,
                         o_ref):
    # ---- embeddings: lookups done as one-hot matmuls on VMEM-resident tables
    ids = word_ref[...]                                        # (BS, 1) int32
    pid = pos_ref[...]                                         # (BS, 1) int32
    w_oh = (jax.lax.broadcasted_iota(jnp.int32, (BS, VOCAB), 1) == ids
            ).astype(jnp.float32)
    p_oh = (jax.lax.broadcasted_iota(jnp.int32, (BS, POS_ROWS), 1) == pid
            ).astype(jnp.float32)
    x = (jnp.dot(w_oh, wemb_ref[...], preferred_element_type=jnp.float32)
         + jnp.dot(p_oh, pemb_ref[...], preferred_element_type=jnp.float32)
         + temb_ref[...])                                      # + type_emb[0]
    x = _layernorm(x, embg_ref[...], embb_ref[...])            # (BS, H) f32

    scale = 1.0 / math.sqrt(HEAD_DIM)
    for l in range(N_LAYERS):                                  # static unroll
        # ---- self-attention, head-major weights -> no lane slicing / concat
        attn = jnp.zeros((BS, HIDDEN), jnp.float32)
        for h in range(N_HEADS):                               # static unroll
            q = jnp.dot(x, wq_ref[l, h, :, :],
                        preferred_element_type=jnp.float32) + bq_ref[l, h, :, :]
            k = jnp.dot(x, wk_ref[l, h, :, :],
                        preferred_element_type=jnp.float32) + bk_ref[l, h, :, :]
            v = jnp.dot(x, wv_ref[l, h, :, :],
                        preferred_element_type=jnp.float32) + bv_ref[l, h, :, :]
            ctx_rows = []
            for b in range(BATCH):           # static unroll; aligned row slices
                r0, r1 = b * SEQ, (b + 1) * SEQ
                qb, kb, vb = q[r0:r1], k[r0:r1], v[r0:r1]
                s = (jnp.dot(qb, kb.T, preferred_element_type=jnp.float32)
                     * scale + maskb_ref[b, :, :])
                s = s - jnp.max(s, axis=-1, keepdims=True)
                p = jnp.exp(s)
                p = p * pl.reciprocal(jnp.sum(p, axis=-1, keepdims=True),
                                      approx=True)
                ctx_rows.append(jnp.dot(p, vb,
                                        preferred_element_type=jnp.float32))
            ctx = jnp.concatenate(ctx_rows, axis=0)            # (BS, HEAD_DIM)
            attn = attn + jnp.dot(ctx, wo_ref[l, h, :, :],
                                  preferred_element_type=jnp.float32)
        attn = attn + bo_ref[l, :, :]
        x = _layernorm(x + attn, ln1g_ref[l, :, :], ln1b_ref[l, :, :])

        # ---- feed-forward
        hdn = (jnp.dot(x, wi_ref[l, :, :], preferred_element_type=jnp.float32)
               + bi_ref[l, :, :])
        # TODO(synk): HF RoBERTa uses exact erf-GELU; tanh approximation here.
        hdn = jax.nn.gelu(hdn, approximate=True)
        f = (jnp.dot(hdn, wf_ref[l, :, :], preferred_element_type=jnp.float32)
             + bf_ref[l, :, :])
        x = _layernorm(x + f, ln2g_ref[l, :, :], ln2b_ref[l, :, :])

    # ---- classification head: select <s> row of each batch element via a
    #      tiny one-hot matmul (rows 0 and SEQ of the (BS, H) buffer).
    sel = (jax.lax.broadcasted_iota(jnp.int32, (BATCH, BS), 1)
           == jax.lax.broadcasted_iota(jnp.int32, (BATCH, BS), 0) * SEQ
           ).astype(jnp.float32)
    cls = jnp.dot(sel, x, preferred_element_type=jnp.float32)  # (B, H)
    t = jnp.tanh(jnp.dot(cls, wd_ref[...],
                         preferred_element_type=jnp.float32) + bd_ref[...])
    o_ref[...] = (jnp.dot(t, wp_ref[...],
                          preferred_element_type=jnp.float32) + bp_ref[...])


# ---------------- pallas_call wrapper ------------------------------------------
def run_fused_forward(kernel_inputs):
    in_specs = [
        pl.BlockSpec(a.shape, functools.partial(lambda n, i: (0,) * n, a.ndim))
        for a in kernel_inputs
    ]
    return pl.pallas_call(
        fused_forward_kernel,
        out_shape=jax.ShapeDtypeStruct((BATCH, NUM_LABELS), jnp.float32),
        grid=(1,),
        in_specs=in_specs,
        out_specs=pl.BlockSpec((BATCH, NUM_LABELS), lambda i: (0, 0)),
        compiler_params=pltpu.CompilerParams(
            dimension_semantics=("arbitrary",)),
    )(*kernel_inputs)


# ---------------- parameter init (deterministic, synthetic, HF layout) --------
def init_params(key):
    keys = iter(jax.random.split(key, 64))

    def nrm(shape):
        return 0.02 * jax.random.normal(next(keys), shape, jnp.float32)

    params = {
        "word_emb": nrm((VOCAB, HIDDEN)),
        "pos_emb": nrm((POS_ROWS, HIDDEN)),
        "type_emb": nrm((1, HIDDEN)),
        "emb_ln_g": jnp.ones((1, HIDDEN), jnp.float32),
        "emb_ln_b": jnp.zeros((1, HIDDEN), jnp.float32),
        "layers": [],
        "cls_wd": nrm((HIDDEN, HIDDEN)),
        "cls_bd": jnp.zeros((1, HIDDEN), jnp.float32),
        "cls_wp": nrm((HIDDEN, NUM_LABELS)),
        "cls_bp": jnp.zeros((1, NUM_LABELS), jnp.float32),
    }
    for _ in range(N_LAYERS):
        params["layers"].append({
            "wq": nrm((HIDDEN, HIDDEN)), "bq": jnp.zeros((HIDDEN,), jnp.float32),
            "wk": nrm((HIDDEN, HIDDEN)), "bk": jnp.zeros((HIDDEN,), jnp.float32),
            "wv": nrm((HIDDEN, HIDDEN)), "bv": jnp.zeros((HIDDEN,), jnp.float32),
            "wo": nrm((HIDDEN, HIDDEN)), "bo": jnp.zeros((HIDDEN,), jnp.float32),
            "ln1_g": jnp.ones((HIDDEN,), jnp.float32),
            "ln1_b": jnp.zeros((HIDDEN,), jnp.float32),
            "wi": nrm((HIDDEN, INTERMEDIATE)),
            "bi": jnp.zeros((INTERMEDIATE,), jnp.float32),
            "wf": nrm((INTERMEDIATE, HIDDEN)),
            "bf": jnp.zeros((HIDDEN,), jnp.float32),
            "ln2_g": jnp.ones((HIDDEN,), jnp.float32),
            "ln2_b": jnp.zeros((HIDDEN,), jnp.float32),
        })
    return params


def pack_params(params):
    """Repack HF-layout weights into stacked, head-major arrays indexed with
    static [layer, head] leading indices inside the fused kernel."""
    def stack(fn):
        return jnp.stack([fn(lyr) for lyr in params["layers"]], axis=0)

    return {
        "wemb": params["word_emb"], "pemb": params["pos_emb"],
        "temb": params["type_emb"],
        "embg": params["emb_ln_g"], "embb": params["emb_ln_b"],
        # Q/K/V: columns split per head -> (L, NH, H, HD); biases (L, NH, 1, HD)
        "wq": stack(lambda l: l["wq"].reshape(HIDDEN, N_HEADS, HEAD_DIM)
                    .transpose(1, 0, 2)),
        "bq": stack(lambda l: l["bq"].reshape(N_HEADS, 1, HEAD_DIM)),
        "wk": stack(lambda l: l["wk"].reshape(HIDDEN, N_HEADS, HEAD_DIM)
                    .transpose(1, 0, 2)),
        "bk": stack(lambda l: l["bk"].reshape(N_HEADS, 1, HEAD_DIM)),
        "wv": stack(lambda l: l["wv"].reshape(HIDDEN, N_HEADS, HEAD_DIM)
                    .transpose(1, 0, 2)),
        "bv": stack(lambda l: l["bv"].reshape(N_HEADS, 1, HEAD_DIM)),
        # output proj: rows split per head -> (L, NH, HD, H)
        "wo": stack(lambda l: l["wo"].reshape(N_HEADS, HEAD_DIM, HIDDEN)),
        "bo": stack(lambda l: l["bo"].reshape(1, HIDDEN)),
        "ln1g": stack(lambda l: l["ln1_g"].reshape(1, HIDDEN)),
        "ln1b": stack(lambda l: l["ln1_b"].reshape(1, HIDDEN)),
        "wi": stack(lambda l: l["wi"]),
        "bi": stack(lambda l: l["bi"].reshape(1, INTERMEDIATE)),
        "wf": stack(lambda l: l["wf"]),
        "bf": stack(lambda l: l["bf"].reshape(1, HIDDEN)),
        "ln2g": stack(lambda l: l["ln2_g"].reshape(1, HIDDEN)),
        "ln2b": stack(lambda l: l["ln2_b"].reshape(1, HIDDEN)),
        "wd": params["cls_wd"], "bd": params["cls_bd"],
        "wp": params["cls_wp"], "bp": params["cls_bp"],
    }


# ---------------- full forward (tiny glue + one fused Pallas kernel) ----------
def roberta_position_ids(input_ids, pad_idx=PAD_IDX):
    # RoBERTa: positions count only non-pad tokens, offset by padding_idx.
    m = (input_ids != pad_idx).astype(jnp.int32)
    return jnp.cumsum(m, axis=1) * m + pad_idx


@jax.jit
def roberta_pair_forward(word, mask, packed):
    pos_ids = roberta_position_ids(word)
    word_flat = word.reshape(BS, 1).astype(jnp.int32)
    pos_flat = pos_ids.reshape(BS, 1).astype(jnp.int32)
    # additive attention-mask bias, shape (B, 1, S)
    mask_bias = ((1.0 - mask.astype(jnp.float32)) * MASK_BIAS)[:, None, :]

    kernel_inputs = [
        word_flat, pos_flat, mask_bias,
        packed["wemb"], packed["pemb"], packed["temb"],
        packed["embg"], packed["embb"],
        packed["wq"], packed["bq"], packed["wk"], packed["bk"],
        packed["wv"], packed["bv"], packed["wo"], packed["bo"],
        packed["ln1g"], packed["ln1b"],
        packed["wi"], packed["bi"], packed["wf"], packed["bf"],
        packed["ln2g"], packed["ln2b"],
        packed["wd"], packed["bd"], packed["wp"], packed["bp"],
    ]
    return run_fused_forward(kernel_inputs)   # roberta(...)[0]: (B, num_labels)


# ---------------- main ---------------------------------------------------------
if __name__ == "__main__":
    key = jax.random.PRNGKey(0)
    k_ids, k_params = jax.random.split(key)

    # synthetic tokenized pair inputs: inputs['word'] and inputs['mask']
    word = jax.random.randint(k_ids, (BATCH, SEQ), 2, VOCAB, dtype=jnp.int32)
    word = word.at[:, 0].set(0)             # <s>
    word = word.at[1, 6:].set(PAD_IDX)      # pad tail of second example
    mask = jnp.ones((BATCH, SEQ), jnp.int32)
    mask = mask.at[1, 6:].set(0)

    params = init_params(k_params)
    packed = pack_params(params)

    logits = roberta_pair_forward(word, mask, packed)
    jax.block_until_ready(logits)
    assert logits.shape == (BATCH, NUM_LABELS) and logits.dtype == jnp.float32
    print("KERNEL_OK")
</pallas_src>

<mosaic_0001>
module attributes {stable_mosaic.version = 11 : i64} {
  func.func @fused_forward_kernel(%arg0: i32, %arg1: memref<16x1xi32, #tpu.memory_space<vmem>>, %arg2: memref<16x1xi32, #tpu.memory_space<vmem>>, %arg3: memref<2x1x8xf32, #tpu.memory_space<vmem>>, %arg4: memref<64x32xf32, #tpu.memory_space<vmem>>, %arg5: memref<16x32xf32, #tpu.memory_space<vmem>>, %arg6: memref<1x32xf32, #tpu.memory_space<vmem>>, %arg7: memref<1x32xf32, #tpu.memory_space<vmem>>, %arg8: memref<1x32xf32, #tpu.memory_space<vmem>>, %arg9: memref<2x2x32x16xf32, #tpu.memory_space<vmem>>, %arg10: memref<2x2x1x16xf32, #tpu.memory_space<vmem>>, %arg11: memref<2x2x32x16xf32, #tpu.memory_space<vmem>>, %arg12: memref<2x2x1x16xf32, #tpu.memory_space<vmem>>, %arg13: memref<2x2x32x16xf32, #tpu.memory_space<vmem>>, %arg14: memref<2x2x1x16xf32, #tpu.memory_space<vmem>>, %arg15: memref<2x2x16x32xf32, #tpu.memory_space<vmem>>, %arg16: memref<2x1x32xf32, #tpu.memory_space<vmem>>, %arg17: memref<2x1x32xf32, #tpu.memory_space<vmem>>, %arg18: memref<2x1x32xf32, #tpu.memory_space<vmem>>, %arg19: memref<2x32x64xf32, #tpu.memory_space<vmem>>, %arg20: memref<2x1x64xf32, #tpu.memory_space<vmem>>, %arg21: memref<2x64x32xf32, #tpu.memory_space<vmem>>, %arg22: memref<2x1x32xf32, #tpu.memory_space<vmem>>, %arg23: memref<2x1x32xf32, #tpu.memory_space<vmem>>, %arg24: memref<2x1x32xf32, #tpu.memory_space<vmem>>, %arg25: memref<32x32xf32, #tpu.memory_space<vmem>>, %arg26: memref<1x32xf32, #tpu.memory_space<vmem>>, %arg27: memref<32x2xf32, #tpu.memory_space<vmem>>, %arg28: memref<1x2xf32, #tpu.memory_space<vmem>>, %arg29: memref<2x2xf32, #tpu.memory_space<vmem>>) attributes {dimension_semantics = [#tpu.dimension_semantics<arbitrary>], iteration_bounds = array<i64: 1>, scalar_prefetch = 0 : i64, scratch_operands = 0 : i64, tpu.core_type = #tpu.core_type<tc>, window_params = [{pipeline_mode = #tpu.pipeline_mode<synchronous>, transform_indices = @transform_0, window_bounds = array<i64: 16, 1>}, {pipeline_mode = #tpu.pipeline_mode<synchronous>, transform_indices = @transform_1, window_bounds = array<i64: 16, 1>}, {pipeline_mode = #tpu.pipeline_mode<synchronous>, transform_indices = @transform_2, window_bounds = array<i64: 2, 1, 8>}, {pipeline_mode = #tpu.pipeline_mode<synchronous>, transform_indices = @transform_3, window_bounds = array<i64: 64, 32>}, {pipeline_mode = #tpu.pipeline_mode<synchronous>, transform_indices = @transform_4, window_bounds = array<i64: 16, 32>}, {pipeline_mode = #tpu.pipeline_mode<synchronous>, transform_indices = @transform_5, window_bounds = array<i64: 1, 32>}, {pipeline_mode = #tpu.pipeline_mode<synchronous>, transform_indices = @transform_6, window_bounds = array<i64: 1, 32>}, {pipeline_mode = #tpu.pipeline_mode<synchronous>, transform_indices = @transform_7, window_bounds = array<i64: 1, 32>}, {pipeline_mode = #tpu.pipeline_mode<synchronous>, transform_indices = @transform_8, window_bounds = array<i64: 2, 2, 32, 16>}, {pipeline_mode = #tpu.pipeline_mode<synchronous>, transform_indices = @transform_9, window_bounds = array<i64: 2, 2, 1, 16>}, {pipeline_mode = #tpu.pipeline_mode<synchronous>, transform_indices = @transform_10, window_bounds = array<i64: 2, 2, 32, 16>}, {pipeline_mode = #tpu.pipeline_mode<synchronous>, transform_indices = @transform_11, window_bounds = array<i64: 2, 2, 1, 16>}, {pipeline_mode = #tpu.pipeline_mode<synchronous>, transform_indices = @transform_12, window_bounds = array<i64: 2, 2, 32, 16>}, {pipeline_mode = #tpu.pipeline_mode<synchronous>, transform_indices = @transform_13, window_bounds = array<i64: 2, 2, 1, 16>}, {pipeline_mode = #tpu.pipeline_mode<synchronous>, transform_indices = @transform_14, window_bounds = array<i64: 2, 2, 16, 32>}, {pipeline_mode = #tpu.pipeline_mode<synchronous>, transform_indices = @transform_15, window_bounds = array<i64: 2, 1, 32>}, {pipeline_mode = #tpu.pipeline_mode<synchronous>, transform_indices = @transform_16, window_bounds = array<i64: 2, 1, 32>}, {pipeline_mode = #tpu.pipeline_mode<synchronous>, transform_indices = @transform_17, window_bounds = array<i64: 2, 1, 32>}, {pipeline_mode = #tpu.pipeline_mode<synchronous>, transform_indices = @transform_18, window_bounds = array<i64: 2, 32, 64>}, {pipeline_mode = #tpu.pipeline_mode<synchronous>, transform_indices = @transform_19, window_bounds = array<i64: 2, 1, 64>}, {pipeline_mode = #tpu.pipeline_mode<synchronous>, transform_indices = @transform_20, window_bounds = array<i64: 2, 64, 32>}, {pipeline_mode = #tpu.pipeline_mode<synchronous>, transform_indices = @transform_21, window_bounds = array<i64: 2, 1, 32>}, {pipeline_mode = #tpu.pipeline_mode<synchronous>, transform_indices = @transform_22, window_bounds = array<i64: 2, 1, 32>}, {pipeline_mode = #tpu.pipeline_mode<synchronous>, transform_indices = @transform_23, window_bounds = array<i64: 2, 1, 32>}, {pipeline_mode = #tpu.pipeline_mode<synchronous>, transform_indices = @transform_24, window_bounds = array<i64: 32, 32>}, {pipeline_mode = #tpu.pipeline_mode<synchronous>, transform_indices = @transform_25, window_bounds = array<i64: 1, 32>}, {pipeline_mode = #tpu.pipeline_mode<synchronous>, transform_indices = @transform_26, window_bounds = array<i64: 32, 2>}, {pipeline_mode = #tpu.pipeline_mode<synchronous>, transform_indices = @transform_27, window_bounds = array<i64: 1, 2>}, {pipeline_mode = #tpu.pipeline_mode<synchronous>, transform_indices = @transform_28, window_bounds = array<i64: 2, 2>}]} {
    %c0 = arith.constant 0 : index
    %c0_0 = arith.constant 0 : index
    %0 = vector.load %arg1[%c0, %c0_0] : memref<16x1xi32, #tpu.memory_space<vmem>>, vector<16x1xi32>
    %c0_1 = arith.constant 0 : index
    %c0_2 = arith.constant 0 : index
    %1 = vector.load %arg2[%c0_1, %c0_2] : memref<16x1xi32, #tpu.memory_space<vmem>>, vector<16x1xi32>
    %2 = tpu.iota {dimensions = array<i32: 1>} : vector<16x64xi32>
    %3 = vector.broadcast %0 : vector<16x1xi32> to vector<16x64xi32>
    %4 = arith.cmpi eq, %2, %3 : vector<16x64xi32>
    %5 = arith.extui %4 : vector<16x64xi1> to vector<16x64xi32>
    %6 = arith.sitofp %5 : vector<16x64xi32> to vector<16x64xf32>
    %7 = tpu.iota {dimensions = array<i32: 1>} : vector<16x16xi32>
    %8 = vector.broadcast %1 : vector<16x1xi32> to vector<16x16xi32>
    %9 = arith.cmpi eq, %7, %8 : vector<16x16xi32>
    %10 = arith.extui %9 : vector<16x16xi1> to vector<16x16xi32>
    %11 = arith.sitofp %10 : vector<16x16xi32> to vector<16x16xf32>
    %c0_3 = arith.constant 0 : index
    %c0_4 = arith.constant 0 : index
    %12 = vector.load %arg4[%c0_3, %c0_4] : memref<64x32xf32, #tpu.memory_space<vmem>>, vector<64x32xf32>
    %cst = arith.constant dense<0.000000e+00> : vector<16x32xf32>
    %13 = tpu.matmul %6, %12, %cst {dimension_numbers = #tpu.dot_dimension_numbers<[1], [0], [0], [1], [0, 0, 1, 1], [], []>} : vector<16x64xf32>, vector<64x32xf32>, vector<16x32xf32> -> vector<16x32xf32>
    %c0_5 = arith.constant 0 : index
    %c0_6 = arith.constant 0 : index
    %14 = vector.load %arg5[%c0_5, %c0_6] : memref<16x32xf32, #tpu.memory_space<vmem>>, vector<16x32xf32>
    %cst_7 = arith.constant dense<0.000000e+00> : vector<16x32xf32>
    %15 = tpu.matmul %11, %14, %cst_7 {dimension_numbers = #tpu.dot_dimension_numbers<[1], [0], [0], [1], [0, 0, 1, 1], [], []>} : vector<16x16xf32>, vector<16x32xf32>, vector<16x32xf32> -> vector<16x32xf32>
    %16 = arith.addf %13, %15 : vector<16x32xf32>
    %c0_8 = arith.constant 0 : index
    %c0_9 = arith.constant 0 : index
    %17 = vector.load %arg6[%c0_8, %c0_9] : memref<1x32xf32, #tpu.memory_space<vmem>>, vector<1x32xf32>
    %18 = vector.broadcast %17 : vector<1x32xf32> to vector<16x32xf32>
    %19 = arith.addf %16, %18 : vector<16x32xf32>
    %c0_10 = arith.constant 0 : index
    %c0_11 = arith.constant 0 : index
    %20 = vector.load %arg7[%c0_10, %c0_11] : memref<1x32xf32, #tpu.memory_space<vmem>>, vector<1x32xf32>
    %c0_12 = arith.constant 0 : index
    %c0_13 = arith.constant 0 : index
    %21 = vector.load %arg8[%c0_12, %c0_13] : memref<1x32xf32, #tpu.memory_space<vmem>>, vector<1x32xf32>
    %cst_14 = arith.constant dense<0.000000e+00> : vector<16xf32>
    %22 = vector.multi_reduction <add>, %19, %cst_14 [1] : vector<16x32xf32> to vector<16xf32>
    %23 = vector.shape_cast %22 : vector<16xf32> to vector<16x1xf32>
    %cst_15 = arith.constant 3.200000e+01 : f32
    %24 = vector.broadcast %cst_15 : f32 to vector<16x1xf32>
    %25 = arith.divf %23, %24 : vector<16x1xf32>
    %26 = vector.broadcast %25 : vector<16x1xf32> to vector<16x32xf32>
    %27 = arith.subf %19, %26 : vector<16x32xf32>
    %28 = arith.mulf %27, %27 : vector<16x32xf32>
    %cst_16 = arith.constant dense<0.000000e+00> : vector<16xf32>
    %29 = vector.multi_reduction <add>, %28, %cst_16 [1] : vector<16x32xf32> to vector<16xf32>
    %30 = vector.shape_cast %29 : vector<16xf32> to vector<16x1xf32>
    %cst_17 = arith.constant 3.200000e+01 : f32
    %31 = vector.broadcast %cst_17 : f32 to vector<16x1xf32>
    %32 = arith.divf %30, %31 : vector<16x1xf32>
    %33 = vector.broadcast %25 : vector<16x1xf32> to vector<16x32xf32>
    %34 = arith.subf %19, %33 : vector<16x32xf32>
    %cst_18 = arith.constant 9.99999974E-6 : f32
    %35 = vector.broadcast %cst_18 : f32 to vector<16x1xf32>
    %36 = arith.addf %32, %35 : vector<16x1xf32>
    %37 = math.rsqrt %36 : vector<16x1xf32>
    %38 = vector.broadcast %37 : vector<16x1xf32> to vector<16x32xf32>
    %39 = arith.mulf %34, %38 : vector<16x32xf32>
    %40 = vector.broadcast %20 : vector<1x32xf32> to vector<16x32xf32>
    %41 = arith.mulf %39, %40 : vector<16x32xf32>
    %42 = vector.broadcast %21 : vector<1x32xf32> to vector<16x32xf32>
    %43 = arith.addf %41, %42 : vector<16x32xf32>
    %cst_19 = arith.constant 0.000000e+00 : f32
    %44 = vector.broadcast %cst_19 : f32 to vector<16x32xf32>
    %c0_20 = arith.constant 0 : index
    %c0_21 = arith.constant 0 : index
    %c0_22 = arith.constant 0 : index
    %c0_23 = arith.constant 0 : index
    %45 = vector.load %arg9[%c0_20, %c0_21, %c0_22, %c0_23] : memref<2x2x32x16xf32, #tpu.memory_space<vmem>>, vector<1x1x32x16xf32>
    %46 = vector.shape_cast %45 : vector<1x1x32x16xf32> to vector<32x16xf32>
    %cst_24 = arith.constant dense<0.000000e+00> : vector<16x16xf32>
    %47 = tpu.matmul %43, %46, %cst_24 {dimension_numbers = #tpu.dot_dimension_numbers<[1], [0], [0], [1], [0, 0, 1, 1], [], []>} : vector<16x32xf32>, vector<32x16xf32>, vector<16x16xf32> -> vector<16x16xf32>
    %c0_25 = arith.constant 0 : index
    %c0_26 = arith.constant 0 : index
    %c0_27 = arith.constant 0 : index
    %c0_28 = arith.constant 0 : index
    %48 = vector.load %arg10[%c0_25, %c0_26, %c0_27, %c0_28] : memref<2x2x1x16xf32, #tpu.memory_space<vmem>>, vector<1x1x1x16xf32>
    %49 = vector.shape_cast %48 : vector<1x1x1x16xf32> to vector<1x16xf32>
    %50 = vector.broadcast %49 : vector<1x16xf32> to vector<16x16xf32>
    %51 = arith.addf %47, %50 : vector<16x16xf32>
    %c0_29 = arith.constant 0 : index
    %c0_30 = arith.constant 0 : index
    %c0_31 = arith.constant 0 : index
    %c0_32 = arith.constant 0 : index
    %52 = vector.load %arg11[%c0_29, %c0_30, %c0_31, %c0_32] : memref<2x2x32x16xf32, #tpu.memory_space<vmem>>, vector<1x1x32x16xf32>
    %53 = vector.shape_cast %52 : vector<1x1x32x16xf32> to vector<32x16xf32>
    %cst_33 = arith.constant dense<0.000000e+00> : vector<16x16xf32>
    %54 = tpu.matmul %43, %53, %cst_33 {dimension_numbers = #tpu.dot_dimension_numbers<[1], [0], [0], [1], [0, 0, 1, 1], [], []>} : vector<16x32xf32>, vector<32x16xf32>, vector<16x16xf32> -> vector<16x16xf32>
    %c0_34 = arith.constant 0 : index
    %c0_35 = arith.constant 0 : index
    %c0_36 = arith.constant 0 : index
    %c0_37 = arith.constant 0 : index
    %55 = vector.load %arg12[%c0_34, %c0_35, %c0_36, %c0_37] : memref<2x2x1x16xf32, #tpu.memory_space<vmem>>, vector<1x1x1x16xf32>
    %56 = vector.shape_cast %55 : vector<1x1x1x16xf32> to vector<1x16xf32>
    %57 = vector.broadcast %56 : vector<1x16xf32> to vector<16x16xf32>
    %58 = arith.addf %54, %57 : vector<16x16xf32>
    %c0_38 = arith.constant 0 : index
    %c0_39 = arith.constant 0 : index
    %c0_40 = arith.constant 0 : index
    %c0_41 = arith.constant 0 : index
    %59 = vector.load %arg13[%c0_38, %c0_39, %c0_40, %c0_41] : memref<2x2x32x16xf32, #tpu.memory_space<vmem>>, vector<1x1x32x16xf32>
    %60 = vector.shape_cast %59 : vector<1x1x32x16xf32> to vector<32x16xf32>
    %cst_42 = arith.constant dense<0.000000e+00> : vector<16x16xf32>
    %61 = tpu.matmul %43, %60, %cst_42 {dimension_numbers = #tpu.dot_dimension_numbers<[1], [0], [0], [1], [0, 0, 1, 1], [], []>} : vector<16x32xf32>, vector<32x16xf32>, vector<16x16xf32> -> vector<16x16xf32>
    %c0_43 = arith.constant 0 : index
    %c0_44 = arith.constant 0 : index
    %c0_45 = arith.constant 0 : index
    %c0_46 = arith.constant 0 : index
    %62 = vector.load %arg14[%c0_43, %c0_44, %c0_45, %c0_46] : memref<2x2x1x16xf32, #tpu.memory_space<vmem>>, vector<1x1x1x16xf32>
    %63 = vector.shape_cast %62 : vector<1x1x1x16xf32> to vector<1x16xf32>
    %64 = vector.broadcast %63 : vector<1x16xf32> to vector<16x16xf32>
    %65 = arith.addf %61, %64 : vector<16x16xf32>
    %66 = vector.extract_strided_slice %51 {offsets = [0, 0], sizes = [8, 16], strides = [1, 1]} : vector<16x16xf32> to vector<8x16xf32>
    %67 = vector.extract_strided_slice %58 {offsets = [0, 0], sizes = [8, 16], strides = [1, 1]} : vector<16x16xf32> to vector<8x16xf32>
    %68 = vector.extract_strided_slice %65 {offsets = [0, 0], sizes = [8, 16], strides = [1, 1]} : vector<16x16xf32> to vector<8x16xf32>
    %69 = tpu.transpose %67, [1, 0] : vector<8x16xf32> -> vector<16x8xf32>
    %cst_47 = arith.constant dense<0.000000e+00> : vector<8x8xf32>
    %70 = tpu.matmul %66, %69, %cst_47 {dimension_numbers = #tpu.dot_dimension_numbers<[1], [0], [0], [1], [0, 0, 1, 1], [], []>} : vector<8x16xf32>, vector<16x8xf32>, vector<8x8xf32> -> vector<8x8xf32>
    %cst_48 = arith.constant 2.500000e-01 : f32
    %71 = vector.broadcast %cst_48 : f32 to vector<8x8xf32>
    %72 = arith.mulf %70, %71 : vector<8x8xf32>
    %c0_49 = arith.constant 0 : index
    %c0_50 = arith.constant 0 : index
    %c0_51 = arith.constant 0 : index
    %73 = vector.load %arg3[%c0_49, %c0_50, %c0_51] : memref<2x1x8xf32, #tpu.memory_space<vmem>>, vector<1x1x8xf32>
    %74 = vector.shape_cast %73 : vector<1x1x8xf32> to vector<1x8xf32>
    %75 = vector.broadcast %74 : vector<1x8xf32> to vector<8x8xf32>
    %76 = arith.addf %72, %75 : vector<8x8xf32>
    %cst_52 = arith.constant dense<0xFF800000> : vector<8xf32>
    %77 = vector.multi_reduction <maximumf>, %76, %cst_52 [1] : vector<8x8xf32> to vector<8xf32>
    %78 = vector.shape_cast %77 : vector<8xf32> to vector<8x1xf32>
    %79 = vector.broadcast %78 : vector<8x1xf32> to vector<8x8xf32>
    %80 = arith.subf %76, %79 : vector<8x8xf32>
    %81 = math.exp %80 : vector<8x8xf32>
    %cst_53 = arith.constant dense<0.000000e+00> : vector<8xf32>
    %82 = vector.multi_reduction <add>, %81, %cst_53 [1] : vector<8x8xf32> to vector<8xf32>
    %83 = vector.shape_cast %82 : vector<8xf32> to vector<8x1xf32>
    %84 = tpu.reciprocal %83 {approx = true} : vector<8x1xf32> -> vector<8x1xf32>
    %85 = vector.broadcast %84 : vector<8x1xf32> to vector<8x8xf32>
    %86 = arith.mulf %81, %85 : vector<8x8xf32>
    %cst_54 = arith.constant dense<0.000000e+00> : vector<8x16xf32>
    %87 = tpu.matmul %86, %68, %cst_54 {dimension_numbers = #tpu.dot_dimension_numbers<[1], [0], [0], [1], [0, 0, 1, 1], [], []>} : vector<8x8xf32>, vector<8x16xf32>, vector<8x16xf32> -> vector<8x16xf32>
    %88 = vector.extract_strided_slice %51 {offsets = [8, 0], sizes = [8, 16], strides = [1, 1]} : vector<16x16xf32> to vector<8x16xf32>
    %89 = vector.extract_strided_slice %58 {offsets = [8, 0], sizes = [8, 16], strides = [1, 1]} : vector<16x16xf32> to vector<8x16xf32>
    %90 = vector.extract_strided_slice %65 {offsets = [8, 0], sizes = [8, 16], strides = [1, 1]} : vector<16x16xf32> to vector<8x16xf32>
    %91 = tpu.transpose %89, [1, 0] : vector<8x16xf32> -> vector<16x8xf32>
    %cst_55 = arith.constant dense<0.000000e+00> : vector<8x8xf32>
    %92 = tpu.matmul %88, %91, %cst_55 {dimension_numbers = #tpu.dot_dimension_numbers<[1], [0], [0], [1], [0, 0, 1, 1], [], []>} : vector<8x16xf32>, vector<16x8xf32>, vector<8x8xf32> -> vector<8x8xf32>
    %cst_56 = arith.constant 2.500000e-01 : f32
    %93 = vector.broadcast %cst_56 : f32 to vector<8x8xf32>
    %94 = arith.mulf %92, %93 : vector<8x8xf32>
    %c1 = arith.constant 1 : index
    %c0_57 = arith.constant 0 : index
    %c0_58 = arith.constant 0 : index
    %95 = vector.load %arg3[%c1, %c0_57, %c0_58] : memref<2x1x8xf32, #tpu.memory_space<vmem>>, vector<1x1x8xf32>
    %96 = vector.shape_cast %95 : vector<1x1x8xf32> to vector<1x8xf32>
    %97 = vector.broadcast %96 : vector<1x8xf32> to vector<8x8xf32>
    %98 = arith.addf %94, %97 : vector<8x8xf32>
    %cst_59 = arith.constant dense<0xFF800000> : vector<8xf32>
    %99 = vector.multi_reduction <maximumf>, %98, %cst_59 [1] : vector<8x8xf32> to vector<8xf32>
    %100 = vector.shape_cast %99 : vector<8xf32> to vector<8x1xf32>
    %101 = vector.broadcast %100 : vector<8x1xf32> to vector<8x8xf32>
    %102 = arith.subf %98, %101 : vector<8x8xf32>
    %103 = math.exp %102 : vector<8x8xf32>
    %cst_60 = arith.constant dense<0.000000e+00> : vector<8xf32>
    %104 = vector.multi_reduction <add>, %103, %cst_60 [1] : vector<8x8xf32> to vector<8xf32>
    %105 = vector.shape_cast %104 : vector<8xf32> to vector<8x1xf32>
    %106 = tpu.reciprocal %105 {approx = true} : vector<8x1xf32> -> vector<8x1xf32>
    %107 = vector.broadcast %106 : vector<8x1xf32> to vector<8x8xf32>
    %108 = arith.mulf %103, %107 : vector<8x8xf32>
    %cst_61 = arith.constant dense<0.000000e+00> : vector<8x16xf32>
    %109 = tpu.matmul %108, %90, %cst_61 {dimension_numbers = #tpu.dot_dimension_numbers<[1], [0], [0], [1], [0, 0, 1, 1], [], []>} : vector<8x8xf32>, vector<8x16xf32>, vector<8x16xf32> -> vector<8x16xf32>
    %110 = tpu.concatenate %87, %109 in 0 : vector<8x16xf32>, vector<8x16xf32> -> vector<16x16xf32>
    %c0_62 = arith.constant 0 : index
    %c0_63 = arith.constant 0 : index
    %c0_64 = arith.constant 0 : index
    %c0_65 = arith.constant 0 : index
    %111 = vector.load %arg15[%c0_62, %c0_63, %c0_64, %c0_65] : memref<2x2x16x32xf32, #tpu.memory_space<vmem>>, vector<1x1x16x32xf32>
    %112 = vector.shape_cast %111 : vector<1x1x16x32xf32> to vector<16x32xf32>
    %cst_66 = arith.constant dense<0.000000e+00> : vector<16x32xf32>
    %113 = tpu.matmul %110, %112, %cst_66 {dimension_numbers = #tpu.dot_dimension_numbers<[1], [0], [0], [1], [0, 0, 1, 1], [], []>} : vector<16x16xf32>, vector<16x32xf32>, vector<16x32xf32> -> vector<16x32xf32>
    %114 = arith.addf %44, %113 : vector<16x32xf32>
    %c0_67 = arith.constant 0 : index
    %c1_68 = arith.constant 1 : index
    %c0_69 = arith.constant 0 : index
    %c0_70 = arith.constant 0 : index
    %115 = vector.load %arg9[%c0_67, %c1_68, %c0_69, %c0_70] : memref<2x2x32x16xf32, #tpu.memory_space<vmem>>, vector<1x1x32x16xf32>
    %116 = vector.shape_cast %115 : vector<1x1x32x16xf32> to vector<32x16xf32>
    %cst_71 = arith.constant dense<0.000000e+00> : vector<16x16xf32>
    %117 = tpu.matmul %43, %116, %cst_71 {dimension_numbers = #tpu.dot_dimension_numbers<[1], [0], [0], [1], [0, 0, 1, 1], [], []>} : vector<16x32xf32>, vector<32x16xf32>, vector<16x16xf32> -> vector<16x16xf32>
    %c0_72 = arith.constant 0 : index
    %c1_73 = arith.constant 1 : index
    %c0_74 = arith.constant 0 : index
    %c0_75 = arith.constant 0 : index
    %118 = vector.load %arg10[%c0_72, %c1_73, %c0_74, %c0_75] : memref<2x2x1x16xf32, #tpu.memory_space<vmem>>, vector<1x1x1x16xf32>
    %119 = vector.shape_cast %118 : vector<1x1x1x16xf32> to vector<1x16xf32>
    %120 = vector.broadcast %119 : vector<1x16xf32> to vector<16x16xf32>
    %121 = arith.addf %117, %120 : vector<16x16xf32>
    %c0_76 = arith.constant 0 : index
    %c1_77 = arith.constant 1 : index
    %c0_78 = arith.constant 0 : index
    %c0_79 = arith.constant 0 : index
    %122 = vector.load %arg11[%c0_76, %c1_77, %c0_78, %c0_79] : memref<2x2x32x16xf32, #tpu.memory_space<vmem>>, vector<1x1x32x16xf32>
    %123 = vector.shape_cast %122 : vector<1x1x32x16xf32> to vector<32x16xf32>
    %cst_80 = arith.constant dense<0.000000e+00> : vector<16x16xf32>
    %124 = tpu.matmul %43, %123, %cst_80 {dimension_numbers = #tpu.dot_dimension_numbers<[1], [0], [0], [1], [0, 0, 1, 1], [], []>} : vector<16x32xf32>, vector<32x16xf32>, vector<16x16xf32> -> vector<16x16xf32>
    %c0_81 = arith.constant 0 : index
    %c1_82 = arith.constant 1 : index
    %c0_83 = arith.constant 0 : index
    %c0_84 = arith.constant 0 : index
    %125 = vector.load %arg12[%c0_81, %c1_82, %c0_83, %c0_84] : memref<2x2x1x16xf32, #tpu.memory_space<vmem>>, vector<1x1x1x16xf32>
    %126 = vector.shape_cast %125 : vector<1x1x1x16xf32> to vector<1x16xf32>
    %127 = vector.broadcast %126 : vector<1x16xf32> to vector<16x16xf32>
    %128 = arith.addf %124, %127 : vector<16x16xf32>
    %c0_85 = arith.constant 0 : index
    %c1_86 = arith.constant 1 : index
    %c0_87 = arith.constant 0 : index
    %c0_88 = arith.constant 0 : index
    %129 = vector.load %arg13[%c0_85, %c1_86, %c0_87, %c0_88] : memref<2x2x32x16xf32, #tpu.memory_space<vmem>>, vector<1x1x32x16xf32>
    %130 = vector.shape_cast %129 : vector<1x1x32x16xf32> to vector<32x16xf32>
    %cst_89 = arith.constant dense<0.000000e+00> : vector<16x16xf32>
    %131 = tpu.matmul %43, %130, %cst_89 {dimension_numbers = #tpu.dot_dimension_numbers<[1], [0], [0], [1], [0, 0, 1, 1], [], []>} : vector<16x32xf32>, vector<32x16xf32>, vector<16x16xf32> -> vector<16x16xf32>
    %c0_90 = arith.constant 0 : index
    %c1_91 = arith.constant 1 : index
    %c0_92 = arith.constant 0 : index
    %c0_93 = arith.constant 0 : index
    %132 = vector.load %arg14[%c0_90, %c1_91, %c0_92, %c0_93] : memref<2x2x1x16xf32, #tpu.memory_space<vmem>>, vector<1x1x1x16xf32>
    %133 = vector.shape_cast %132 : vector<1x1x1x16xf32> to vector<1x16xf32>
    %134 = vector.broadcast %133 : vector<1x16xf32> to vector<16x16xf32>
    %135 = arith.addf %131, %134 : vector<16x16xf32>
    %136 = vector.extract_strided_slice %121 {offsets = [0, 0], sizes = [8, 16], strides = [1, 1]} : vector<16x16xf32> to vector<8x16xf32>
    %137 = vector.extract_strided_slice %128 {offsets = [0, 0], sizes = [8, 16], strides = [1, 1]} : vector<16x16xf32> to vector<8x16xf32>
    %138 = vector.extract_strided_slice %135 {offsets = [0, 0], sizes = [8, 16], strides = [1, 1]} : vector<16x16xf32> to vector<8x16xf32>
    %139 = tpu.transpose %137, [1, 0] : vector<8x16xf32> -> vector<16x8xf32>
    %cst_94 = arith.constant dense<0.000000e+00> : vector<8x8xf32>
    %140 = tpu.matmul %136, %139, %cst_94 {dimension_numbers = #tpu.dot_dimension_numbers<[1], [0], [0], [1], [0, 0, 1, 1], [], []>} : vector<8x16xf32>, vector<16x8xf32>, vector<8x8xf32> -> vector<8x8xf32>
    %cst_95 = arith.constant 2.500000e-01 : f32
    %141 = vector.broadcast %cst_95 : f32 to vector<8x8xf32>
    %142 = arith.mulf %140, %141 : vector<8x8xf32>
    %c0_96 = arith.constant 0 : index
    %c0_97 = arith.constant 0 : index
    %c0_98 = arith.constant 0 : index
    %143 = vector.load %arg3[%c0_96, %c0_97, %c0_98] : memref<2x1x8xf32, #tpu.memory_space<vmem>>, vector<1x1x8xf32>
    %144 = vector.shape_cast %143 : vector<1x1x8xf32> to vector<1x8xf32>
    %145 = vector.broadcast %144 : vector<1x8xf32> to vector<8x8xf32>
    %146 = arith.addf %142, %145 : vector<8x8xf32>
    %cst_99 = arith.constant dense<0xFF800000> : vector<8xf32>
    %147 = vector.multi_reduction <maximumf>, %146, %cst_99 [1] : vector<8x8xf32> to vector<8xf32>
    %148 = vector.shape_cast %147 : vector<8xf32> to vector<8x1xf32>
    %149 = vector.broadcast %148 : vector<8x1xf32> to vector<8x8xf32>
    %150 = arith.subf %146, %149 : vector<8x8xf32>
    %151 = math.exp %150 : vector<8x8xf32>
    %cst_100 = arith.constant dense<0.000000e+00> : vector<8xf32>
    %152 = vector.multi_reduction <add>, %151, %cst_100 [1] : vector<8x8xf32> to vector<8xf32>
    %153 = vector.shape_cast %152 : vector<8xf32> to vector<8x1xf32>
    %154 = tpu.reciprocal %153 {approx = true} : vector<8x1xf32> -> vector<8x1xf32>
    %155 = vector.broadcast %154 : vector<8x1xf32> to vector<8x8xf32>
    %156 = arith.mulf %151, %155 : vector<8x8xf32>
    %cst_101 = arith.constant dense<0.000000e+00> : vector<8x16xf32>
    %157 = tpu.matmul %156, %138, %cst_101 {dimension_numbers = #tpu.dot_dimension_numbers<[1], [0], [0], [1], [0, 0, 1, 1], [], []>} : vector<8x8xf32>, vector<8x16xf32>, vector<8x16xf32> -> vector<8x16xf32>
    %158 = vector.extract_strided_slice %121 {offsets = [8, 0], sizes = [8, 16], strides = [1, 1]} : vector<16x16xf32> to vector<8x16xf32>
    %159 = vector.extract_strided_slice %128 {offsets = [8, 0], sizes = [8, 16], strides = [1, 1]} : vector<16x16xf32> to vector<8x16xf32>
    %160 = vector.extract_strided_slice %135 {offsets = [8, 0], sizes = [8, 16], strides = [1, 1]} : vector<16x16xf32> to vector<8x16xf32>
    %161 = tpu.transpose %159, [1, 0] : vector<8x16xf32> -> vector<16x8xf32>
    %cst_102 = arith.constant dense<0.000000e+00> : vector<8x8xf32>
    %162 = tpu.matmul %158, %161, %cst_102 {dimension_numbers = #tpu.dot_dimension_numbers<[1], [0], [0], [1], [0, 0, 1, 1], [], []>} : vector<8x16xf32>, vector<16x8xf32>, vector<8x8xf32> -> vector<8x8xf32>
    %cst_103 = arith.constant 2.500000e-01 : f32
    %163 = vector.broadcast %cst_103 : f32 to vector<8x8xf32>
    %164 = arith.mulf %162, %163 : vector<8x8xf32>
    %c1_104 = arith.constant 1 : index
    %c0_105 = arith.constant 0 : index
    %c0_106 = arith.constant 0 : index
    %165 = vector.load %arg3[%c1_104, %c0_105, %c0_106] : memref<2x1x8xf32, #tpu.memory_space<vmem>>, vector<1x1x8xf32>
    %166 = vector.shape_cast %165 : vector<1x1x8xf32> to vector<1x8xf32>
    %167 = vector.broadcast %166 : vector<1x8xf32> to vector<8x8xf32>
    %168 = arith.addf %164, %167 : vector<8x8xf32>
    %cst_107 = arith.constant dense<0xFF800000> : vector<8xf32>
    %169 = vector.multi_reduction <maximumf>, %168, %cst_107 [1] : vector<8x8xf32> to vector<8xf32>
    %170 = vector.shape_cast %169 : vector<8xf32> to vector<8x1xf32>
    %171 = vector.broadcast %170 : vector<8x1xf32> to vector<8x8xf32>
    %172 = arith.subf %168, %171 : vector<8x8xf32>
    %173 = math.exp %172 : vector<8x8xf32>
    %cst_108 = arith.constant dense<0.000000e+00> : vector<8xf32>
    %174 = vector.multi_reduction <add>, %173, %cst_108 [1] : vector<8x8xf32> to vector<8xf32>
    %175 = vector.shape_cast %174 : vector<8xf32> to vector<8x1xf32>
    %176 = tpu.reciprocal %175 {approx = true} : vector<8x1xf32> -> vector<8x1xf32>
    %177 = vector.broadcast %176 : vector<8x1xf32> to vector<8x8xf32>
    %178 = arith.mulf %173, %177 : vector<8x8xf32>
    %cst_109 = arith.constant dense<0.000000e+00> : vector<8x16xf32>
    %179 = tpu.matmul %178, %160, %cst_109 {dimension_numbers = #tpu.dot_dimension_numbers<[1], [0], [0], [1], [0, 0, 1, 1], [], []>} : vector<8x8xf32>, vector<8x16xf32>, vector<8x16xf32> -> vector<8x16xf32>
    %180 = tpu.concatenate %157, %179 in 0 : vector<8x16xf32>, vector<8x16xf32> -> vector<16x16xf32>
    %c0_110 = arith.constant 0 : index
    %c1_111 = arith.constant 1 : index
    %c0_112 = arith.constant 0 : index
    %c0_113 = arith.constant 0 : index
    %181 = vector.load %arg15[%c0_110, %c1_111, %c0_112, %c0_113] : memref<2x2x16x32xf32, #tpu.memory_space<vmem>>, vector<1x1x16x32xf32>
    %182 = vector.shape_cast %181 : vector<1x1x16x32xf32> to vector<16x32xf32>
    %cst_114 = arith.constant dense<0.000000e+00> : vector<16x32xf32>
    %183 = tpu.matmul %180, %182, %cst_114 {dimension_numbers = #tpu.dot_dimension_numbers<[1], [0], [0], [1], [0, 0, 1, 1], [], []>} : vector<16x16xf32>, vector<16x32xf32>, vector<16x32xf32> -> vector<16x32xf32>
    %184 = arith.addf %114, %183 : vector<16x32xf32>
    %c0_115 = arith.constant 0 : index
    %c0_116 = arith.constant 0 : index
    %c0_117 = arith.constant 0 : index
    %185 = vector.load %arg16[%c0_115, %c0_116, %c0_117] : memref<2x1x32xf32, #tpu.memory_space<vmem>>, vector<1x1x32xf32>
    %186 = vector.shape_cast %185 : vector<1x1x32xf32> to vector<1x32xf32>
    %187 = vector.broadcast %186 : vector<1x32xf32> to vector<16x32xf32>
    %188 = arith.addf %184, %187 : vector<16x32xf32>
    %189 = arith.addf %43, %188 : vector<16x32xf32>
    %c0_118 = arith.constant 0 : index
    %c0_119 = arith.constant 0 : index
    %c0_120 = arith.constant 0 : index
    %190 = vector.load %arg17[%c0_118, %c0_119, %c0_120] : memref<2x1x32xf32, #tpu.memory_space<vmem>>, vector<1x1x32xf32>
    %191 = vector.shape_cast %190 : vector<1x1x32xf32> to vector<1x32xf32>
    %c0_121 = arith.constant 0 : index
    %c0_122 = arith.constant 0 : index
    %c0_123 = arith.constant 0 : index
    %192 = vector.load %arg18[%c0_121, %c0_122, %c0_123] : memref<2x1x32xf32, #tpu.memory_space<vmem>>, vector<1x1x32xf32>
    %193 = vector.shape_cast %192 : vector<1x1x32xf32> to vector<1x32xf32>
    %cst_124 = arith.constant dense<0.000000e+00> : vector<16xf32>
    %194 = vector.multi_reduction <add>, %189, %cst_124 [1] : vector<16x32xf32> to vector<16xf32>
    %195 = vector.shape_cast %194 : vector<16xf32> to vector<16x1xf32>
    %cst_125 = arith.constant 3.200000e+01 : f32
    %196 = vector.broadcast %cst_125 : f32 to vector<16x1xf32>
    %197 = arith.divf %195, %196 : vector<16x1xf32>
    %198 = vector.broadcast %197 : vector<16x1xf32> to vector<16x32xf32>
    %199 = arith.subf %189, %198 : vector<16x32xf32>
    %200 = arith.mulf %199, %199 : vector<16x32xf32>
    %cst_126 = arith.constant dense<0.000000e+00> : vector<16xf32>
    %201 = vector.multi_reduction <add>, %200, %cst_126 [1] : vector<16x32xf32> to vector<16xf32>
    %202 = vector.shape_cast %201 : vector<16xf32> to vector<16x1xf32>
    %cst_127 = arith.constant 3.200000e+01 : f32
    %203 = vector.broadcast %cst_127 : f32 to vector<16x1xf32>
    %204 = arith.divf %202, %203 : vector<16x1xf32>
    %205 = vector.broadcast %197 : vector<16x1xf32> to vector<16x32xf32>
    %206 = arith.subf %189, %205 : vector<16x32xf32>
    %cst_128 = arith.constant 9.99999974E-6 : f32
    %207 = vector.broadcast %cst_128 : f32 to vector<16x1xf32>
    %208 = arith.addf %204, %207 : vector<16x1xf32>
    %209 = math.rsqrt %208 : vector<16x1xf32>
    %210 = vector.broadcast %209 : vector<16x1xf32> to vector<16x32xf32>
    %211 = arith.mulf %206, %210 : vector<16x32xf32>
    %212 = vector.broadcast %191 : vector<1x32xf32> to vector<16x32xf32>
    %213 = arith.mulf %211, %212 : vector<16x32xf32>
    %214 = vector.broadcast %193 : vector<1x32xf32> to vector<16x32xf32>
    %215 = arith.addf %213, %214 : vector<16x32xf32>
    %c0_129 = arith.constant 0 : index
    %c0_130 = arith.constant 0 : index
    %c0_131 = arith.constant 0 : index
    %216 = vector.load %arg19[%c0_129, %c0_130, %c0_131] : memref<2x32x64xf32, #tpu.memory_space<vmem>>, vector<1x32x64xf32>
    %217 = vector.shape_cast %216 : vector<1x32x64xf32> to vector<32x64xf32>
    %cst_132 = arith.constant dense<0.000000e+00> : vector<16x64xf32>
    %218 = tpu.matmul %215, %217, %cst_132 {dimension_numbers = #tpu.dot_dimension_numbers<[1], [0], [0], [1], [0, 0, 1, 1], [], []>} : vector<16x32xf32>, vector<32x64xf32>, vector<16x64xf32> -> vector<16x64xf32>
    %c0_133 = arith.constant 0 : index
    %c0_134 = arith.constant 0 : index
    %c0_135 = arith.constant 0 : index
    %219 = vector.load %arg20[%c0_133, %c0_134, %c0_135] : memref<2x1x64xf32, #tpu.memory_space<vmem>>, vector<1x1x64xf32>
    %220 = vector.shape_cast %219 : vector<1x1x64xf32> to vector<1x64xf32>
    %221 = vector.broadcast %220 : vector<1x64xf32> to vector<16x64xf32>
    %222 = arith.addf %218, %221 : vector<16x64xf32>
    %223 = arith.mulf %222, %222 : vector<16x64xf32>
    %224 = arith.mulf %222, %223 : vector<16x64xf32>
    %cst_136 = arith.constant 4.471500e-02 : f32
    %225 = vector.broadcast %cst_136 : f32 to vector<16x64xf32>
    %226 = arith.mulf %225, %224 : vector<16x64xf32>
    %227 = arith.addf %222, %226 : vector<16x64xf32>
    %cst_137 = arith.constant 0.797884583 : f32
    %228 = vector.broadcast %cst_137 : f32 to vector<16x64xf32>
    %229 = arith.mulf %228, %227 : vector<16x64xf32>
    %230 = math.tanh %229 : vector<16x64xf32>
    %cst_138 = arith.constant 1.000000e+00 : f32
    %231 = vector.broadcast %cst_138 : f32 to vector<16x64xf32>
    %232 = arith.addf %231, %230 : vector<16x64xf32>
    %cst_139 = arith.constant 5.000000e-01 : f32
    %233 = vector.broadcast %cst_139 : f32 to vector<16x64xf32>
    %234 = arith.mulf %233, %232 : vector<16x64xf32>
    %235 = arith.mulf %222, %234 : vector<16x64xf32>
    %c0_140 = arith.constant 0 : index
    %c0_141 = arith.constant 0 : index
    %c0_142 = arith.constant 0 : index
    %236 = vector.load %arg21[%c0_140, %c0_141, %c0_142] : memref<2x64x32xf32, #tpu.memory_space<vmem>>, vector<1x64x32xf32>
    %237 = vector.shape_cast %236 : vector<1x64x32xf32> to vector<64x32xf32>
    %cst_143 = arith.constant dense<0.000000e+00> : vector<16x32xf32>
    %238 = tpu.matmul %235, %237, %cst_143 {dimension_numbers = #tpu.dot_dimension_numbers<[1], [0], [0], [1], [0, 0, 1, 1], [], []>} : vector<16x64xf32>, vector<64x32xf32>, vector<16x32xf32> -> vector<16x32xf32>
    %c0_144 = arith.constant 0 : index
    %c0_145 = arith.constant 0 : index
    %c0_146 = arith.constant 0 : index
    %239 = vector.load %arg22[%c0_144, %c0_145, %c0_146] : memref<2x1x32xf32, #tpu.memory_space<vmem>>, vector<1x1x32xf32>
    %240 = vector.shape_cast %239 : vector<1x1x32xf32> to vector<1x32xf32>
    %241 = vector.broadcast %240 : vector<1x32xf32> to vector<16x32xf32>
    %242 = arith.addf %238, %241 : vector<16x32xf32>
    %243 = arith.addf %215, %242 : vector<16x32xf32>
    %c0_147 = arith.constant 0 : index
    %c0_148 = arith.constant 0 : index
    %c0_149 = arith.constant 0 : index
    %244 = vector.load %arg23[%c0_147, %c0_148, %c0_149] : memref<2x1x32xf32, #tpu.memory_space<vmem>>, vector<1x1x32xf32>
    %245 = vector.shape_cast %244 : vector<1x1x32xf32> to vector<1x32xf32>
    %c0_150 = arith.constant 0 : index
    %c0_151 = arith.constant 0 : index
    %c0_152 = arith.constant 0 : index
    %246 = vector.load %arg24[%c0_150, %c0_151, %c0_152] : memref<2x1x32xf32, #tpu.memory_space<vmem>>, vector<1x1x32xf32>
    %247 = vector.shape_cast %246 : vector<1x1x32xf32> to vector<1x32xf32>
    %cst_153 = arith.constant dense<0.000000e+00> : vector<16xf32>
    %248 = vector.multi_reduction <add>, %243, %cst_153 [1] : vector<16x32xf32> to vector<16xf32>
    %249 = vector.shape_cast %248 : vector<16xf32> to vector<16x1xf32>
    %cst_154 = arith.constant 3.200000e+01 : f32
    %250 = vector.broadcast %cst_154 : f32 to vector<16x1xf32>
    %251 = arith.divf %249, %250 : vector<16x1xf32>
    %252 = vector.broadcast %251 : vector<16x1xf32> to vector<16x32xf32>
    %253 = arith.subf %243, %252 : vector<16x32xf32>
    %254 = arith.mulf %253, %253 : vector<16x32xf32>
    %cst_155 = arith.constant dense<0.000000e+00> : vector<16xf32>
    %255 = vector.multi_reduction <add>, %254, %cst_155 [1] : vector<16x32xf32> to vector<16xf32>
    %256 = vector.shape_cast %255 : vector<16xf32> to vector<16x1xf32>
    %cst_156 = arith.constant 3.200000e+01 : f32
    %257 = vector.broadcast %cst_156 : f32 to vector<16x1xf32>
    %258 = arith.divf %256, %257 : vector<16x1xf32>
    %259 = vector.broadcast %251 : vector<16x1xf32> to vector<16x32xf32>
    %260 = arith.subf %243, %259 : vector<16x32xf32>
    %cst_157 = arith.constant 9.99999974E-6 : f32
    %261 = vector.broadcast %cst_157 : f32 to vector<16x1xf32>
    %262 = arith.addf %258, %261 : vector<16x1xf32>
    %263 = math.rsqrt %262 : vector<16x1xf32>
    %264 = vector.broadcast %263 : vector<16x1xf32> to vector<16x32xf32>
    %265 = arith.mulf %260, %264 : vector<16x32xf32>
    %266 = vector.broadcast %245 : vector<1x32xf32> to vector<16x32xf32>
    %267 = arith.mulf %265, %266 : vector<16x32xf32>
    %268 = vector.broadcast %247 : vector<1x32xf32> to vector<16x32xf32>
    %269 = arith.addf %267, %268 : vector<16x32xf32>
    %cst_158 = arith.constant 0.000000e+00 : f32
    %270 = vector.broadcast %cst_158 : f32 to vector<16x32xf32>
    %c1_159 = arith.constant 1 : index
    %c0_160 = arith.constant 0 : index
    %c0_161 = arith.constant 0 : index
    %c0_162 = arith.constant 0 : index
    %271 = vector.load %arg9[%c1_159, %c0_160, %c0_161, %c0_162] : memref<2x2x32x16xf32, #tpu.memory_space<vmem>>, vector<1x1x32x16xf32>
    %272 = vector.shape_cast %271 : vector<1x1x32x16xf32> to vector<32x16xf32>
    %cst_163 = arith.constant dense<0.000000e+00> : vector<16x16xf32>
    %273 = tpu.matmul %269, %272, %cst_163 {dimension_numbers = #tpu.dot_dimension_numbers<[1], [0], [0], [1], [0, 0, 1, 1], [], []>} : vector<16x32xf32>, vector<32x16xf32>, vector<16x16xf32> -> vector<16x16xf32>
    %c1_164 = arith.constant 1 : index
    %c0_165 = arith.constant 0 : index
    %c0_166 = arith.constant 0 : index
    %c0_167 = arith.constant 0 : index
    %274 = vector.load %arg10[%c1_164, %c0_165, %c0_166, %c0_167] : memref<2x2x1x16xf32, #tpu.memory_space<vmem>>, vector<1x1x1x16xf32>
    %275 = vector.shape_cast %274 : vector<1x1x1x16xf32> to vector<1x16xf32>
    %276 = vector.broadcast %275 : vector<1x16xf32> to vector<16x16xf32>
    %277 = arith.addf %273, %276 : vector<16x16xf32>
    %c1_168 = arith.constant 1 : index
    %c0_169 = arith.constant 0 : index
    %c0_170 = arith.constant 0 : index
    %c0_171 = arith.constant 0 : index
    %278 = vector.load %arg11[%c1_168, %c0_169, %c0_170, %c0_171] : memref<2x2x32x16xf32, #tpu.memory_space<vmem>>, vector<1x1x32x16xf32>
    %279 = vector.shape_cast %278 : vector<1x1x32x16xf32> to vector<32x16xf32>
    %cst_172 = arith.constant dense<0.000000e+00> : vector<16x16xf32>
    %280 = tpu.matmul %269, %279, %cst_172 {dimension_numbers = #tpu.dot_dimension_numbers<[1], [0], [0], [1], [0, 0, 1, 1], [], []>} : vector<16x32xf32>, vector<32x16xf32>, vector<16x16xf32> -> vector<16x16xf32>
    %c1_173 = arith.constant 1 : index
    %c0_174 = arith.constant 0 : index
    %c0_175 = arith.constant 0 : index
    %c0_176 = arith.constant 0 : index
    %281 = vector.load %arg12[%c1_173, %c0_174, %c0_175, %c0_176] : memref<2x2x1x16xf32, #tpu.memory_space<vmem>>, vector<1x1x1x16xf32>
    %282 = vector.shape_cast %281 : vector<1x1x1x16xf32> to vector<1x16xf32>
    %283 = vector.broadcast %282 : vector<1x16xf32> to vector<16x16xf32>
    %284 = arith.addf %280, %283 : vector<16x16xf32>
    %c1_177 = arith.constant 1 : index
    %c0_178 = arith.constant 0 : index
    %c0_179 = arith.constant 0 : index
    %c0_180 = arith.constant 0 : index
    %285 = vector.load %arg13[%c1_177, %c0_178, %c0_179, %c0_180] : memref<2x2x32x16xf32, #tpu.memory_space<vmem>>, vector<1x1x32x16xf32>
    %286 = vector.shape_cast %285 : vector<1x1x32x16xf32> to vector<32x16xf32>
    %cst_181 = arith.constant dense<0.000000e+00> : vector<16x16xf32>
    %287 = tpu.matmul %269, %286, %cst_181 {dimension_numbers = #tpu.dot_dimension_numbers<[1], [0], [0], [1], [0, 0, 1, 1], [], []>} : vector<16x32xf32>, vector<32x16xf32>, vector<16x16xf32> -> vector<16x16xf32>
    %c1_182 = arith.constant 1 : index
    %c0_183 = arith.constant 0 : index
    %c0_184 = arith.constant 0 : index
    %c0_185 = arith.constant 0 : index
    %288 = vector.load %arg14[%c1_182, %c0_183, %c0_184, %c0_185] : memref<2x2x1x16xf32, #tpu.memory_space<vmem>>, vector<1x1x1x16xf32>
    %289 = vector.shape_cast %288 : vector<1x1x1x16xf32> to vector<1x16xf32>
    %290 = vector.broadcast %289 : vector<1x16xf32> to vector<16x16xf32>
    %291 = arith.addf %287, %290 : vector<16x16xf32>
    %292 = vector.extract_strided_slice %277 {offsets = [0, 0], sizes = [8, 16], strides = [1, 1]} : vector<16x16xf32> to vector<8x16xf32>
    %293 = vector.extract_strided_slice %284 {offsets = [0, 0], sizes = [8, 16], strides = [1, 1]} : vector<16x16xf32> to vector<8x16xf32>
    %294 = vector.extract_strided_slice %291 {offsets = [0, 0], sizes = [8, 16], strides = [1, 1]} : vector<16x16xf32> to vector<8x16xf32>
    %295 = tpu.transpose %293, [1, 0] : vector<8x16xf32> -> vector<16x8xf32>
    %cst_186 = arith.constant dense<0.000000e+00> : vector<8x8xf32>
    %296 = tpu.matmul %292, %295, %cst_186 {dimension_numbers = #tpu.dot_dimension_numbers<[1], [0], [0], [1], [0, 0, 1, 1], [], []>} : vector<8x16xf32>, vector<16x8xf32>, vector<8x8xf32> -> vector<8x8xf32>
    %cst_187 = arith.constant 2.500000e-01 : f32
    %297 = vector.broadcast %cst_187 : f32 to vector<8x8xf32>
    %298 = arith.mulf %296, %297 : vector<8x8xf32>
    %c0_188 = arith.constant 0 : index
    %c0_189 = arith.constant 0 : index
    %c0_190 = arith.constant 0 : index
    %299 = vector.load %arg3[%c0_188, %c0_189, %c0_190] : memref<2x1x8xf32, #tpu.memory_space<vmem>>, vector<1x1x8xf32>
    %300 = vector.shape_cast %299 : vector<1x1x8xf32> to vector<1x8xf32>
    %301 = vector.broadcast %300 : vector<1x8xf32> to vector<8x8xf32>
    %302 = arith.addf %298, %301 : vector<8x8xf32>
    %cst_191 = arith.constant dense<0xFF800000> : vector<8xf32>
    %303 = vector.multi_reduction <maximumf>, %302, %cst_191 [1] : vector<8x8xf32> to vector<8xf32>
    %304 = vector.shape_cast %303 : vector<8xf32> to vector<8x1xf32>
    %305 = vector.broadcast %304 : vector<8x1xf32> to vector<8x8xf32>
    %306 = arith.subf %302, %305 : vector<8x8xf32>
    %307 = math.exp %306 : vector<8x8xf32>
    %cst_192 = arith.constant dense<0.000000e+00> : vector<8xf32>
    %308 = vector.multi_reduction <add>, %307, %cst_192 [1] : vector<8x8xf32> to vector<8xf32>
    %309 = vector.shape_cast %308 : vector<8xf32> to vector<8x1xf32>
    %310 = tpu.reciprocal %309 {approx = true} : vector<8x1xf32> -> vector<8x1xf32>
    %311 = vector.broadcast %310 : vector<8x1xf32> to vector<8x8xf32>
    %312 = arith.mulf %307, %311 : vector<8x8xf32>
    %cst_193 = arith.constant dense<0.000000e+00> : vector<8x16xf32>
    %313 = tpu.matmul %312, %294, %cst_193 {dimension_numbers = #tpu.dot_dimension_numbers<[1], [0], [0], [1], [0, 0, 1, 1], [], []>} : vector<8x8xf32>, vector<8x16xf32>, vector<8x16xf32> -> vector<8x16xf32>
    %314 = vector.extract_strided_slice %277 {offsets = [8, 0], sizes = [8, 16], strides = [1, 1]} : vector<16x16xf32> to vector<8x16xf32>
    %315 = vector.extract_strided_slice %284 {offsets = [8, 0], sizes = [8, 16], strides = [1, 1]} : vector<16x16xf32> to vector<8x16xf32>
    %316 = vector.extract_strided_slice %291 {offsets = [8, 0], sizes = [8, 16], strides = [1, 1]} : vector<16x16xf32> to vector<8x16xf32>
    %317 = tpu.transpose %315, [1, 0] : vector<8x16xf32> -> vector<16x8xf32>
    %cst_194 = arith.constant dense<0.000000e+00> : vector<8x8xf32>
    %318 = tpu.matmul %314, %317, %cst_194 {dimension_numbers = #tpu.dot_dimension_numbers<[1], [0], [0], [1], [0, 0, 1, 1], [], []>} : vector<8x16xf32>, vector<16x8xf32>, vector<8x8xf32> -> vector<8x8xf32>
    %cst_195 = arith.constant 2.500000e-01 : f32
    %319 = vector.broadcast %cst_195 : f32 to vector<8x8xf32>
    %320 = arith.mulf %318, %319 : vector<8x8xf32>
    %c1_196 = arith.constant 1 : index
    %c0_197 = arith.constant 0 : index
    %c0_198 = arith.constant 0 : index
    %321 = vector.load %arg3[%c1_196, %c0_197, %c0_198] : memref<2x1x8xf32, #tpu.memory_space<vmem>>, vector<1x1x8xf32>
    %322 = vector.shape_cast %321 : vector<1x1x8xf32> to vector<1x8xf32>
    %323 = vector.broadcast %322 : vector<1x8xf32> to vector<8x8xf32>
    %324 = arith.addf %320, %323 : vector<8x8xf32>
    %cst_199 = arith.constant dense<0xFF800000> : vector<8xf32>
    %325 = vector.multi_reduction <maximumf>, %324, %cst_199 [1] : vector<8x8xf32> to vector<8xf32>
    %326 = vector.shape_cast %325 : vector<8xf32> to vector<8x1xf32>
    %327 = vector.broadcast %326 : vector<8x1xf32> to vector<8x8xf32>
    %328 = arith.subf %324, %327 : vector<8x8xf32>
    %329 = math.exp %328 : vector<8x8xf32>
    %cst_200 = arith.constant dense<0.000000e+00> : vector<8xf32>
    %330 = vector.multi_reduction <add>, %329, %cst_200 [1] : vector<8x8xf32> to vector<8xf32>
    %331 = vector.shape_cast %330 : vector<8xf32> to vector<8x1xf32>
    %332 = tpu.reciprocal %331 {approx = true} : vector<8x1xf32> -> vector<8x1xf32>
    %333 = vector.broadcast %332 : vector<8x1xf32> to vector<8x8xf32>
    %334 = arith.mulf %329, %333 : vector<8x8xf32>
    %cst_201 = arith.constant dense<0.000000e+00> : vector<8x16xf32>
    %335 = tpu.matmul %334, %316, %cst_201 {dimension_numbers = #tpu.dot_dimension_numbers<[1], [0], [0], [1], [0, 0, 1, 1], [], []>} : vector<8x8xf32>, vector<8x16xf32>, vector<8x16xf32> -> vector<8x16xf32>
    %336 = tpu.concatenate %313, %335 in 0 : vector<8x16xf32>, vector<8x16xf32> -> vector<16x16xf32>
    %c1_202 = arith.constant 1 : index
    %c0_203 = arith.constant 0 : index
    %c0_204 = arith.constant 0 : index
    %c0_205 = arith.constant 0 : index
    %337 = vector.load %arg15[%c1_202, %c0_203, %c0_204, %c0_205] : memref<2x2x16x32xf32, #tpu.memory_space<vmem>>, vector<1x1x16x32xf32>
    %338 = vector.shape_cast %337 : vector<1x1x16x32xf32> to vector<16x32xf32>
    %cst_206 = arith.constant dense<0.000000e+00> : vector<16x32xf32>
    %339 = tpu.matmul %336, %338, %cst_206 {dimension_numbers = #tpu.dot_dimension_numbers<[1], [0], [0], [1], [0, 0, 1, 1], [], []>} : vector<16x16xf32>, vector<16x32xf32>, vector<16x32xf32> -> vector<16x32xf32>
    %340 = arith.addf %270, %339 : vector<16x32xf32>
    %c1_207 = arith.constant 1 : index
    %c1_208 = arith.constant 1 : index
    %c0_209 = arith.constant 0 : index
    %c0_210 = arith.constant 0 : index
    %341 = vector.load %arg9[%c1_207, %c1_208, %c0_209, %c0_210] : memref<2x2x32x16xf32, #tpu.memory_space<vmem>>, vector<1x1x32x16xf32>
    %342 = vector.shape_cast %341 : vector<1x1x32x16xf32> to vector<32x16xf32>
    %cst_211 = arith.constant dense<0.000000e+00> : vector<16x16xf32>
    %343 = tpu.matmul %269, %342, %cst_211 {dimension_numbers = #tpu.dot_dimension_numbers<[1], [0], [0], [1], [0, 0, 1, 1], [], []>} : vector<16x32xf32>, vector<32x16xf32>, vector<16x16xf32> -> vector<16x16xf32>
    %c1_212 = arith.constant 1 : index
    %c1_213 = arith.constant 1 : index
    %c0_214 = arith.constant 0 : index
    %c0_215 = arith.constant 0 : index
    %344 = vector.load %arg10[%c1_212, %c1_213, %c0_214, %c0_215] : memref<2x2x1x16xf32, #tpu.memory_space<vmem>>, vector<1x1x1x16xf32>
    %345 = vector.shape_cast %344 : vector<1x1x1x16xf32> to vector<1x16xf32>
    %346 = vector.broadcast %345 : vector<1x16xf32> to vector<16x16xf32>
    %347 = arith.addf %343, %346 : vector<16x16xf32>
    %c1_216 = arith.constant 1 : index
    %c1_217 = arith.constant 1 : index
    %c0_218 = arith.constant 0 : index
    %c0_219 = arith.constant 0 : index
    %348 = vector.load %arg11[%c1_216, %c1_217, %c0_218, %c0_219] : memref<2x2x32x16xf32, #tpu.memory_space<vmem>>, vector<1x1x32x16xf32>
    %349 = vector.shape_cast %348 : vector<1x1x32x16xf32> to vector<32x16xf32>
    %cst_220 = arith.constant dense<0.000000e+00> : vector<16x16xf32>
    %350 = tpu.matmul %269, %349, %cst_220 {dimension_numbers = #tpu.dot_dimension_numbers<[1], [0], [0], [1], [0, 0, 1, 1], [], []>} : vector<16x32xf32>, vector<32x16xf32>, vector<16x16xf32> -> vector<16x16xf32>
    %c1_221 = arith.constant 1 : index
    %c1_222 = arith.constant 1 : index
    %c0_223 = arith.constant 0 : index
    %c0_224 = arith.constant 0 : index
    %351 = vector.load %arg12[%c1_221, %c1_222, %c0_223, %c0_224] : memref<2x2x1x16xf32, #tpu.memory_space<vmem>>, vector<1x1x1x16xf32>
    %352 = vector.shape_cast %351 : vector<1x1x1x16xf32> to vector<1x16xf32>
    %353 = vector.broadcast %352 : vector<1x16xf32> to vector<16x16xf32>
    %354 = arith.addf %350, %353 : vector<16x16xf32>
    %c1_225 = arith.constant 1 : index
    %c1_226 = arith.constant 1 : index
    %c0_227 = arith.constant 0 : index
    %c0_228 = arith.constant 0 : index
    %355 = vector.load %arg13[%c1_225, %c1_226, %c0_227, %c0_228] : memref<2x2x32x16xf32, #tpu.memory_space<vmem>>, vector<1x1x32x16xf32>
    %356 = vector.shape_cast %355 : vector<1x1x32x16xf32> to vector<32x16xf32>
    %cst_229 = arith.constant dense<0.000000e+00> : vector<16x16xf32>
    %357 = tpu.matmul %269, %356, %cst_229 {dimension_numbers = #tpu.dot_dimension_numbers<[1], [0], [0], [1], [0, 0, 1, 1], [], []>} : vector<16x32xf32>, vector<32x16xf32>, vector<16x16xf32> -> vector<16x16xf32>
    %c1_230 = arith.constant 1 : index
    %c1_231 = arith.constant 1 : index
    %c0_232 = arith.constant 0 : index
    %c0_233 = arith.constant 0 : index
    %358 = vector.load %arg14[%c1_230, %c1_231, %c0_232, %c0_233] : memref<2x2x1x16xf32, #tpu.memory_space<vmem>>, vector<1x1x1x16xf32>
    %359 = vector.shape_cast %358 : vector<1x1x1x16xf32> to vector<1x16xf32>
    %360 = vector.broadcast %359 : vector<1x16xf32> to vector<16x16xf32>
    %361 = arith.addf %357, %360 : vector<16x16xf32>
    %362 = vector.extract_strided_slice %347 {offsets = [0, 0], sizes = [8, 16], strides = [1, 1]} : vector<16x16xf32> to vector<8x16xf32>
    %363 = vector.extract_strided_slice %354 {offsets = [0, 0], sizes = [8, 16], strides = [1, 1]} : vector<16x16xf32> to vector<8x16xf32>
    %364 = vector.extract_strided_slice %361 {offsets = [0, 0], sizes = [8, 16], strides = [1, 1]} : vector<16x16xf32> to vector<8x16xf32>
    %365 = tpu.transpose %363, [1, 0] : vector<8x16xf32> -> vector<16x8xf32>
    %cst_234 = arith.constant dense<0.000000e+00> : vector<8x8xf32>
    %366 = tpu.matmul %362, %365, %cst_234 {dimension_numbers = #tpu.dot_dimension_numbers<[1], [0], [0], [1], [0, 0, 1, 1], [], []>} : vector<8x16xf32>, vector<16x8xf32>, vector<8x8xf32> -> vector<8x8xf32>
    %cst_235 = arith.constant 2.500000e-01 : f32
    %367 = vector.broadcast %cst_235 : f32 to vector<8x8xf32>
    %368 = arith.mulf %366, %367 : vector<8x8xf32>
    %c0_236 = arith.constant 0 : index
    %c0_237 = arith.constant 0 : index
    %c0_238 = arith.constant 0 : index
    %369 = vector.load %arg3[%c0_236, %c0_237, %c0_238] : memref<2x1x8xf32, #tpu.memory_space<vmem>>, vector<1x1x8xf32>
    %370 = vector.shape_cast %369 : vector<1x1x8xf32> to vector<1x8xf32>
    %371 = vector.broadcast %370 : vector<1x8xf32> to vector<8x8xf32>
    %372 = arith.addf %368, %371 : vector<8x8xf32>
    %cst_239 = arith.constant dense<0xFF800000> : vector<8xf32>
    %373 = vector.multi_reduction <maximumf>, %372, %cst_239 [1] : vector<8x8xf32> to vector<8xf32>
    %374 = vector.shape_cast %373 : vector<8xf32> to vector<8x1xf32>
    %375 = vector.broadcast %374 : vector<8x1xf32> to vector<8x8xf32>
    %376 = arith.subf %372, %375 : vector<8x8xf32>
    %377 = math.exp %376 : vector<8x8xf32>
    %cst_240 = arith.constant dense<0.000000e+00> : vector<8xf32>
    %378 = vector.multi_reduction <add>, %377, %cst_240 [1] : vector<8x8xf32> to vector<8xf32>
    %379 = vector.shape_cast %378 : vector<8xf32> to vector<8x1xf32>
    %380 = tpu.reciprocal %379 {approx = true} : vector<8x1xf32> -> vector<8x1xf32>
    %381 = vector.broadcast %380 : vector<8x1xf32> to vector<8x8xf32>
    %382 = arith.mulf %377, %381 : vector<8x8xf32>
    %cst_241 = arith.constant dense<0.000000e+00> : vector<8x16xf32>
    %383 = tpu.matmul %382, %364, %cst_241 {dimension_numbers = #tpu.dot_dimension_numbers<[1], [0], [0], [1], [0, 0, 1, 1], [], []>} : vector<8x8xf32>, vector<8x16xf32>, vector<8x16xf32> -> vector<8x16xf32>
    %384 = vector.extract_strided_slice %347 {offsets = [8, 0], sizes = [8, 16], strides = [1, 1]} : vector<16x16xf32> to vector<8x16xf32>
    %385 = vector.extract_strided_slice %354 {offsets = [8, 0], sizes = [8, 16], strides = [1, 1]} : vector<16x16xf32> to vector<8x16xf32>
    %386 = vector.extract_strided_slice %361 {offsets = [8, 0], sizes = [8, 16], strides = [1, 1]} : vector<16x16xf32> to vector<8x16xf32>
    %387 = tpu.transpose %385, [1, 0] : vector<8x16xf32> -> vector<16x8xf32>
    %cst_242 = arith.constant dense<0.000000e+00> : vector<8x8xf32>
    %388 = tpu.matmul %384, %387, %cst_242 {dimension_numbers = #tpu.dot_dimension_numbers<[1], [0], [0], [1], [0, 0, 1, 1], [], []>} : vector<8x16xf32>, vector<16x8xf32>, vector<8x8xf32> -> vector<8x8xf32>
    %cst_243 = arith.constant 2.500000e-01 : f32
    %389 = vector.broadcast %cst_243 : f32 to vector<8x8xf32>
    %390 = arith.mulf %388, %389 : vector<8x8xf32>
    %c1_244 = arith.constant 1 : index
    %c0_245 = arith.constant 0 : index
    %c0_246 = arith.constant 0 : index
    %391 = vector.load %arg3[%c1_244, %c0_245, %c0_246] : memref<2x1x8xf32, #tpu.memory_space<vmem>>, vector<1x1x8xf32>
    %392 = vector.shape_cast %391 : vector<1x1x8xf32> to vector<1x8xf32>
    %393 = vector.broadcast %392 : vector<1x8xf32> to vector<8x8xf32>
    %394 = arith.addf %390, %393 : vector<8x8xf32>
    %cst_247 = arith.constant dense<0xFF800000> : vector<8xf32>
    %395 = vector.multi_reduction <maximumf>, %394, %cst_247 [1] : vector<8x8xf32> to vector<8xf32>
    %396 = vector.shape_cast %395 : vector<8xf32> to vector<8x1xf32>
    %397 = vector.broadcast %396 : vector<8x1xf32> to vector<8x8xf32>
    %398 = arith.subf %394, %397 : vector<8x8xf32>
    %399 = math.exp %398 : vector<8x8xf32>
    %cst_248 = arith.constant dense<0.000000e+00> : vector<8xf32>
    %400 = vector.multi_reduction <add>, %399, %cst_248 [1] : vector<8x8xf32> to vector<8xf32>
    %401 = vector.shape_cast %400 : vector<8xf32> to vector<8x1xf32>
    %402 = tpu.reciprocal %401 {approx = true} : vector<8x1xf32> -> vector<8x1xf32>
    %403 = vector.broadcast %402 : vector<8x1xf32> to vector<8x8xf32>
    %404 = arith.mulf %399, %403 : vector<8x8xf32>
    %cst_249 = arith.constant dense<0.000000e+00> : vector<8x16xf32>
    %405 = tpu.matmul %404, %386, %cst_249 {dimension_numbers = #tpu.dot_dimension_numbers<[1], [0], [0], [1], [0, 0, 1, 1], [], []>} : vector<8x8xf32>, vector<8x16xf32>, vector<8x16xf32> -> vector<8x16xf32>
    %406 = tpu.concatenate %383, %405 in 0 : vector<8x16xf32>, vector<8x16xf32> -> vector<16x16xf32>
    %c1_250 = arith.constant 1 : index
    %c1_251 = arith.constant 1 : index
    %c0_252 = arith.constant 0 : index
    %c0_253 = arith.constant 0 : index
    %407 = vector.load %arg15[%c1_250, %c1_251, %c0_252, %c0_253] : memref<2x2x16x32xf32, #tpu.memory_space<vmem>>, vector<1x1x16x32xf32>
    %408 = vector.shape_cast %407 : vector<1x1x16x32xf32> to vector<16x32xf32>
    %cst_254 = arith.constant dense<0.000000e+00> : vector<16x32xf32>
    %409 = tpu.matmul %406, %408, %cst_254 {dimension_numbers = #tpu.dot_dimension_numbers<[1], [0], [0], [1], [0, 0, 1, 1], [], []>} : vector<16x16xf32>, vector<16x32xf32>, vector<16x32xf32> -> vector<16x32xf32>
    %410 = arith.addf %340, %409 : vector<16x32xf32>
    %c1_255 = arith.constant 1 : index
    %c0_256 = arith.constant 0 : index
    %c0_257 = arith.constant 0 : index
    %411 = vector.load %arg16[%c1_255, %c0_256, %c0_257] : memref<2x1x32xf32, #tpu.memory_space<vmem>>, vector<1x1x32xf32>
    %412 = vector.shape_cast %411 : vector<1x1x32xf32> to vector<1x32xf32>
    %413 = vector.broadcast %412 : vector<1x32xf32> to vector<16x32xf32>
    %414 = arith.addf %410, %413 : vector<16x32xf32>
    %415 = arith.addf %269, %414 : vector<16x32xf32>
    %c1_258 = arith.constant 1 : index
    %c0_259 = arith.constant 0 : index
    %c0_260 = arith.constant 0 : index
    %416 = vector.load %arg17[%c1_258, %c0_259, %c0_260] : memref<2x1x32xf32, #tpu.memory_space<vmem>>, vector<1x1x32xf32>
    %417 = vector.shape_cast %416 : vector<1x1x32xf32> to vector<1x32xf32>
    %c1_261 = arith.constant 1 : index
    %c0_262 = arith.constant 0 : index
    %c0_263 = arith.constant 0 : index
    %418 = vector.load %arg18[%c1_261, %c0_262, %c0_263] : memref<2x1x32xf32, #tpu.memory_space<vmem>>, vector<1x1x32xf32>
    %419 = vector.shape_cast %418 : vector<1x1x32xf32> to vector<1x32xf32>
    %cst_264 = arith.constant dense<0.000000e+00> : vector<16xf32>
    %420 = vector.multi_reduction <add>, %415, %cst_264 [1] : vector<16x32xf32> to vector<16xf32>
    %421 = vector.shape_cast %420 : vector<16xf32> to vector<16x1xf32>
    %cst_265 = arith.constant 3.200000e+01 : f32
    %422 = vector.broadcast %cst_265 : f32 to vector<16x1xf32>
    %423 = arith.divf %421, %422 : vector<16x1xf32>
    %424 = vector.broadcast %423 : vector<16x1xf32> to vector<16x32xf32>
    %425 = arith.subf %415, %424 : vector<16x32xf32>
    %426 = arith.mulf %425, %425 : vector<16x32xf32>
    %cst_266 = arith.constant dense<0.000000e+00> : vector<16xf32>
    %427 = vector.multi_reduction <add>, %426, %cst_266 [1] : vector<16x32xf32> to vector<16xf32>
    %428 = vector.shape_cast %427 : vector<16xf32> to vector<16x1xf32>
    %cst_267 = arith.constant 3.200000e+01 : f32
    %429 = vector.broadcast %cst_267 : f32 to vector<16x1xf32>
    %430 = arith.divf %428, %429 : vector<16x1xf32>
    %431 = vector.broadcast %423 : vector<16x1xf32> to vector<16x32xf32>
    %432 = arith.subf %415, %431 : vector<16x32xf32>
    %cst_268 = arith.constant 9.99999974E-6 : f32
    %433 = vector.broadcast %cst_268 : f32 to vector<16x1xf32>
    %434 = arith.addf %430, %433 : vector<16x1xf32>
    %435 = math.rsqrt %434 : vector<16x1xf32>
    %436 = vector.broadcast %435 : vector<16x1xf32> to vector<16x32xf32>
    %437 = arith.mulf %432, %436 : vector<16x32xf32>
    %438 = vector.broadcast %417 : vector<1x32xf32> to vector<16x32xf32>
    %439 = arith.mulf %437, %438 : vector<16x32xf32>
    %440 = vector.broadcast %419 : vector<1x32xf32> to vector<16x32xf32>
    %441 = arith.addf %439, %440 : vector<16x32xf32>
    %c1_269 = arith.constant 1 : index
    %c0_270 = arith.constant 0 : index
    %c0_271 = arith.constant 0 : index
    %442 = vector.load %arg19[%c1_269, %c0_270, %c0_271] : memref<2x32x64xf32, #tpu.memory_space<vmem>>, vector<1x32x64xf32>
    %443 = vector.shape_cast %442 : vector<1x32x64xf32> to vector<32x64xf32>
    %cst_272 = arith.constant dense<0.000000e+00> : vector<16x64xf32>
    %444 = tpu.matmul %441, %443, %cst_272 {dimension_numbers = #tpu.dot_dimension_numbers<[1], [0], [0], [1], [0, 0, 1, 1], [], []>} : vector<16x32xf32>, vector<32x64xf32>, vector<16x64xf32> -> vector<16x64xf32>
    %c1_273 = arith.constant 1 : index
    %c0_274 = arith.constant 0 : index
    %c0_275 = arith.constant 0 : index
    %445 = vector.load %arg20[%c1_273, %c0_274, %c0_275] : memref<2x1x64xf32, #tpu.memory_space<vmem>>, vector<1x1x64xf32>
    %446 = vector.shape_cast %445 : vector<1x1x64xf32> to vector<1x64xf32>
    %447 = vector.broadcast %446 : vector<1x64xf32> to vector<16x64xf32>
    %448 = arith.addf %444, %447 : vector<16x64xf32>
    %449 = arith.mulf %448, %448 : vector<16x64xf32>
    %450 = arith.mulf %448, %449 : vector<16x64xf32>
    %cst_276 = arith.constant 4.471500e-02 : f32
    %451 = vector.broadcast %cst_276 : f32 to vector<16x64xf32>
    %452 = arith.mulf %451, %450 : vector<16x64xf32>
    %453 = arith.addf %448, %452 : vector<16x64xf32>
    %cst_277 = arith.constant 0.797884583 : f32
    %454 = vector.broadcast %cst_277 : f32 to vector<16x64xf32>
    %455 = arith.mulf %454, %453 : vector<16x64xf32>
    %456 = math.tanh %455 : vector<16x64xf32>
    %cst_278 = arith.constant 1.000000e+00 : f32
    %457 = vector.broadcast %cst_278 : f32 to vector<16x64xf32>
    %458 = arith.addf %457, %456 : vector<16x64xf32>
    %cst_279 = arith.constant 5.000000e-01 : f32
    %459 = vector.broadcast %cst_279 : f32 to vector<16x64xf32>
    %460 = arith.mulf %459, %458 : vector<16x64xf32>
    %461 = arith.mulf %448, %460 : vector<16x64xf32>
    %c1_280 = arith.constant 1 : index
    %c0_281 = arith.constant 0 : index
    %c0_282 = arith.constant 0 : index
    %462 = vector.load %arg21[%c1_280, %c0_281, %c0_282] : memref<2x64x32xf32, #tpu.memory_space<vmem>>, vector<1x64x32xf32>
    %463 = vector.shape_cast %462 : vector<1x64x32xf32> to vector<64x32xf32>
    %cst_283 = arith.constant dense<0.000000e+00> : vector<16x32xf32>
    %464 = tpu.matmul %461, %463, %cst_283 {dimension_numbers = #tpu.dot_dimension_numbers<[1], [0], [0], [1], [0, 0, 1, 1], [], []>} : vector<16x64xf32>, vector<64x32xf32>, vector<16x32xf32> -> vector<16x32xf32>
    %c1_284 = arith.constant 1 : index
    %c0_285 = arith.constant 0 : index
    %c0_286 = arith.constant 0 : index
    %465 = vector.load %arg22[%c1_284, %c0_285, %c0_286] : memref<2x1x32xf32, #tpu.memory_space<vmem>>, vector<1x1x32xf32>
    %466 = vector.shape_cast %465 : vector<1x1x32xf32> to vector<1x32xf32>
    %467 = vector.broadcast %466 : vector<1x32xf32> to vector<16x32xf32>
    %468 = arith.addf %464, %467 : vector<16x32xf32>
    %469 = arith.addf %441, %468 : vector<16x32xf32>
    %c1_287 = arith.constant 1 : index
    %c0_288 = arith.constant 0 : index
    %c0_289 = arith.constant 0 : index
    %470 = vector.load %arg23[%c1_287, %c0_288, %c0_289] : memref<2x1x32xf32, #tpu.memory_space<vmem>>, vector<1x1x32xf32>
    %471 = vector.shape_cast %470 : vector<1x1x32xf32> to vector<1x32xf32>
    %c1_290 = arith.constant 1 : index
    %c0_291 = arith.constant 0 : index
    %c0_292 = arith.constant 0 : index
    %472 = vector.load %arg24[%c1_290, %c0_291, %c0_292] : memref<2x1x32xf32, #tpu.memory_space<vmem>>, vector<1x1x32xf32>
    %473 = vector.shape_cast %472 : vector<1x1x32xf32> to vector<1x32xf32>
    %cst_293 = arith.constant dense<0.000000e+00> : vector<16xf32>
    %474 = vector.multi_reduction <add>, %469, %cst_293 [1] : vector<16x32xf32> to vector<16xf32>
    %475 = vector.shape_cast %474 : vector<16xf32> to vector<16x1xf32>
    %cst_294 = arith.constant 3.200000e+01 : f32
    %476 = vector.broadcast %cst_294 : f32 to vector<16x1xf32>
    %477 = arith.divf %475, %476 : vector<16x1xf32>
    %478 = vector.broadcast %477 : vector<16x1xf32> to vector<16x32xf32>
    %479 = arith.subf %469, %478 : vector<16x32xf32>
    %480 = arith.mulf %479, %479 : vector<16x32xf32>
    %cst_295 = arith.constant dense<0.000000e+00> : vector<16xf32>
    %481 = vector.multi_reduction <add>, %480, %cst_295 [1] : vector<16x32xf32> to vector<16xf32>
    %482 = vector.shape_cast %481 : vector<16xf32> to vector<16x1xf32>
    %cst_296 = arith.constant 3.200000e+01 : f32
    %483 = vector.broadcast %cst_296 : f32 to vector<16x1xf32>
    %484 = arith.divf %482, %483 : vector<16x1xf32>
    %485 = vector.broadcast %477 : vector<16x1xf32> to vector<16x32xf32>
    %486 = arith.subf %469, %485 : vector<16x32xf32>
    %cst_297 = arith.constant 9.99999974E-6 : f32
    %487 = vector.broadcast %cst_297 : f32 to vector<16x1xf32>
    %488 = arith.addf %484, %487 : vector<16x1xf32>
    %489 = math.rsqrt %488 : vector<16x1xf32>
    %490 = vector.broadcast %489 : vector<16x1xf32> to vector<16x32xf32>
    %491 = arith.mulf %486, %490 : vector<16x32xf32>
    %492 = vector.broadcast %471 : vector<1x32xf32> to vector<16x32xf32>
    %493 = arith.mulf %491, %492 : vector<16x32xf32>
    %494 = vector.broadcast %473 : vector<1x32xf32> to vector<16x32xf32>
    %495 = arith.addf %493, %494 : vector<16x32xf32>
    %496 = tpu.iota {dimensions = array<i32: 1>} : vector<2x16xi32>
    %497 = tpu.iota {dimensions = array<i32: 0>} : vector<2x16xi32>
    %c8_i32 = arith.constant 8 : i32
    %498 = vector.broadcast %c8_i32 : i32 to vector<2x16xi32>
    %499 = arith.muli %497, %498 : vector<2x16xi32>
    %500 = arith.cmpi eq, %496, %499 : vector<2x16xi32>
    %501 = arith.extui %500 : vector<2x16xi1> to vector<2x16xi32>
    %502 = arith.sitofp %501 : vector<2x16xi32> to vector<2x16xf32>
    %cst_298 = arith.constant dense<0.000000e+00> : vector<2x32xf32>
    %503 = tpu.matmul %502, %495, %cst_298 {dimension_numbers = #tpu.dot_dimension_numbers<[1], [0], [0], [1], [0, 0, 1, 1], [], []>} : vector<2x16xf32>, vector<16x32xf32>, vector<2x32xf32> -> vector<2x32xf32>
    %c0_299 = arith.constant 0 : index
    %c0_300 = arith.constant 0 : index
    %504 = vector.load %arg25[%c0_299, %c0_300] : memref<32x32xf32, #tpu.memory_space<vmem>>, vector<32x32xf32>
    %cst_301 = arith.constant dense<0.000000e+00> : vector<2x32xf32>
    %505 = tpu.matmul %503, %504, %cst_301 {dimension_numbers = #tpu.dot_dimension_numbers<[1], [0], [0], [1], [0, 0, 1, 1], [], []>} : vector<2x32xf32>, vector<32x32xf32>, vector<2x32xf32> -> vector<2x32xf32>
    %c0_302 = arith.constant 0 : index
    %c0_303 = arith.constant 0 : index
    %506 = vector.load %arg26[%c0_302, %c0_303] : memref<1x32xf32, #tpu.memory_space<vmem>>, vector<1x32xf32>
    %507 = vector.broadcast %506 : vector<1x32xf32> to vector<2x32xf32>
    %508 = arith.addf %505, %507 : vector<2x32xf32>
    %509 = math.tanh %508 : vector<2x32xf32>
    %c0_304 = arith.constant 0 : index
    %c0_305 = arith.constant 0 : index
    %510 = vector.load %arg27[%c0_304, %c0_305] : memref<32x2xf32, #tpu.memory_space<vmem>>, vector<32x2xf32>
    %cst_306 = arith.constant dense<0.000000e+00> : vector<2x2xf32>
    %511 = tpu.matmul %509, %510, %cst_306 {dimension_numbers = #tpu.dot_dimension_numbers<[1], [0], [0], [1], [0, 0, 1, 1], [], []>} : vector<2x32xf32>, vector<32x2xf32>, vector<2x2xf32> -> vector<2x2xf32>
    %c0_307 = arith.constant 0 : index
    %c0_308 = arith.constant 0 : index
    %512 = vector.load %arg28[%c0_307, %c0_308] : memref<1x2xf32, #tpu.memory_space<vmem>>, vector<1x2xf32>
    %513 = vector.broadcast %512 : vector<1x2xf32> to vector<2x2xf32>
    %514 = arith.addf %511, %513 : vector<2x2xf32>
    %c0_309 = arith.constant 0 : index
    %c0_310 = arith.constant 0 : index
    %515 = vector.load %arg29[%c0_309, %c0_310] : memref<2x2xf32, #tpu.memory_space<vmem>>, vector<2x2xf32>
    tpu.vector_store %arg29[%c0_309, %c0_310], %514 {strides = array<i32>} : memref<2x2xf32, #tpu.memory_space<vmem>>, vector<2x2xf32>,
    return
  }
  func.func @transform_0(%arg0: i32) -> (i32, i32) {
    %c0_i32 = arith.constant 0 : i32
    %c0_i32_0 = arith.constant 0 : i32
    %c0_i32_1 = arith.constant 0 : i32
    return %c0_i32, %c0_i32_0 : i32, i32
  }
  func.func @transform_1(%arg0: i32) -> (i32, i32) {
    %c0_i32 = arith.constant 0 : i32
    %c0_i32_0 = arith.constant 0 : i32
    %c0_i32_1 = arith.constant 0 : i32
    return %c0_i32, %c0_i32_0 : i32, i32
  }
  func.func @transform_2(%arg0: i32) -> (i32, i32, i32) {
    %c0_i32 = arith.constant 0 : i32
    %c0_i32_0 = arith.constant 0 : i32
    %c0_i32_1 = arith.constant 0 : i32
    %c0_i32_2 = arith.constant 0 : i32
    return %c0_i32, %c0_i32_0, %c0_i32_1 : i32, i32, i32
  }
  func.func @transform_3(%arg0: i32) -> (i32, i32) {
    %c0_i32 = arith.constant 0 : i32
    %c0_i32_0 = arith.constant 0 : i32
    %c0_i32_1 = arith.constant 0 : i32
    return %c0_i32, %c0_i32_0 : i32, i32
  }
  func.func @transform_4(%arg0: i32) -> (i32, i32) {
    %c0_i32 = arith.constant 0 : i32
    %c0_i32_0 = arith.constant 0 : i32
    %c0_i32_1 = arith.constant 0 : i32
    return %c0_i32, %c0_i32_0 : i32, i32
  }
  func.func @transform_5(%arg0: i32) -> (i32, i32) {
    %c0_i32 = arith.constant 0 : i32
    %c0_i32_0 = arith.constant 0 : i32
    %c0_i32_1 = arith.constant 0 : i32
    return %c0_i32, %c0_i32_0 : i32, i32
  }
  func.func @transform_6(%arg0: i32) -> (i32, i32) {
    %c0_i32 = arith.constant 0 : i32
    %c0_i32_0 = arith.constant 0 : i32
    %c0_i32_1 = arith.constant 0 : i32
    return %c0_i32, %c0_i32_0 : i32, i32
  }
  func.func @transform_7(%arg0: i32) -> (i32, i32) {
    %c0_i32 = arith.constant 0 : i32
    %c0_i32_0 = arith.constant 0 : i32
    %c0_i32_1 = arith.constant 0 : i32
    return %c0_i32, %c0_i32_0 : i32, i32
  }
  func.func @transform_8(%arg0: i32) -> (i32, i32, i32, i32) {
    %c0_i32 = arith.constant 0 : i32
    %c0_i32_0 = arith.constant 0 : i32
    %c0_i32_1 = arith.constant 0 : i32
    %c0_i32_2 = arith.constant 0 : i32
    %c0_i32_3 = arith.constant 0 : i32
    return %c0_i32, %c0_i32_0, %c0_i32_1, %c0_i32_2 : i32, i32, i32, i32
  }
  func.func @transform_9(%arg0: i32) -> (i32, i32, i32, i32) {
    %c0_i32 = arith.constant 0 : i32
    %c0_i32_0 = arith.constant 0 : i32
    %c0_i32_1 = arith.constant 0 : i32
    %c0_i32_2 = arith.constant 0 : i32
    %c0_i32_3 = arith.constant 0 : i32
    return %c0_i32, %c0_i32_0, %c0_i32_1, %c0_i32_2 : i32, i32, i32, i32
  }
  func.func @transform_10(%arg0: i32) -> (i32, i32, i32, i32) {
    %c0_i32 = arith.constant 0 : i32
    %c0_i32_0 = arith.constant 0 : i32
    %c0_i32_1 = arith.constant 0 : i32
    %c0_i32_2 = arith.constant 0 : i32
    %c0_i32_3 = arith.constant 0 : i32
    return %c0_i32, %c0_i32_0, %c0_i32_1, %c0_i32_2 : i32, i32, i32, i32
  }
  func.func @transform_11(%arg0: i32) -> (i32, i32, i32, i32) {
    %c0_i32 = arith.constant 0 : i32
    %c0_i32_0 = arith.constant 0 : i32
    %c0_i32_1 = arith.constant 0 : i32
    %c0_i32_2 = arith.constant 0 : i32
    %c0_i32_3 = arith.constant 0 : i32
    return %c0_i32, %c0_i32_0, %c0_i32_1, %c0_i32_2 : i32, i32, i32, i32
  }
  func.func @transform_12(%arg0: i32) -> (i32, i32, i32, i32) {
    %c0_i32 = arith.constant 0 : i32
    %c0_i32_0 = arith.constant 0 : i32
    %c0_i32_1 = arith.constant 0 : i32
    %c0_i32_2 = arith.constant 0 : i32
    %c0_i32_3 = arith.constant 0 : i32
    return %c0_i32, %c0_i32_0, %c0_i32_1, %c0_i32_2 : i32, i32, i32, i32
  }
  func.func @transform_13(%arg0: i32) -> (i32, i32, i32, i32) {
    %c0_i32 = arith.constant 0 : i32
    %c0_i32_0 = arith.constant 0 : i32
    %c0_i32_1 = arith.constant 0 : i32
    %c0_i32_2 = arith.constant 0 : i32
    %c0_i32_3 = arith.constant 0 : i32
    return %c0_i32, %c0_i32_0, %c0_i32_1, %c0_i32_2 : i32, i32, i32, i32
  }
  func.func @transform_14(%arg0: i32) -> (i32, i32, i32, i32) {
    %c0_i32 = arith.constant 0 : i32
    %c0_i32_0 = arith.constant 0 : i32
    %c0_i32_1 = arith.constant 0 : i32
    %c0_i32_2 = arith.constant 0 : i32
    %c0_i32_3 = arith.constant 0 : i32
    return %c0_i32, %c0_i32_0, %c0_i32_1, %c0_i32_2 : i32, i32, i32, i32
  }
  func.func @transform_15(%arg0: i32) -> (i32, i32, i32) {
    %c0_i32 = arith.constant 0 : i32
    %c0_i32_0 = arith.constant 0 : i32
    %c0_i32_1 = arith.constant 0 : i32
    %c0_i32_2 = arith.constant 0 : i32
    return %c0_i32, %c0_i32_0, %c0_i32_1 : i32, i32, i32
  }
  func.func @transform_16(%arg0: i32) -> (i32, i32, i32) {
    %c0_i32 = arith.constant 0 : i32
    %c0_i32_0 = arith.constant 0 : i32
    %c0_i32_1 = arith.constant 0 : i32
    %c0_i32_2 = arith.constant 0 : i32
    return %c0_i32, %c0_i32_0, %c0_i32_1 : i32, i32, i32
  }
  func.func @transform_17(%arg0: i32) -> (i32, i32, i32) {
    %c0_i32 = arith.constant 0 : i32
    %c0_i32_0 = arith.constant 0 : i32
    %c0_i32_1 = arith.constant 0 : i32
    %c0_i32_2 = arith.constant 0 : i32
    return %c0_i32, %c0_i32_0, %c0_i32_1 : i32, i32, i32
  }
  func.func @transform_18(%arg0: i32) -> (i32, i32, i32) {
    %c0_i32 = arith.constant 0 : i32
    %c0_i32_0 = arith.constant 0 : i32
    %c0_i32_1 = arith.constant 0 : i32
    %c0_i32_2 = arith.constant 0 : i32
    return %c0_i32, %c0_i32_0, %c0_i32_1 : i32, i32, i32
  }
  func.func @transform_19(%arg0: i32) -> (i32, i32, i32) {
    %c0_i32 = arith.constant 0 : i32
    %c0_i32_0 = arith.constant 0 : i32
    %c0_i32_1 = arith.constant 0 : i32
    %c0_i32_2 = arith.constant 0 : i32
    return %c0_i32, %c0_i32_0, %c0_i32_1 : i32, i32, i32
  }
  func.func @transform_20(%arg0: i32) -> (i32, i32, i32) {
    %c0_i32 = arith.constant 0 : i32
    %c0_i32_0 = arith.constant 0 : i32
    %c0_i32_1 = arith.constant 0 : i32
    %c0_i32_2 = arith.constant 0 : i32
    return %c0_i32, %c0_i32_0, %c0_i32_1 : i32, i32, i32
  }
  func.func @transform_21(%arg0: i32) -> (i32, i32, i32) {
    %c0_i32 = arith.constant 0 : i32
    %c0_i32_0 = arith.constant 0 : i32
    %c0_i32_1 = arith.constant 0 : i32
    %c0_i32_2 = arith.constant 0 : i32
    return %c0_i32, %c0_i32_0, %c0_i32_1 : i32, i32, i32
  }
  func.func @transform_22(%arg0: i32) -> (i32, i32, i32) {
    %c0_i32 = arith.constant 0 : i32
    %c0_i32_0 = arith.constant 0 : i32
    %c0_i32_1 = arith.constant 0 : i32
    %c0_i32_2 = arith.constant 0 : i32
    return %c0_i32, %c0_i32_0, %c0_i32_1 : i32, i32, i32
  }
  func.func @transform_23(%arg0: i32) -> (i32, i32, i32) {
    %c0_i32 = arith.constant 0 : i32
    %c0_i32_0 = arith.constant 0 : i32
    %c0_i32_1 = arith.constant 0 : i32
    %c0_i32_2 = arith.constant 0 : i32
    return %c0_i32, %c0_i32_0, %c0_i32_1 : i32, i32, i32
  }
  func.func @transform_24(%arg0: i32) -> (i32, i32) {
    %c0_i32 = arith.constant 0 : i32
    %c0_i32_0 = arith.constant 0 : i32
    %c0_i32_1 = arith.constant 0 : i32
    return %c0_i32, %c0_i32_0 : i32, i32
  }
  func.func @transform_25(%arg0: i32) -> (i32, i32) {
    %c0_i32 = arith.constant 0 : i32
    %c0_i32_0 = arith.constant 0 : i32
    %c0_i32_1 = arith.constant 0 : i32
    return %c0_i32, %c0_i32_0 : i32, i32
  }
  func.func @transform_26(%arg0: i32) -> (i32, i32) {
    %c0_i32 = arith.constant 0 : i32
    %c0_i32_0 = arith.constant 0 : i32
    %c0_i32_1 = arith.constant 0 : i32
    return %c0_i32, %c0_i32_0 : i32, i32
  }
  func.func @transform_27(%arg0: i32) -> (i32, i32) {
    %c0_i32 = arith.constant 0 : i32
    %c0_i32_0 = arith.constant 0 : i32
    %c0_i32_1 = arith.constant 0 : i32
    return %c0_i32, %c0_i32_0 : i32, i32
  }
  func.func @transform_28(%arg0: i32) -> (i32, i32) {
    %c0_i32 = arith.constant 0 : i32
    %c0_i32_0 = arith.constant 0 : i32
    %c0_i32_1 = arith.constant 0 : i32
    return %c0_i32, %c0_i32_0 : i32, i32
  }
}

</mosaic_0001>

<llo_original>
// kernel: roberta_pair_forward.1
$region0: #{roberta_pair_forward.1}
  #allocation0 [shape = 'u32[]', space=smem, size = 0x4, offset = 0x4, fixed_abs, tag = 'smem constant byte address 0x4 - core index']
  #allocation1 [shape = 'u32[72,128]{1,0:T(1,128)}', space=vmem, size = 0x9000, scoped, tag = 'internal scratch']
  %s0 = inlined_call_operand.vmem [shape: s32[16,1], index: 0, kind: input, shape index: {}]
  %s1 = inlined_call_operand.vmem [shape: s32[16,1], index: 1, kind: input, shape index: {}]
  %s2 = inlined_call_operand.vmem [shape: f32[2,1,8], index: 2, kind: input, shape index: {}]
  %s3 = inlined_call_operand.vmem [shape: f32[64,32], index: 3, kind: input, shape index: {}]
  %s4 = inlined_call_operand.vmem [shape: f32[16,32], index: 4, kind: input, shape index: {}]
  %s5 = inlined_call_operand.vmem [shape: f32[1,32], index: 5, kind: input, shape index: {}]
  %s6 = inlined_call_operand.vmem [shape: f32[1,32], index: 6, kind: input, shape index: {}]
  %s7 = inlined_call_operand.vmem [shape: f32[1,32], index: 7, kind: input, shape index: {}]
  %s8 = inlined_call_operand.vmem [shape: f32[2,2,32,16], index: 8, kind: input, shape index: {}]
  %s9 = inlined_call_operand.vmem [shape: f32[2,2,1,16], index: 9, kind: input, shape index: {}]
  %s10 = inlined_call_operand.vmem [shape: f32[2,2,32,16], index: 10, kind: input, shape index: {}]
  %s11 = inlined_call_operand.vmem [shape: f32[2,2,1,16], index: 11, kind: input, shape index: {}]
  %s12 = inlined_call_operand.vmem [shape: f32[2,2,32,16], index: 12, kind: input, shape index: {}]
  %s13 = inlined_call_operand.vmem [shape: f32[2,2,1,16], index: 13, kind: input, shape index: {}]
  %s14 = inlined_call_operand.vmem [shape: f32[2,2,16,32], index: 14, kind: input, shape index: {}]
  %s15 = inlined_call_operand.vmem [shape: f32[2,1,32], index: 15, kind: input, shape index: {}]
  %s16 = inlined_call_operand.vmem [shape: f32[2,1,32], index: 16, kind: input, shape index: {}]
  %s17 = inlined_call_operand.vmem [shape: f32[2,1,32], index: 17, kind: input, shape index: {}]
  %s18 = inlined_call_operand.vmem [shape: f32[2,32,64], index: 18, kind: input, shape index: {}]
  %s19 = inlined_call_operand.vmem [shape: f32[2,1,64], index: 19, kind: input, shape index: {}]
  %s20 = inlined_call_operand.vmem [shape: f32[2,64,32], index: 20, kind: input, shape index: {}]
  %s21 = inlined_call_operand.vmem [shape: f32[2,1,32], index: 21, kind: input, shape index: {}]
  %s22 = inlined_call_operand.vmem [shape: f32[2,1,32], index: 22, kind: input, shape index: {}]
  %s23 = inlined_call_operand.vmem [shape: f32[2,1,32], index: 23, kind: input, shape index: {}]
  %s24 = inlined_call_operand.vmem [shape: f32[32,32], index: 24, kind: input, shape index: {}]
  %s25 = inlined_call_operand.vmem [shape: f32[1,32], index: 25, kind: input, shape index: {}]
  %s26 = inlined_call_operand.vmem [shape: f32[32,2], index: 26, kind: input, shape index: {}]
  %s27 = inlined_call_operand.vmem [shape: f32[1,2], index: 27, kind: input, shape index: {}]
  %s28 = inlined_call_operand.hbm [shape: f32[2,2], index: 28, kind: output, shape index: {}]
  %s29 = sld [smem:[#allocation0]]
  $region122: #{roberta_pair_forward.1} parent=0
    _
  %s31 = ssub.s32 1, %s29
  %s32 = scalar_select 0, %s31, %s29
  $region1: #{roberta_pair_forward.1} parent=0
    #allocation2 [shape = 'u8[1024]{0}', space=vmem, size = 0x400, scoped, tag = 'output window, operand 0, single buffered']
    #allocation3 [shape = 's32[1]{0}', space=sflag, size = 0x4, scoped, tag = 'scoped memory for roberta_pair_forward.1']
    %33 = vsyncpa [#allocation3], 0
    // Predicated region
    $region2: #{roberta_pair_forward.1} parent=1 // pred_check
      _
    $region3: #{roberta_pair_forward.1} parent=1 // pred_check_branch
      %35 = sbr.rel (0) target = $region5
    $region4: #{roberta_pair_forward.1} parent=1 // pred_region
      _
    $region5: #{roberta_pair_forward.1} parent=1 // pred_fallthru
      _
    // Predicated region
    $region6: #{roberta_pair_forward.1} parent=1 // pred_check
      _
    $region7: #{roberta_pair_forward.1} parent=1 // pred_check_branch
      %37 = sbr.rel (0) target = $region9
    $region8: #{roberta_pair_forward.1} parent=1 // pred_region
      _
    $region9: #{roberta_pair_forward.1} parent=1 // pred_fallthru
      _
    // Predicated region
    $region10: #{roberta_pair_forward.1} parent=1 // pred_check
      _
    $region11: #{roberta_pair_forward.1} parent=1 // pred_check_branch
      %39 = sbr.rel (0) target = $region13
    $region12: #{roberta_pair_forward.1} parent=1 // pred_region
      _
    $region13: #{roberta_pair_forward.1} parent=1 // pred_fallthru
      _
    // Predicated region
    $region14: #{roberta_pair_forward.1} parent=1 // pred_check
      _
    $region15: #{roberta_pair_forward.1} parent=1 // pred_check_branch
      %41 = sbr.rel (0) target = $region17
    $region16: #{roberta_pair_forward.1} parent=1 // pred_region
      _
    $region17: #{roberta_pair_forward.1} parent=1 // pred_fallthru
      _
    // Predicated region
    $region18: #{roberta_pair_forward.1} parent=1 // pred_check
      _
    $region19: #{roberta_pair_forward.1} parent=1 // pred_check_branch
      %43 = sbr.rel (0) target = $region21
    $region20: #{roberta_pair_forward.1} parent=1 // pred_region
      _
    $region21: #{roberta_pair_forward.1} parent=1 // pred_fallthru
      _
    // Predicated region
    $region22: #{roberta_pair_forward.1} parent=1 // pred_check
      _
    $region23: #{roberta_pair_forward.1} parent=1 // pred_check_branch
      %45 = sbr.rel (0) target = $region25
    $region24: #{roberta_pair_forward.1} parent=1 // pred_region
      _
    $region25: #{roberta_pair_forward.1} parent=1 // pred_fallthru
      _
    // Predicated region
    $region26: #{roberta_pair_forward.1} parent=1 // pred_check
      _
    $region27: #{roberta_pair_forward.1} parent=1 // pred_check_branch
      %47 = sbr.rel (0) target = $region29
    $region28: #{roberta_pair_forward.1} parent=1 // pred_region
      _
    $region29: #{roberta_pair_forward.1} parent=1 // pred_fallthru
      _
    // Predicated region
    $region30: #{roberta_pair_forward.1} parent=1 // pred_check
      _
    $region31: #{roberta_pair_forward.1} parent=1 // pred_check_branch
      %49 = sbr.rel (0) target = $region33
    $region32: #{roberta_pair_forward.1} parent=1 // pred_region
      _
    $region33: #{roberta_pair_forward.1} parent=1 // pred_fallthru
      _
    // Predicated region
    $region34: #{roberta_pair_forward.1} parent=1 // pred_check
      _
    $region35: #{roberta_pair_forward.1} parent=1 // pred_check_branch
      %51 = sbr.rel (0) target = $region37
    $region36: #{roberta_pair_forward.1} parent=1 // pred_region
      _
    $region37: #{roberta_pair_forward.1} parent=1 // pred_fallthru
      _
    // Predicated region
    $region38: #{roberta_pair_forward.1} parent=1 // pred_check
      _
    $region39: #{roberta_pair_forward.1} parent=1 // pred_check_branch
      %53 = sbr.rel (0) target = $region41
    $region40: #{roberta_pair_forward.1} parent=1 // pred_region
      _
    $region41: #{roberta_pair_forward.1} parent=1 // pred_fallthru
      _
    // Predicated region
    $region42: #{roberta_pair_forward.1} parent=1 // pred_check
      _
    $region43: #{roberta_pair_forward.1} parent=1 // pred_check_branch
      %55 = sbr.rel (0) target = $region45
    $region44: #{roberta_pair_forward.1} parent=1 // pred_region
      _
    $region45: #{roberta_pair_forward.1} parent=1 // pred_fallthru
      _
    // Predicated region
    $region46: #{roberta_pair_forward.1} parent=1 // pred_check
      _
    $region47: #{roberta_pair_forward.1} parent=1 // pred_check_branch
      %57 = sbr.rel (0) target = $region49
    $region48: #{roberta_pair_forward.1} parent=1 // pred_region
      _
    $region49: #{roberta_pair_forward.1} parent=1 // pred_fallthru
      _
    // Predicated region
    $region50: #{roberta_pair_forward.1} parent=1 // pred_check
      _
    $region51: #{roberta_pair_forward.1} parent=1 // pred_check_branch
      %59 = sbr.rel (0) target = $region53
    $region52: #{roberta_pair_forward.1} parent=1 // pred_region
      _
    $region53: #{roberta_pair_forward.1} parent=1 // pred_fallthru
      _
    // Predicated region
    $region54: #{roberta_pair_forward.1} parent=1 // pred_check
      _
    $region55: #{roberta_pair_forward.1} parent=1 // pred_check_branch
      %61 = sbr.rel (0) target = $region57
    $region56: #{roberta_pair_forward.1} parent=1 // pred_region
      _
    $region57: #{roberta_pair_forward.1} parent=1 // pred_fallthru
      _
    // Predicated region
    $region58: #{roberta_pair_forward.1} parent=1 // pred_check
      _
    $region59: #{roberta_pair_forward.1} parent=1 // pred_check_branch
      %63 = sbr.rel (0) target = $region61
    $region60: #{roberta_pair_forward.1} parent=1 // pred_region
      _
    $region61: #{roberta_pair_forward.1} parent=1 // pred_fallthru
      _
    // Predicated region
    $region62: #{roberta_pair_forward.1} parent=1 // pred_check
      _
    $region63: #{roberta_pair_forward.1} parent=1 // pred_check_branch
      %65 = sbr.rel (0) target = $region65
    $region64: #{roberta_pair_forward.1} parent=1 // pred_region
      _
    $region65: #{roberta_pair_forward.1} parent=1 // pred_fallthru
      _
    // Predicated region
    $region66: #{roberta_pair_forward.1} parent=1 // pred_check
      _
    $region67: #{roberta_pair_forward.1} parent=1 // pred_check_branch
      %67 = sbr.rel (0) target = $region69
    $region68: #{roberta_pair_forward.1} parent=1 // pred_region
      _
    $region69: #{roberta_pair_forward.1} parent=1 // pred_fallthru
      _
    // Predicated region
    $region70: #{roberta_pair_forward.1} parent=1 // pred_check
      _
    $region71: #{roberta_pair_forward.1} parent=1 // pred_check_branch
      %69 = sbr.rel (0) target = $region73
    $region72: #{roberta_pair_forward.1} parent=1 // pred_region
      _
    $region73: #{roberta_pair_forward.1} parent=1 // pred_fallthru
      _
    // Predicated region
    $region74: #{roberta_pair_forward.1} parent=1 // pred_check
      _
    $region75: #{roberta_pair_forward.1} parent=1 // pred_check_branch
      %71 = sbr.rel (0) target = $region77
    $region76: #{roberta_pair_forward.1} parent=1 // pred_region
      _
    $region77: #{roberta_pair_forward.1} parent=1 // pred_fallthru
      _
    // Predicated region
    $region78: #{roberta_pair_forward.1} parent=1 // pred_check
      _
    $region79: #{roberta_pair_forward.1} parent=1 // pred_check_branch
      %73 = sbr.rel (0) target = $region81
    $region80: #{roberta_pair_forward.1} parent=1 // pred_region
      _
    $region81: #{roberta_pair_forward.1} parent=1 // pred_fallthru
      _
    // Predicated region
    $region82: #{roberta_pair_forward.1} parent=1 // pred_check
      _
    $region83: #{roberta_pair_forward.1} parent=1 // pred_check_branch
      %75 = sbr.rel (0) target = $region85
    $region84: #{roberta_pair_forward.1} parent=1 // pred_region
      _
    $region85: #{roberta_pair_forward.1} parent=1 // pred_fallthru
      _
    // Predicated region
    $region86: #{roberta_pair_forward.1} parent=1 // pred_check
      _
    $region87: #{roberta_pair_forward.1} parent=1 // pred_check_branch
      %77 = sbr.rel (0) target = $region89
    $region88: #{roberta_pair_forward.1} parent=1 // pred_region
      _
    $region89: #{roberta_pair_forward.1} parent=1 // pred_fallthru
      _
    // Predicated region
    $region90: #{roberta_pair_forward.1} parent=1 // pred_check
      _
    $region91: #{roberta_pair_forward.1} parent=1 // pred_check_branch
      %79 = sbr.rel (0) target = $region93
    $region92: #{roberta_pair_forward.1} parent=1 // pred_region
      _
    $region93: #{roberta_pair_forward.1} parent=1 // pred_fallthru
      _
    // Predicated region
    $region94: #{roberta_pair_forward.1} parent=1 // pred_check
      _
    $region95: #{roberta_pair_forward.1} parent=1 // pred_check_branch
      %81 = sbr.rel (0) target = $region97
    $region96: #{roberta_pair_forward.1} parent=1 // pred_region
      _
    $region97: #{roberta_pair_forward.1} parent=1 // pred_fallthru
      _
    // Predicated region
    $region98: #{roberta_pair_forward.1} parent=1 // pred_check
      _
    $region99: #{roberta_pair_forward.1} parent=1 // pred_check_branch
      %83 = sbr.rel (0) target = $region101
    $region100: #{roberta_pair_forward.1} parent=1 // pred_region
      _
    $region101: #{roberta_pair_forward.1} parent=1 // pred_fallthru
      _
    // Predicated region
    $region102: #{roberta_pair_forward.1} parent=1 // pred_check
      _
    $region103: #{roberta_pair_forward.1} parent=1 // pred_check_branch
      %85 = sbr.rel (0) target = $region105
    $region104: #{roberta_pair_forward.1} parent=1 // pred_region
      _
    $region105: #{roberta_pair_forward.1} parent=1 // pred_fallthru
      _
    // Predicated region
    $region106: #{roberta_pair_forward.1} parent=1 // pred_check
      _
    $region107: #{roberta_pair_forward.1} parent=1 // pred_check_branch
      %87 = sbr.rel (0) target = $region109
    $region108: #{roberta_pair_forward.1} parent=1 // pred_region
      _
    $region109: #{roberta_pair_forward.1} parent=1 // pred_fallthru
      _
    // Predicated region
    $region110: #{roberta_pair_forward.1} parent=1 // pred_check
      _
    $region111: #{roberta_pair_forward.1} parent=1 // pred_check_branch
      %89 = sbr.rel (0) target = $region113
    $region112: #{roberta_pair_forward.1} parent=1 // pred_region
      _
    $region113: #{roberta_pair_forward.1} parent=1 // pred_fallthru
      _
    %v90 = vld [vmem:[%s0] sm:$0xff]
    %v91 = vld [vmem:[%s0 + $0x8] sm:$0xff]
    %v92 = vld [vmem:[%s1] sm:$0xff]
    %v93 = vld [vmem:[%s1 + $0x8] sm:$0xff]
    %v94 = vlaneseq
    %v95 = vand.u32 %v94, 127
    %96 = vset.pattern.permute.xlu0 0
    %97 = vperm.xlu0 %96, %v90
    %v98 = vpop.permute.xlu0 %97
    %99 = vset.pattern.permute.xlu0 0
    %100 = vperm.xlu0 %99, %v91
    %v101 = vpop.permute.xlu0 %100
    %vm102 = vcmp.eq.s32.totalorder %v95, %v98
    %vm103 = vcmp.eq.s32.totalorder %v95, %v101
    %v104 = vsel %vm102, 1, 0
    %v105 = vsel %vm103, 1, 0
    %v106 = vcvt.s32.f32 %v104
    %v107 = vcvt.s32.f32 %v105
    %108 = vset.pattern.permute.xlu0 0
    %109 = vperm.xlu0 %108, %v92
    %v110 = vpop.permute.xlu0 %109
    %111 = vset.pattern.permute.xlu0 0
    %112 = vperm.xlu0 %111, %v93
    %v113 = vpop.permute.xlu0 %112
    %vm114 = vcmp.eq.s32.totalorder %v95, %v110
    %vm115 = vcmp.eq.s32.totalorder %v95, %v113
    %v116 = vsel %vm114, 1, 0
    %v117 = vsel %vm115, 1, 0
    %v118 = vcvt.s32.f32 %v116
    %v119 = vcvt.s32.f32 %v117
    %v120 = vld [vmem:[%s3] sm:$0xff]
    %v121 = vld [vmem:[%s3 + $0x8] sm:$0xff]
    %v122 = vld [vmem:[%s3 + $0x10] sm:$0xff]
    %v123 = vld [vmem:[%s3 + $0x18] sm:$0xff]
    %v124 = vld [vmem:[%s3 + $0x20] sm:$0xff]
    %v125 = vld [vmem:[%s3 + $0x28] sm:$0xff]
    %v126 = vld [vmem:[%s3 + $0x30] sm:$0xff]
    %v127 = vld [vmem:[%s3 + $0x38] sm:$0xff]
    %v128 = vld [vmem:[%s4] sm:$0xff]
    %v129 = vld [vmem:[%s4 + $0x8] sm:$0xff]
    %vm130 = vcmask 130048
    %v132 = vsel %vm130, %v118, 0
    %v135 = vsel %vm130, %v119, 0
    %137 = vmatpush.msra.mxu0 0.0
    %138 = vmatpush.msra.mxu0 0.0
    %139 = vmatpush.msra.mxu0 0.0
    %140 = vmatpush.msra.mxu0 0.0
    %141 = vmatpush.msra.mxu0 0.0
    %142 = vmatpush.msra.mxu0 0.0
    %143 = vmatpush.msra.mxu0 0.0
    %144 = vmatpush.msra.mxu0 0.0
    %145 = vmatpush.msra.mxu0 0.0
    %146 = vmatpush.msra.mxu0 0.0
    %147 = vmatpush.msra.mxu0 0.0
    %148 = vmatpush.msra.mxu0 0.0
    %149 = vmatpush.msra.mxu0 0.0
    %150 = vmatpush.msra.mxu0 0.0
    %151 = vmatpush.msra.mxu0 %v129
    %152 = vmatpush.msra.mxu0 %v128
    %153 = vmatmul.f32.gmra.mxu0 %v132
    %v154 = vpop.f32.mrf.mxu0
    %v155 = vadd.f32 0.0, %v154
    %156 = vmatmul.f32.gmra.mxu0 %v135
    %v157 = vpop.f32.mrf.mxu0
    %v158 = vadd.f32 0.0, %v157
    %159 = vdwg.mxu0
    %vm160 = vcmask 523264
    %v162 = vsel %vm160, %v106, 0
    %v165 = vsel %vm160, %v107, 0
    %167 = vmatpush.msra.mxu0 0.0
    %168 = vmatpush.msra.mxu0 0.0
    %169 = vmatpush.msra.mxu0 0.0
    %170 = vmatpush.msra.mxu0 0.0
    %171 = vmatpush.msra.mxu0 0.0
    %172 = vmatpush.msra.mxu0 0.0
    %173 = vmatpush.msra.mxu0 0.0
    %174 = vmatpush.msra.mxu0 0.0
    %175 = vmatpush.msra.mxu0 %v127
    %176 = vmatpush.msra.mxu0 %v126
    %177 = vmatpush.msra.mxu0 %v125
    %178 = vmatpush.msra.mxu0 %v124
    %179 = vmatpush.msra.mxu0 %v123
    %180 = vmatpush.msra.mxu0 %v122
    %181 = vmatpush.msra.mxu0 %v121
    %182 = vmatpush.msra.mxu0 %v120
    %183 = vmatmul.f32.gmra.mxu0 %v162
    %v184 = vpop.f32.mrf.mxu0
    %v185 = vadd.f32 %v155, %v184
    %186 = vmatmul.f32.gmra.mxu0 %v165
    %v187 = vpop.f32.mrf.mxu0
    %v188 = vadd.f32 %v158, %v187
    %189 = vdwg.mxu0
    %v190 = vld [vmem:[%s5] sm:$0x1]
    %v192 = vperm.slane %v190, 0
    %v194 = vadd.f32 %v185, %v192
    %v195 = vadd.f32 %v188, %v192
    %v196 = vld [vmem:[%s6] sm:$0x1]
    %v197 = vld [vmem:[%s7] sm:$0x1]
    %vm198 = vcmask 261120
    %v199 = vsel %vm198, %v194, 0.0
    %200 = vadd.xlane.f32.xlu0 %v199
    %v201 = vpop.xlane.xlu0 %200
    %v202 = vsel %vm198, %v195, 0.0
    %203 = vadd.xlane.f32.xlu0 %v202
    %v204 = vpop.xlane.xlu0 %203
    %v205 = vrcp.pop 32.0
    %v206 = vmul.f32 32.0, %v205
    %v207 = vsub.f32 1.0, %v206
    %v208 = vmul.f32 %v205, %v207
    %v209 = vadd.f32 %v205, %v208
    %vm210 = vweird.f32 %v205
    %v211 = vsel %vm210, %v205, %v209
    %v212 = vmul.f32 %v201, %v211
    %v213 = vmul.f32 %v204, %v211
    %v214 = vsub.f32 %v194, %v212
    %v215 = vsub.f32 %v195, %v213
    %v216 = vmul.f32 %v214, %v214
    %v217 = vmul.f32 %v215, %v215
    %v218 = vsel %vm198, %v216, 0.0
    %219 = vadd.xlane.f32.xlu0 %v218
    %v220 = vpop.xlane.xlu0 %219
    %v221 = vsel %vm198, %v217, 0.0
    %222 = vadd.xlane.f32.xlu0 %v221
    %v223 = vpop.xlane.xlu0 %222
    %v224 = vmul.f32 %v220, %v211
    %v225 = vmul.f32 %v223, %v211
    %v226 = vadd.f32 %v224, 1e-05
    %v227 = vadd.f32 %v225, 1e-05
    %v228 = vrsqrt.pop %v226
    %v229 = vmul.f32 %v228, %v226
    %v230 = vmul.f32 %v229, %v228
    %v231 = vmul.f32 0.5, %v230
    %v232 = vsub.f32 1.5, %v231
    %v233 = vmul.f32 %v228, %v232
    %vm234 = vweird.f32 %v226
    %vm235 = vweird.f32 %v228
    %vm236 = vmor %vm234, %vm235
    %v237 = vsel %vm236, %v228, %v233
    %v238 = vrsqrt.pop %v227
    %v239 = vmul.f32 %v238, %v227
    %v240 = vmul.f32 %v239, %v238
    %v241 = vmul.f32 0.5, %v240
    %v242 = vsub.f32 1.5, %v241
    %v243 = vmul.f32 %v238, %v242
    %vm244 = vweird.f32 %v227
    %vm245 = vweird.f32 %v238
    %vm246 = vmor %vm244, %vm245
    %v247 = vsel %vm246, %v238, %v243
    %v248 = vmul.f32 %v214, %v237
    %v249 = vmul.f32 %v215, %v247
    %v251 = vperm.slane %v196, 0
    %v253 = vmul.f32 %v248, %v251
    %v254 = vmul.f32 %v249, %v251
    %v256 = vperm.slane %v197, 0
    %v258 = vadd.f32 %v253, %v256
    %v259 = vadd.f32 %v254, %v256
    %v260 = vld [vmem:[%s8] sm:$0xff]
    %v261 = vld [vmem:[%s8 + $0x8] sm:$0xff]
    %v262 = vld [vmem:[%s8 + $0x10] sm:$0xff]
    %v263 = vld [vmem:[%s8 + $0x18] sm:$0xff]
    %v264 = vld [vmem:[%s9] sm:$0x1]
    %v266 = vperm.slane %v264, 0
    %v269 = vsel %vm198, %v258, 0
    %v272 = vsel %vm198, %v259, 0
    %274 = vmatpush.msra.mxu0 0.0
    %275 = vmatpush.msra.mxu0 0.0
    %276 = vmatpush.msra.mxu0 0.0
    %277 = vmatpush.msra.mxu0 0.0
    %278 = vmatpush.msra.mxu0 0.0
    %279 = vmatpush.msra.mxu0 0.0
    %280 = vmatpush.msra.mxu0 0.0
    %281 = vmatpush.msra.mxu0 0.0
    %282 = vmatpush.msra.mxu0 0.0
    %283 = vmatpush.msra.mxu0 0.0
    %284 = vmatpush.msra.mxu0 0.0
    %285 = vmatpush.msra.mxu0 0.0
    %286 = vmatpush.msra.mxu0 %v263
    %287 = vmatpush.msra.mxu0 %v262
    %288 = vmatpush.msra.mxu0 %v261
    %289 = vmatpush.msra.mxu0 %v260
    %290 = vmatmul.f32.gmra.mxu0 %v269
    %v291 = vpop.f32.mrf.mxu0
    %v292 = vadd.f32 %v266, %v291
    %293 = vmatmul.f32.gmra.mxu0 %v272
    %v294 = vpop.f32.mrf.mxu0
    %v295 = vadd.f32 %v266, %v294
    %296 = vdwg.mxu0
    %v297 = vld [vmem:[%s10] sm:$0xff]
    %v298 = vld [vmem:[%s10 + $0x8] sm:$0xff]
    %v299 = vld [vmem:[%s10 + $0x10] sm:$0xff]
    %v300 = vld [vmem:[%s10 + $0x18] sm:$0xff]
    %v301 = vld [vmem:[%s11] sm:$0x1]
    %v303 = vperm.slane %v301, 0
    %305 = vmatpush.msra.mxu0 0.0
    %306 = vmatpush.msra.mxu0 0.0
    %307 = vmatpush.msra.mxu0 0.0
    %308 = vmatpush.msra.mxu0 0.0
    %309 = vmatpush.msra.mxu0 0.0
    %310 = vmatpush.msra.mxu0 0.0
    %311 = vmatpush.msra.mxu0 0.0
    %312 = vmatpush.msra.mxu0 0.0
    %313 = vmatpush.msra.mxu0 0.0
    %314 = vmatpush.msra.mxu0 0.0
    %315 = vmatpush.msra.mxu0 0.0
    %316 = vmatpush.msra.mxu0 0.0
    %317 = vmatpush.msra.mxu0 %v300
    %318 = vmatpush.msra.mxu0 %v299
    %319 = vmatpush.msra.mxu0 %v298
    %320 = vmatpush.msra.mxu0 %v297
    %321 = vmatmul.f32.gmra.mxu0 %v269
    %v322 = vpop.f32.mrf.mxu0
    %v323 = vadd.f32 %v303, %v322
    %324 = vmatmul.f32.gmra.mxu0 %v272
    %v325 = vpop.f32.mrf.mxu0
    %v326 = vadd.f32 %v303, %v325
    %327 = vdwg.mxu0
    %v328 = vld [vmem:[%s12] sm:$0xff]
    %v329 = vld [vmem:[%s12 + $0x8] sm:$0xff]
    %v330 = vld [vmem:[%s12 + $0x10] sm:$0xff]
    %v331 = vld [vmem:[%s12 + $0x18] sm:$0xff]
    %v332 = vld [vmem:[%s13] sm:$0x1]
    %v334 = vperm.slane %v332, 0
    %336 = vmatpush.msra.mxu0 0.0
    %337 = vmatpush.msra.mxu0 0.0
    %338 = vmatpush.msra.mxu0 0.0
    %339 = vmatpush.msra.mxu0 0.0
    %340 = vmatpush.msra.mxu0 0.0
    %341 = vmatpush.msra.mxu0 0.0
    %342 = vmatpush.msra.mxu0 0.0
    %343 = vmatpush.msra.mxu0 0.0
    %344 = vmatpush.msra.mxu0 0.0
    %345 = vmatpush.msra.mxu0 0.0
    %346 = vmatpush.msra.mxu0 0.0
    %347 = vmatpush.msra.mxu0 0.0
    %348 = vmatpush.msra.mxu0 %v331
    %349 = vmatpush.msra.mxu0 %v330
    %350 = vmatpush.msra.mxu0 %v329
    %351 = vmatpush.msra.mxu0 %v328
    %352 = vmatmul.f32.gmra.mxu0 %v269
    %v353 = vpop.f32.mrf.mxu0
    %v354 = vadd.f32 %v334, %v353
    %355 = vmatmul.f32.gmra.mxu0 %v272
    %v356 = vpop.f32.mrf.mxu0
    %v357 = vadd.f32 %v334, %v356
    %358 = vdwg.mxu0
    %v360 = vsel %vm130, %v292, 0
    %v363 = vsel %vm130, %v323, 0
    %365 = vmatpush.xpose.msra.mxu0 0.0
    %366 = vmatpush.xpose.msra.mxu0 0.0
    %367 = vmatpush.xpose.msra.mxu0 0.0
    %368 = vmatpush.xpose.msra.mxu0 0.0
    %369 = vmatpush.xpose.msra.mxu0 0.0
    %370 = vmatpush.xpose.msra.mxu0 0.0
    %371 = vmatpush.xpose.msra.mxu0 0.0
    %372 = vmatpush.xpose.msra.mxu0 0.0
    %373 = vmatpush.xpose.msra.mxu0 0.0
    %374 = vmatpush.xpose.msra.mxu0 0.0
    %375 = vmatpush.xpose.msra.mxu0 0.0
    %376 = vmatpush.xpose.msra.mxu0 0.0
    %377 = vmatpush.xpose.msra.mxu0 0.0
    %378 = vmatpush.xpose.msra.mxu0 0.0
    %379 = vmatpush.xpose.msra.mxu0 0.0
    %380 = vmatpush.xpose.msra.mxu0 %v363
    %381 = vmatmul.f32.gmra.mxu0 %v360
    %v382 = vpop.f32.mrf.mxu0
    %v383 = vadd.f32 0.0, %v382
    %384 = vdwg.mxu0
    %v385 = vmul.f32 %v383, 0.25
    %v386 = vld [vmem:[%s2] sm:$0x1]
    %v388 = vperm.slane %v386, 0
    %v390 = vadd.f32 %v385, %v388
    %vm391 = vcmask 64512
    %v392 = vsel %vm391, %v390, -inf
    %393 = vmax.xlane.f32.xlu0 %v392
    %v394 = vpop.xlane.xlu0 %393
    %v395 = vsub.f32 %v390, %v394
    %v396 = vmul.f32 %v395, 1.442695
    %v397 = vpow.pop %v396
    %v398 = vsel %vm391, %v397, 0.0
    %399 = vadd.xlane.f32.xlu0 %v398
    %v400 = vpop.xlane.xlu0 %399
    %v401 = vrcp.pop %v400
    %v402 = vmul.f32 %v397, %v401
    %v404 = vsel %vm391, %v402, 0
    %406 = vmatpush.msra.mxu0 0.0
    %407 = vmatpush.msra.mxu0 0.0
    %408 = vmatpush.msra.mxu0 0.0
    %409 = vmatpush.msra.mxu0 0.0
    %410 = vmatpush.msra.mxu0 0.0
    %411 = vmatpush.msra.mxu0 0.0
    %412 = vmatpush.msra.mxu0 0.0
    %413 = vmatpush.msra.mxu0 0.0
    %414 = vmatpush.msra.mxu0 0.0
    %415 = vmatpush.msra.mxu0 0.0
    %416 = vmatpush.msra.mxu0 0.0
    %417 = vmatpush.msra.mxu0 0.0
    %418 = vmatpush.msra.mxu0 0.0
    %419 = vmatpush.msra.mxu0 0.0
    %420 = vmatpush.msra.mxu0 0.0
    %421 = vmatpush.msra.mxu0 %v354
    %422 = vmatmul.f32.gmra.mxu0 %v404
    %v423 = vpop.f32.mrf.mxu0
    %v424 = vadd.f32 0.0, %v423
    %425 = vdwg.mxu0
    %v427 = vsel %vm130, %v295, 0
    %v430 = vsel %vm130, %v326, 0
    %432 = vmatpush.xpose.msra.mxu0 0.0
    %433 = vmatpush.xpose.msra.mxu0 0.0
    %434 = vmatpush.xpose.msra.mxu0 0.0
    %435 = vmatpush.xpose.msra.mxu0 0.0
    %436 = vmatpush.xpose.msra.mxu0 0.0
    %437 = vmatpush.xpose.msra.mxu0 0.0
    %438 = vmatpush.xpose.msra.mxu0 0.0
    %439 = vmatpush.xpose.msra.mxu0 0.0
    %440 = vmatpush.xpose.msra.mxu0 0.0
    %441 = vmatpush.xpose.msra.mxu0 0.0
    %442 = vmatpush.xpose.msra.mxu0 0.0
    %443 = vmatpush.xpose.msra.mxu0 0.0
    %444 = vmatpush.xpose.msra.mxu0 0.0
    %445 = vmatpush.xpose.msra.mxu0 0.0
    %446 = vmatpush.xpose.msra.mxu0 0.0
    %447 = vmatpush.xpose.msra.mxu0 %v430
    %448 = vmatmul.f32.gmra.mxu0 %v427
    %v449 = vpop.f32.mrf.mxu0
    %v450 = vadd.f32 0.0, %v449
    %451 = vdwg.mxu0
    %v452 = vmul.f32 %v450, 0.25
    %s453 = scalar_lea.vmem %s2, 1
    %v454 = vld [vmem:[%s453] sm:$0x1]
    %v456 = vperm.slane %v454, 0
    %v458 = vadd.f32 %v452, %v456
    %v459 = vsel %vm391, %v458, -inf
    %460 = vmax.xlane.f32.xlu0 %v459
    %v461 = vpop.xlane.xlu0 %460
    %v462 = vsub.f32 %v458, %v461
    %v463 = vmul.f32 %v462, 1.442695
    %v464 = vpow.pop %v463
    %v465 = vsel %vm391, %v464, 0.0
    %466 = vadd.xlane.f32.xlu0 %v465
    %v467 = vpop.xlane.xlu0 %466
    %v468 = vrcp.pop %v467
    %v469 = vmul.f32 %v464, %v468
    %v471 = vsel %vm391, %v469, 0
    %473 = vmatpush.msra.mxu0 0.0
    %474 = vmatpush.msra.mxu0 0.0
    %475 = vmatpush.msra.mxu0 0.0
    %476 = vmatpush.msra.mxu0 0.0
    %477 = vmatpush.msra.mxu0 0.0
    %478 = vmatpush.msra.mxu0 0.0
    %479 = vmatpush.msra.mxu0 0.0
    %480 = vmatpush.msra.mxu0 0.0
    %481 = vmatpush.msra.mxu0 0.0
    %482 = vmatpush.msra.mxu0 0.0
    %483 = vmatpush.msra.mxu0 0.0
    %484 = vmatpush.msra.mxu0 0.0
    %485 = vmatpush.msra.mxu0 0.0
    %486 = vmatpush.msra.mxu0 0.0
    %487 = vmatpush.msra.mxu0 0.0
    %488 = vmatpush.msra.mxu0 %v357
    %489 = vmatmul.f32.gmra.mxu0 %v471
    %v490 = vpop.f32.mrf.mxu0
    %v491 = vadd.f32 0.0, %v490
    %492 = vdwg.mxu0
    %v493 = vld [vmem:[%s14] sm:$0xff]
    %v494 = vld [vmem:[%s14 + $0x8] sm:$0xff]
    %s495 = scalar_lea.vmem %s8, 32
    %v496 = vld [vmem:[%s495] sm:$0xff]
    %v497 = vld [vmem:[%s495 + $0x8] sm:$0xff]
    %v498 = vld [vmem:[%s495 + $0x10] sm:$0xff]
    %v499 = vld [vmem:[%s495 + $0x18] sm:$0xff]
    %s500 = scalar_lea.vmem %s9, 1
    %v501 = vld [vmem:[%s500] sm:$0x1]
    %v503 = vperm.slane %v501, 0
    %505 = vmatpush.msra.mxu0 0.0
    %506 = vmatpush.msra.mxu0 0.0
    %507 = vmatpush.msra.mxu0 0.0
    %508 = vmatpush.msra.mxu0 0.0
    %509 = vmatpush.msra.mxu0 0.0
    %510 = vmatpush.msra.mxu0 0.0
    %511 = vmatpush.msra.mxu0 0.0
    %512 = vmatpush.msra.mxu0 0.0
    %513 = vmatpush.msra.mxu0 0.0
    %514 = vmatpush.msra.mxu0 0.0
    %515 = vmatpush.msra.mxu0 0.0
    %516 = vmatpush.msra.mxu0 0.0
    %517 = vmatpush.msra.mxu0 %v499
    %518 = vmatpush.msra.mxu0 %v498
    %519 = vmatpush.msra.mxu0 %v497
    %520 = vmatpush.msra.mxu0 %v496
    %521 = vmatmul.f32.gmra.mxu0 %v269
    %v522 = vpop.f32.mrf.mxu0
    %v523 = vadd.f32 %v503, %v522
    %524 = vmatmul.f32.gmra.mxu0 %v272
    %v525 = vpop.f32.mrf.mxu0
    %v526 = vadd.f32 %v503, %v525
    %527 = vdwg.mxu0
    %s528 = scalar_lea.vmem %s10, 32
    %v529 = vld [vmem:[%s528] sm:$0xff]
    %v530 = vld [vmem:[%s528 + $0x8] sm:$0xff]
    %v531 = vld [vmem:[%s528 + $0x10] sm:$0xff]
    %v532 = vld [vmem:[%s528 + $0x18] sm:$0xff]
    %s533 = scalar_lea.vmem %s11, 1
    %v534 = vld [vmem:[%s533] sm:$0x1]
    %v536 = vperm.slane %v534, 0
    %538 = vmatpush.msra.mxu0 0.0
    %539 = vmatpush.msra.mxu0 0.0
    %540 = vmatpush.msra.mxu0 0.0
    %541 = vmatpush.msra.mxu0 0.0
    %542 = vmatpush.msra.mxu0 0.0
    %543 = vmatpush.msra.mxu0 0.0
    %544 = vmatpush.msra.mxu0 0.0
    %545 = vmatpush.msra.mxu0 0.0
    %546 = vmatpush.msra.mxu0 0.0
    %547 = vmatpush.msra.mxu0 0.0
    %548 = vmatpush.msra.mxu0 0.0
    %549 = vmatpush.msra.mxu0 0.0
    %550 = vmatpush.msra.mxu0 %v532
    %551 = vmatpush.msra.mxu0 %v531
    %552 = vmatpush.msra.mxu0 %v530
    %553 = vmatpush.msra.mxu0 %v529
    %554 = vmatmul.f32.gmra.mxu0 %v269
    %v555 = vpop.f32.mrf.mxu0
    %v556 = vadd.f32 %v536, %v555
    %557 = vmatmul.f32.gmra.mxu0 %v272
    %v558 = vpop.f32.mrf.mxu0
    %v559 = vadd.f32 %v536, %v558
    %560 = vdwg.mxu0
    %s561 = scalar_lea.vmem %s12, 32
    %v562 = vld [vmem:[%s561] sm:$0xff]
    %v563 = vld [vmem:[%s561 + $0x8] sm:$0xff]
    %v564 = vld [vmem:[%s561 + $0x10] sm:$0xff]
    %v565 = vld [vmem:[%s561 + $0x18] sm:$0xff]
    %s566 = scalar_lea.vmem %s13, 1
    %v567 = vld [vmem:[%s566] sm:$0x1]
    %v569 = vperm.slane %v567, 0
    %571 = vmatpush.msra.mxu0 0.0
    %572 = vmatpush.msra.mxu0 0.0
    %573 = vmatpush.msra.mxu0 0.0
    %574 = vmatpush.msra.mxu0 0.0
    %575 = vmatpush.msra.mxu0 0.0
    %576 = vmatpush.msra.mxu0 0.0
    %577 = vmatpush.msra.mxu0 0.0
    %578 = vmatpush.msra.mxu0 0.0
    %579 = vmatpush.msra.mxu0 0.0
    %580 = vmatpush.msra.mxu0 0.0
    %581 = vmatpush.msra.mxu0 0.0
    %582 = vmatpush.msra.mxu0 0.0
    %583 = vmatpush.msra.mxu0 %v565
    %584 = vmatpush.msra.mxu0 %v564
    %585 = vmatpush.msra.mxu0 %v563
    %586 = vmatpush.msra.mxu0 %v562
    %587 = vmatmul.f32.gmra.mxu0 %v269
    %v588 = vpop.f32.mrf.mxu0
    %v589 = vadd.f32 %v569, %v588
    %590 = vmatmul.f32.gmra.mxu0 %v272
    %v591 = vpop.f32.mrf.mxu0
    %v592 = vadd.f32 %v569, %v591
    %593 = vdwg.mxu0
    %v595 = vsel %vm130, %v523, 0
    %v598 = vsel %vm130, %v556, 0
    %600 = vmatpush.xpose.msra.mxu0 0.0
    %601 = vmatpush.xpose.msra.mxu0 0.0
    %602 = vmatpush.xpose.msra.mxu0 0.0
    %603 = vmatpush.xpose.msra.mxu0 0.0
    %604 = vmatpush.xpose.msra.mxu0 0.0
    %605 = vmatpush.xpose.msra.mxu0 0.0
    %606 = vmatpush.xpose.msra.mxu0 0.0
    %607 = vmatpush.xpose.msra.mxu0 0.0
    %608 = vmatpush.xpose.msra.mxu0 0.0
    %609 = vmatpush.xpose.msra.mxu0 0.0
    %610 = vmatpush.xpose.msra.mxu0 0.0
    %611 = vmatpush.xpose.msra.mxu0 0.0
    %612 = vmatpush.xpose.msra.mxu0 0.0
    %613 = vmatpush.xpose.msra.mxu0 0.0
    %614 = vmatpush.xpose.msra.mxu0 0.0
    %615 = vmatpush.xpose.msra.mxu0 %v598
    %616 = vmatmul.f32.gmra.mxu0 %v595
    %v617 = vpop.f32.mrf.mxu0
    %v618 = vadd.f32 0.0, %v617
    %619 = vdwg.mxu0
    %v620 = vmul.f32 %v618, 0.25
    %v621 = vadd.f32 %v620, %v388
    %v622 = vsel %vm391, %v621, -inf
    %623 = vmax.xlane.f32.xlu0 %v622
    %v624 = vpop.xlane.xlu0 %623
    %v625 = vsub.f32 %v621, %v624
    %v626 = vmul.f32 %v625, 1.442695
    %v627 = vpow.pop %v626
    %v628 = vsel %vm391, %v627, 0.0
    %629 = vadd.xlane.f32.xlu0 %v628
    %v630 = vpop.xlane.xlu0 %629
    %v631 = vrcp.pop %v630
    %v632 = vmul.f32 %v627, %v631
    %v634 = vsel %vm391, %v632, 0
    %636 = vmatpush.msra.mxu0 0.0
    %637 = vmatpush.msra.mxu0 0.0
    %638 = vmatpush.msra.mxu0 0.0
    %639 = vmatpush.msra.mxu0 0.0
    %640 = vmatpush.msra.mxu0 0.0
    %641 = vmatpush.msra.mxu0 0.0
    %642 = vmatpush.msra.mxu0 0.0
    %643 = vmatpush.msra.mxu0 0.0
    %644 = vmatpush.msra.mxu0 0.0
    %645 = vmatpush.msra.mxu0 0.0
    %646 = vmatpush.msra.mxu0 0.0
    %647 = vmatpush.msra.mxu0 0.0
    %648 = vmatpush.msra.mxu0 0.0
    %649 = vmatpush.msra.mxu0 0.0
    %650 = vmatpush.msra.mxu0 0.0
    %651 = vmatpush.msra.mxu0 %v589
    %652 = vmatmul.f32.gmra.mxu0 %v634
    %v653 = vpop.f32.mrf.mxu0
    %v654 = vadd.f32 0.0, %v653
    %655 = vdwg.mxu0
    %v657 = vsel %vm130, %v526, 0
    %v660 = vsel %vm130, %v559, 0
    %662 = vmatpush.xpose.msra.mxu0 0.0
    %663 = vmatpush.xpose.msra.mxu0 0.0
    %664 = vmatpush.xpose.msra.mxu0 0.0
    %665 = vmatpush.xpose.msra.mxu0 0.0
    %666 = vmatpush.xpose.msra.mxu0 0.0
    %667 = vmatpush.xpose.msra.mxu0 0.0
    %668 = vmatpush.xpose.msra.mxu0 0.0
    %669 = vmatpush.xpose.msra.mxu0 0.0
    %670 = vmatpush.xpose.msra.mxu0 0.0
    %671 = vmatpush.xpose.msra.mxu0 0.0
    %672 = vmatpush.xpose.msra.mxu0 0.0
    %673 = vmatpush.xpose.msra.mxu0 0.0
    %674 = vmatpush.xpose.msra.mxu0 0.0
    %675 = vmatpush.xpose.msra.mxu0 0.0
    %676 = vmatpush.xpose.msra.mxu0 0.0
    %677 = vmatpush.xpose.msra.mxu0 %v660
    %678 = vmatmul.f32.gmra.mxu0 %v657
    %v679 = vpop.f32.mrf.mxu0
    %v680 = vadd.f32 0.0, %v679
    %681 = vdwg.mxu0
    %v682 = vmul.f32 %v680, 0.25
    %v683 = vadd.f32 %v682, %v456
    %v684 = vsel %vm391, %v683, -inf
    %685 = vmax.xlane.f32.xlu0 %v684
    %v686 = vpop.xlane.xlu0 %685
    %v687 = vsub.f32 %v683, %v686
    %v688 = vmul.f32 %v687, 1.442695
    %v689 = vpow.pop %v688
    %v690 = vsel %vm391, %v689, 0.0
    %691 = vadd.xlane.f32.xlu0 %v690
    %v692 = vpop.xlane.xlu0 %691
    %v693 = vrcp.pop %v692
    %v694 = vmul.f32 %v689, %v693
    %v696 = vsel %vm391, %v694, 0
    %698 = vmatpush.msra.mxu0 0.0
    %699 = vmatpush.msra.mxu0 0.0
    %700 = vmatpush.msra.mxu0 0.0
    %701 = vmatpush.msra.mxu0 0.0
    %702 = vmatpush.msra.mxu0 0.0
    %703 = vmatpush.msra.mxu0 0.0
    %704 = vmatpush.msra.mxu0 0.0
    %705 = vmatpush.msra.mxu0 0.0
    %706 = vmatpush.msra.mxu0 0.0
    %707 = vmatpush.msra.mxu0 0.0
    %708 = vmatpush.msra.mxu0 0.0
    %709 = vmatpush.msra.mxu0 0.0
    %710 = vmatpush.msra.mxu0 0.0
    %711 = vmatpush.msra.mxu0 0.0
    %712 = vmatpush.msra.mxu0 0.0
    %713 = vmatpush.msra.mxu0 %v592
    %714 = vmatmul.f32.gmra.mxu0 %v696
    %v715 = vpop.f32.mrf.mxu0
    %v716 = vadd.f32 0.0, %v715
    %717 = vdwg.mxu0
    %s718 = scalar_lea.vmem %s14, 16
    %v719 = vld [vmem:[%s718] sm:$0xff]
    %v720 = vld [vmem:[%s718 + $0x8] sm:$0xff]
    %v722 = vsel %vm130, %v654, 0
    %v725 = vsel %vm130, %v716, 0
    %727 = vmatpush.msra.mxu0 0.0
    %728 = vmatpush.msra.mxu0 0.0
    %729 = vmatpush.msra.mxu0 0.0
    %730 = vmatpush.msra.mxu0 0.0
    %731 = vmatpush.msra.mxu0 0.0
    %732 = vmatpush.msra.mxu0 0.0
    %733 = vmatpush.msra.mxu0 0.0
    %734 = vmatpush.msra.mxu0 0.0
    %735 = vmatpush.msra.mxu0 0.0
    %736 = vmatpush.msra.mxu0 0.0
    %737 = vmatpush.msra.mxu0 0.0
    %738 = vmatpush.msra.mxu0 0.0
    %739 = vmatpush.msra.mxu0 0.0
    %740 = vmatpush.msra.mxu0 0.0
    %741 = vmatpush.msra.mxu0 %v720
    %742 = vmatpush.msra.mxu0 %v719
    %743 = vmatmul.f32.gmra.mxu0 %v722
    %v744 = vpop.f32.mrf.mxu0
    %v745 = vadd.f32 0.0, %v744
    %746 = vmatmul.f32.gmra.mxu0 %v725
    %v747 = vpop.f32.mrf.mxu0
    %v748 = vadd.f32 0.0, %v747
    %749 = vdwg.mxu0
    %v751 = vsel %vm130, %v424, 0
    %v754 = vsel %vm130, %v491, 0
    %756 = vmatpush.msra.mxu0 0.0
    %757 = vmatpush.msra.mxu0 0.0
    %758 = vmatpush.msra.mxu0 0.0
    %759 = vmatpush.msra.mxu0 0.0
    %760 = vmatpush.msra.mxu0 0.0
    %761 = vmatpush.msra.mxu0 0.0
    %762 = vmatpush.msra.mxu0 0.0
    %763 = vmatpush.msra.mxu0 0.0
    %764 = vmatpush.msra.mxu0 0.0
    %765 = vmatpush.msra.mxu0 0.0
    %766 = vmatpush.msra.mxu0 0.0
    %767 = vmatpush.msra.mxu0 0.0
    %768 = vmatpush.msra.mxu0 0.0
    %769 = vmatpush.msra.mxu0 0.0
    %770 = vmatpush.msra.mxu0 %v494
    %771 = vmatpush.msra.mxu0 %v493
    %772 = vmatmul.f32.gmra.mxu0 %v751
    %v773 = vpop.f32.mrf.mxu0
    %v774 = vadd.f32 %v745, %v773
    %775 = vmatmul.f32.gmra.mxu0 %v754
    %v776 = vpop.f32.mrf.mxu0
    %v777 = vadd.f32 %v748, %v776
    %778 = vdwg.mxu0
    %v779 = vld [vmem:[%s15] sm:$0x1]
    %v781 = vperm.slane %v779, 0
    %v783 = vadd.f32 %v774, %v781
    %v784 = vadd.f32 %v777, %v781
    %v785 = vadd.f32 %v258, %v783
    %v786 = vadd.f32 %v259, %v784
    %v787 = vld [vmem:[%s16] sm:$0x1]
    %v788 = vld [vmem:[%s17] sm:$0x1]
    %v789 = vsel %vm198, %v785, 0.0
    %790 = vadd.xlane.f32.xlu0 %v789
    %v791 = vpop.xlane.xlu0 %790
    %v792 = vsel %vm198, %v786, 0.0
    %793 = vadd.xlane.f32.xlu0 %v792
    %v794 = vpop.xlane.xlu0 %793
    %v795 = vmul.f32 %v791, %v211
    %v796 = vmul.f32 %v794, %v211
    %v797 = vsub.f32 %v785, %v795
    %v798 = vsub.f32 %v786, %v796
    %v799 = vmul.f32 %v797, %v797
    %v800 = vmul.f32 %v798, %v798
    %v801 = vsel %vm198, %v799, 0.0
    %802 = vadd.xlane.f32.xlu0 %v801
    %v803 = vpop.xlane.xlu0 %802
    %v804 = vsel %vm198, %v800, 0.0
    %805 = vadd.xlane.f32.xlu0 %v804
    %v806 = vpop.xlane.xlu0 %805
    %v807 = vmul.f32 %v803, %v211
    %v808 = vmul.f32 %v806, %v211
    %v809 = vadd.f32 %v807, 1e-05
    %v810 = vadd.f32 %v808, 1e-05
    %v811 = vrsqrt.pop %v809
    %v812 = vmul.f32 %v811, %v809
    %v813 = vmul.f32 %v812, %v811
    %v814 = vmul.f32 0.5, %v813
    %v815 = vsub.f32 1.5, %v814
    %v816 = vmul.f32 %v811, %v815
    %vm817 = vweird.f32 %v809
    %vm818 = vweird.f32 %v811
    %vm819 = vmor %vm817, %vm818
    %v820 = vsel %vm819, %v811, %v816
    %v821 = vrsqrt.pop %v810
    %v822 = vmul.f32 %v821, %v810
    %v823 = vmul.f32 %v822, %v821
    %v824 = vmul.f32 0.5, %v823
    %v825 = vsub.f32 1.5, %v824
    %v826 = vmul.f32 %v821, %v825
    %vm827 = vweird.f32 %v810
    %vm828 = vweird.f32 %v821
    %vm829 = vmor %vm827, %vm828
    %v830 = vsel %vm829, %v821, %v826
    %v831 = vmul.f32 %v797, %v820
    %v832 = vmul.f32 %v798, %v830
    %v834 = vperm.slane %v787, 0
    %v836 = vmul.f32 %v831, %v834
    %v837 = vmul.f32 %v832, %v834
    %v839 = vperm.slane %v788, 0
    %v841 = vadd.f32 %v836, %v839
    %v842 = vadd.f32 %v837, %v839
    %v843 = vld [vmem:[%s18] sm:$0xff]
    %v844 = vld [vmem:[%s18 + $0x8] sm:$0xff]
    %v845 = vld [vmem:[%s18 + $0x10] sm:$0xff]
    %v846 = vld [vmem:[%s18 + $0x18] sm:$0xff]
    %v847 = vld [vmem:[%s19] sm:$0x1]
    %v849 = vperm.slane %v847, 0
    %v852 = vsel %vm198, %v841, 0
    %v855 = vsel %vm198, %v842, 0
    %857 = vmatpush.msra.mxu0 0.0
    %858 = vmatpush.msra.mxu0 0.0
    %859 = vmatpush.msra.mxu0 0.0
    %860 = vmatpush.msra.mxu0 0.0
    %861 = vmatpush.msra.mxu0 0.0
    %862 = vmatpush.msra.mxu0 0.0
    %863 = vmatpush.msra.mxu0 0.0
    %864 = vmatpush.msra.mxu0 0.0
    %865 = vmatpush.msra.mxu0 0.0
    %866 = vmatpush.msra.mxu0 0.0
    %867 = vmatpush.msra.mxu0 0.0
    %868 = vmatpush.msra.mxu0 0.0
    %869 = vmatpush.msra.mxu0 %v846
    %870 = vmatpush.msra.mxu0 %v845
    %871 = vmatpush.msra.mxu0 %v844
    %872 = vmatpush.msra.mxu0 %v843
    %873 = vmatmul.f32.gmra.mxu0 %v852
    %v874 = vpop.f32.mrf.mxu0
    %v875 = vadd.f32 %v849, %v874
    %876 = vmatmul.f32.gmra.mxu0 %v855
    %v877 = vpop.f32.mrf.mxu0
    %v878 = vadd.f32 %v849, %v877
    %879 = vdwg.mxu0
    %v880 = vmul.f32 %v875, %v875
    %v881 = vmul.f32 %v878, %v878
    %v882 = vmul.f32 %v875, %v880
    %v883 = vmul.f32 %v878, %v881
    %v884 = vmul.f32 %v882, 0.044715
    %v885 = vmul.f32 %v883, 0.044715
    %v886 = vadd.f32 %v875, %v884
    %v887 = vadd.f32 %v878, %v885
    %v888 = vmul.f32 %v886, 0.7978846
    %v889 = vmul.f32 %v887, 0.7978846
    %v890 = vtanh.pop %v888
    %v891 = vtanh.pop %v889
    %v892 = vadd.f32 %v890, 1.0
    %v893 = vadd.f32 %v891, 1.0
    %v894 = vmul.f32 %v892, 0.5
    %v895 = vmul.f32 %v893, 0.5
    %v896 = vmul.f32 %v875, %v894
    %v897 = vmul.f32 %v878, %v895
    %v898 = vld [vmem:[%s20] sm:$0xff]
    %v899 = vld [vmem:[%s20 + $0x8] sm:$0xff]
    %v900 = vld [vmem:[%s20 + $0x10] sm:$0xff]
    %v901 = vld [vmem:[%s20 + $0x18] sm:$0xff]
    %v902 = vld [vmem:[%s20 + $0x20] sm:$0xff]
    %v903 = vld [vmem:[%s20 + $0x28] sm:$0xff]
    %v904 = vld [vmem:[%s20 + $0x30] sm:$0xff]
    %v905 = vld [vmem:[%s20 + $0x38] sm:$0xff]
    %v906 = vld [vmem:[%s21] sm:$0x1]
    %v908 = vperm.slane %v906, 0
    %v911 = vsel %vm160, %v896, 0
    %v914 = vsel %vm160, %v897, 0
    %916 = vmatpush.msra.mxu0 0.0
    %917 = vmatpush.msra.mxu0 0.0
    %918 = vmatpush.msra.mxu0 0.0
    %919 = vmatpush.msra.mxu0 0.0
    %920 = vmatpush.msra.mxu0 0.0
    %921 = vmatpush.msra.mxu0 0.0
    %922 = vmatpush.msra.mxu0 0.0
    %923 = vmatpush.msra.mxu0 0.0
    %924 = vmatpush.msra.mxu0 %v905
    %925 = vmatpush.msra.mxu0 %v904
    %926 = vmatpush.msra.mxu0 %v903
    %927 = vmatpush.msra.mxu0 %v902
    %928 = vmatpush.msra.mxu0 %v901
    %929 = vmatpush.msra.mxu0 %v900
    %930 = vmatpush.msra.mxu0 %v899
    %931 = vmatpush.msra.mxu0 %v898
    %932 = vmatmul.f32.gmra.mxu0 %v911
    %v933 = vpop.f32.mrf.mxu0
    %v934 = vadd.f32 %v908, %v933
    %935 = vmatmul.f32.gmra.mxu0 %v914
    %v936 = vpop.f32.mrf.mxu0
    %v937 = vadd.f32 %v908, %v936
    %938 = vdwg.mxu0
    %v939 = vadd.f32 %v841, %v934
    %v940 = vadd.f32 %v842, %v937
    %v941 = vld [vmem:[%s22] sm:$0x1]
    %v942 = vld [vmem:[%s23] sm:$0x1]
    %v943 = vsel %vm198, %v939, 0.0
    %944 = vadd.xlane.f32.xlu0 %v943
    %v945 = vpop.xlane.xlu0 %944
    %v946 = vsel %vm198, %v940, 0.0
    %947 = vadd.xlane.f32.xlu0 %v946
    %v948 = vpop.xlane.xlu0 %947
    %v949 = vmul.f32 %v945, %v211
    %v950 = vmul.f32 %v948, %v211
    %v951 = vsub.f32 %v939, %v949
    %v952 = vsub.f32 %v940, %v950
    %v953 = vmul.f32 %v951, %v951
    %v954 = vmul.f32 %v952, %v952
    %v955 = vsel %vm198, %v953, 0.0
    %956 = vadd.xlane.f32.xlu0 %v955
    %v957 = vpop.xlane.xlu0 %956
    %v958 = vsel %vm198, %v954, 0.0
    %959 = vadd.xlane.f32.xlu0 %v958
    %v960 = vpop.xlane.xlu0 %959
    %v961 = vmul.f32 %v957, %v211
    %v962 = vmul.f32 %v960, %v211
    %v963 = vadd.f32 %v961, 1e-05
    %v964 = vadd.f32 %v962, 1e-05
    %v965 = vrsqrt.pop %v963
    %v966 = vmul.f32 %v965, %v963
    %v967 = vmul.f32 %v966, %v965
    %v968 = vmul.f32 0.5, %v967
    %v969 = vsub.f32 1.5, %v968
    %v970 = vmul.f32 %v965, %v969
    %vm971 = vweird.f32 %v963
    %vm972 = vweird.f32 %v965
    %vm973 = vmor %vm971, %vm972
    %v974 = vsel %vm973, %v965, %v970
    %v975 = vrsqrt.pop %v964
    %v976 = vmul.f32 %v975, %v964
    %v977 = vmul.f32 %v976, %v975
    %v978 = vmul.f32 0.5, %v977
    %v979 = vsub.f32 1.5, %v978
    %v980 = vmul.f32 %v975, %v979
    %vm981 = vweird.f32 %v964
    %vm982 = vweird.f32 %v975
    %vm983 = vmor %vm981, %vm982
    %v984 = vsel %vm983, %v975, %v980
    %v985 = vmul.f32 %v951, %v974
    %v986 = vmul.f32 %v952, %v984
    %v988 = vperm.slane %v941, 0
    %v990 = vmul.f32 %v985, %v988
    %v991 = vmul.f32 %v986, %v988
    %v993 = vperm.slane %v942, 0
    %v995 = vadd.f32 %v990, %v993
    %v996 = vadd.f32 %v991, %v993
    %s997 = scalar_lea.vmem %s8, 64
    %v998 = vld [vmem:[%s997] sm:$0xff]
    %v999 = vld [vmem:[%s997 + $0x8] sm:$0xff]
    %v1000 = vld [vmem:[%s997 + $0x10] sm:$0xff]
    %v1001 = vld [vmem:[%s997 + $0x18] sm:$0xff]
    %s1002 = scalar_lea.vmem %s9, 2
    %v1003 = vld [vmem:[%s1002] sm:$0x1]
    %v1005 = vperm.slane %v1003, 0
    %v1008 = vsel %vm198, %v995, 0
    %v1011 = vsel %vm198, %v996, 0
    %1013 = vmatpush.msra.mxu0 0.0
    %1014 = vmatpush.msra.mxu0 0.0
    %1015 = vmatpush.msra.mxu0 0.0
    %1016 = vmatpush.msra.mxu0 0.0
    %1017 = vmatpush.msra.mxu0 0.0
    %1018 = vmatpush.msra.mxu0 0.0
    %1019 = vmatpush.msra.mxu0 0.0
    %1020 = vmatpush.msra.mxu0 0.0
    %1021 = vmatpush.msra.mxu0 0.0
    %1022 = vmatpush.msra.mxu0 0.0
    %1023 = vmatpush.msra.mxu0 0.0
    %1024 = vmatpush.msra.mxu0 0.0
    %1025 = vmatpush.msra.mxu0 %v1001
    %1026 = vmatpush.msra.mxu0 %v1000
    %1027 = vmatpush.msra.mxu0 %v999
    %1028 = vmatpush.msra.mxu0 %v998
    %1029 = vmatmul.f32.gmra.mxu0 %v1008
    %v1030 = vpop.f32.mrf.mxu0
    %v1031 = vadd.f32 %v1005, %v1030
    %1032 = vmatmul.f32.gmra.mxu0 %v1011
    %v1033 = vpop.f32.mrf.mxu0
    %v1034 = vadd.f32 %v1005, %v1033
    %1035 = vdwg.mxu0
    %s1036 = scalar_lea.vmem %s10, 64
    %v1037 = vld [vmem:[%s1036] sm:$0xff]
    %v1038 = vld [vmem:[%s1036 + $0x8] sm:$0xff]
    %v1039 = vld [vmem:[%s1036 + $0x10] sm:$0xff]
    %v1040 = vld [vmem:[%s1036 + $0x18] sm:$0xff]
    %s1041 = scalar_lea.vmem %s11, 2
    %v1042 = vld [vmem:[%s1041] sm:$0x1]
    %v1044 = vperm.slane %v1042, 0
    %1046 = vmatpush.msra.mxu0 0.0
    %1047 = vmatpush.msra.mxu0 0.0
    %1048 = vmatpush.msra.mxu0 0.0
    %1049 = vmatpush.msra.mxu0 0.0
    %1050 = vmatpush.msra.mxu0 0.0
    %1051 = vmatpush.msra.mxu0 0.0
    %1052 = vmatpush.msra.mxu0 0.0
    %1053 = vmatpush.msra.mxu0 0.0
    %1054 = vmatpush.msra.mxu0 0.0
    %1055 = vmatpush.msra.mxu0 0.0
    %1056 = vmatpush.msra.mxu0 0.0
    %1057 = vmatpush.msra.mxu0 0.0
    %1058 = vmatpush.msra.mxu0 %v1040
    %1059 = vmatpush.msra.mxu0 %v1039
    %1060 = vmatpush.msra.mxu0 %v1038
    %1061 = vmatpush.msra.mxu0 %v1037
    %1062 = vmatmul.f32.gmra.mxu0 %v1008
    %v1063 = vpop.f32.mrf.mxu0
    %v1064 = vadd.f32 %v1044, %v1063
    %1065 = vmatmul.f32.gmra.mxu0 %v1011
    %v1066 = vpop.f32.mrf.mxu0
    %v1067 = vadd.f32 %v1044, %v1066
    %1068 = vdwg.mxu0
    %s1069 = scalar_lea.vmem %s12, 64
    %v1070 = vld [vmem:[%s1069] sm:$0xff]
    %v1071 = vld [vmem:[%s1069 + $0x8] sm:$0xff]
    %v1072 = vld [vmem:[%s1069 + $0x10] sm:$0xff]
    %v1073 = vld [vmem:[%s1069 + $0x18] sm:$0xff]
    %s1074 = scalar_lea.vmem %s13, 2
    %v1075 = vld [vmem:[%s1074] sm:$0x1]
    %v1077 = vperm.slane %v1075, 0
    %1079 = vmatpush.msra.mxu0 0.0
    %1080 = vmatpush.msra.mxu0 0.0
    %1081 = vmatpush.msra.mxu0 0.0
    %1082 = vmatpush.msra.mxu0 0.0
    %1083 = vmatpush.msra.mxu0 0.0
    %1084 = vmatpush.msra.mxu0 0.0
    %1085 = vmatpush.msra.mxu0 0.0
    %1086 = vmatpush.msra.mxu0 0.0
    %1087 = vmatpush.msra.mxu0 0.0
    %1088 = vmatpush.msra.mxu0 0.0
    %1089 = vmatpush.msra.mxu0 0.0
    %1090 = vmatpush.msra.mxu0 0.0
    %1091 = vmatpush.msra.mxu0 %v1073
    %1092 = vmatpush.msra.mxu0 %v1072
    %1093 = vmatpush.msra.mxu0 %v1071
    %1094 = vmatpush.msra.mxu0 %v1070
    %1095 = vmatmul.f32.gmra.mxu0 %v1008
    %v1096 = vpop.f32.mrf.mxu0
    %v1097 = vadd.f32 %v1077, %v1096
    %1098 = vmatmul.f32.gmra.mxu0 %v1011
    %v1099 = vpop.f32.mrf.mxu0
    %v1100 = vadd.f32 %v1077, %v1099
    %1101 = vdwg.mxu0
    %v1103 = vsel %vm130, %v1031, 0
    %v1106 = vsel %vm130, %v1064, 0
    %1108 = vmatpush.xpose.msra.mxu0 0.0
    %1109 = vmatpush.xpose.msra.mxu0 0.0
    %1110 = vmatpush.xpose.msra.mxu0 0.0
    %1111 = vmatpush.xpose.msra.mxu0 0.0
    %1112 = vmatpush.xpose.msra.mxu0 0.0
    %1113 = vmatpush.xpose.msra.mxu0 0.0
    %1114 = vmatpush.xpose.msra.mxu0 0.0
    %1115 = vmatpush.xpose.msra.mxu0 0.0
    %1116 = vmatpush.xpose.msra.mxu0 0.0
    %1117 = vmatpush.xpose.msra.mxu0 0.0
    %1118 = vmatpush.xpose.msra.mxu0 0.0
    %1119 = vmatpush.xpose.msra.mxu0 0.0
    %1120 = vmatpush.xpose.msra.mxu0 0.0
    %1121 = vmatpush.xpose.msra.mxu0 0.0
    %1122 = vmatpush.xpose.msra.mxu0 0.0
    %1123 = vmatpush.xpose.msra.mxu0 %v1106
    %1124 = vmatmul.f32.gmra.mxu0 %v1103
    %v1125 = vpop.f32.mrf.mxu0
    %v1126 = vadd.f32 0.0, %v1125
    %1127 = vdwg.mxu0
    %v1128 = vmul.f32 %v1126, 0.25
    %v1129 = vadd.f32 %v1128, %v388
    %v1130 = vsel %vm391, %v1129, -inf
    %1131 = vmax.xlane.f32.xlu0 %v1130
    %v1132 = vpop.xlane.xlu0 %1131
    %v1133 = vsub.f32 %v1129, %v1132
    %v1134 = vmul.f32 %v1133, 1.442695
    %v1135 = vpow.pop %v1134
    %v1136 = vsel %vm391, %v1135, 0.0
    %1137 = vadd.xlane.f32.xlu0 %v1136
    %v1138 = vpop.xlane.xlu0 %1137
    %v1139 = vrcp.pop %v1138
    %v1140 = vmul.f32 %v1135, %v1139
    %v1142 = vsel %vm391, %v1140, 0
    %1144 = vmatpush.msra.mxu0 0.0
    %1145 = vmatpush.msra.mxu0 0.0
    %1146 = vmatpush.msra.mxu0 0.0
    %1147 = vmatpush.msra.mxu0 0.0
    %1148 = vmatpush.msra.mxu0 0.0
    %1149 = vmatpush.msra.mxu0 0.0
    %1150 = vmatpush.msra.mxu0 0.0
    %1151 = vmatpush.msra.mxu0 0.0
    %1152 = vmatpush.msra.mxu0 0.0
    %1153 = vmatpush.msra.mxu0 0.0
    %1154 = vmatpush.msra.mxu0 0.0
    %1155 = vmatpush.msra.mxu0 0.0
    %1156 = vmatpush.msra.mxu0 0.0
    %1157 = vmatpush.msra.mxu0 0.0
    %1158 = vmatpush.msra.mxu0 0.0
    %1159 = vmatpush.msra.mxu0 %v1097
    %1160 = vmatmul.f32.gmra.mxu0 %v1142
    %v1161 = vpop.f32.mrf.mxu0
    %v1162 = vadd.f32 0.0, %v1161
    %1163 = vdwg.mxu0
    %v1165 = vsel %vm130, %v1034, 0
    %v1168 = vsel %vm130, %v1067, 0
    %1170 = vmatpush.xpose.msra.mxu0 0.0
    %1171 = vmatpush.xpose.msra.mxu0 0.0
    %1172 = vmatpush.xpose.msra.mxu0 0.0
    %1173 = vmatpush.xpose.msra.mxu0 0.0
    %1174 = vmatpush.xpose.msra.mxu0 0.0
    %1175 = vmatpush.xpose.msra.mxu0 0.0
    %1176 = vmatpush.xpose.msra.mxu0 0.0
    %1177 = vmatpush.xpose.msra.mxu0 0.0
    %1178 = vmatpush.xpose.msra.mxu0 0.0
    %1179 = vmatpush.xpose.msra.mxu0 0.0
    %1180 = vmatpush.xpose.msra.mxu0 0.0
    %1181 = vmatpush.xpose.msra.mxu0 0.0
    %1182 = vmatpush.xpose.msra.mxu0 0.0
    %1183 = vmatpush.xpose.msra.mxu0 0.0
    %1184 = vmatpush.xpose.msra.mxu0 0.0
    %1185 = vmatpush.xpose.msra.mxu0 %v1168
    %1186 = vmatmul.f32.gmra.mxu0 %v1165
    %v1187 = vpop.f32.mrf.mxu0
    %v1188 = vadd.f32 0.0, %v1187
    %1189 = vdwg.mxu0
    %v1190 = vmul.f32 %v1188, 0.25
    %v1191 = vadd.f32 %v1190, %v456
    %v1192 = vsel %vm391, %v1191, -inf
    %1193 = vmax.xlane.f32.xlu0 %v1192
    %v1194 = vpop.xlane.xlu0 %1193
    %v1195 = vsub.f32 %v1191, %v1194
    %v1196 = vmul.f32 %v1195, 1.442695
    %v1197 = vpow.pop %v1196
    %v1198 = vsel %vm391, %v1197, 0.0
    %1199 = vadd.xlane.f32.xlu0 %v1198
    %v1200 = vpop.xlane.xlu0 %1199
    %v1201 = vrcp.pop %v1200
    %v1202 = vmul.f32 %v1197, %v1201
    %v1204 = vsel %vm391, %v1202, 0
    %1206 = vmatpush.msra.mxu0 0.0
    %1207 = vmatpush.msra.mxu0 0.0
    %1208 = vmatpush.msra.mxu0 0.0
    %1209 = vmatpush.msra.mxu0 0.0
    %1210 = vmatpush.msra.mxu0 0.0
    %1211 = vmatpush.msra.mxu0 0.0
    %1212 = vmatpush.msra.mxu0 0.0
    %1213 = vmatpush.msra.mxu0 0.0
    %1214 = vmatpush.msra.mxu0 0.0
    %1215 = vmatpush.msra.mxu0 0.0
    %1216 = vmatpush.msra.mxu0 0.0
    %1217 = vmatpush.msra.mxu0 0.0
    %1218 = vmatpush.msra.mxu0 0.0
    %1219 = vmatpush.msra.mxu0 0.0
    %1220 = vmatpush.msra.mxu0 0.0
    %1221 = vmatpush.msra.mxu0 %v1100
    %1222 = vmatmul.f32.gmra.mxu0 %v1204
    %v1223 = vpop.f32.mrf.mxu0
    %v1224 = vadd.f32 0.0, %v1223
    %1225 = vdwg.mxu0
    %s1226 = scalar_lea.vmem %s14, 32
    %v1227 = vld [vmem:[%s1226] sm:$0xff]
    %v1228 = vld [vmem:[%s1226 + $0x8] sm:$0xff]
    %s1229 = scalar_lea.vmem %s8, 96
    %v1230 = vld [vmem:[%s1229] sm:$0xff]
    %v1231 = vld [vmem:[%s1229 + $0x8] sm:$0xff]
    %v1232 = vld [vmem:[%s1229 + $0x10] sm:$0xff]
    %v1233 = vld [vmem:[%s1229 + $0x18] sm:$0xff]
    %s1234 = scalar_lea.vmem %s9, 3
    %v1235 = vld [vmem:[%s1234] sm:$0x1]
    %v1237 = vperm.slane %v1235, 0
    %1239 = vmatpush.msra.mxu0 0.0
    %1240 = vmatpush.msra.mxu0 0.0
    %1241 = vmatpush.msra.mxu0 0.0
    %1242 = vmatpush.msra.mxu0 0.0
    %1243 = vmatpush.msra.mxu0 0.0
    %1244 = vmatpush.msra.mxu0 0.0
    %1245 = vmatpush.msra.mxu0 0.0
    %1246 = vmatpush.msra.mxu0 0.0
    %1247 = vmatpush.msra.mxu0 0.0
    %1248 = vmatpush.msra.mxu0 0.0
    %1249 = vmatpush.msra.mxu0 0.0
    %1250 = vmatpush.msra.mxu0 0.0
    %1251 = vmatpush.msra.mxu0 %v1233
    %1252 = vmatpush.msra.mxu0 %v1232
    %1253 = vmatpush.msra.mxu0 %v1231
    %1254 = vmatpush.msra.mxu0 %v1230
    %1255 = vmatmul.f32.gmra.mxu0 %v1008
    %v1256 = vpop.f32.mrf.mxu0
    %v1257 = vadd.f32 %v1237, %v1256
    %1258 = vmatmul.f32.gmra.mxu0 %v1011
    %v1259 = vpop.f32.mrf.mxu0
    %v1260 = vadd.f32 %v1237, %v1259
    %1261 = vdwg.mxu0
    %s1262 = scalar_lea.vmem %s10, 96
    %v1263 = vld [vmem:[%s1262] sm:$0xff]
    %v1264 = vld [vmem:[%s1262 + $0x8] sm:$0xff]
    %v1265 = vld [vmem:[%s1262 + $0x10] sm:$0xff]
    %v1266 = vld [vmem:[%s1262 + $0x18] sm:$0xff]
    %s1267 = scalar_lea.vmem %s11, 3
    %v1268 = vld [vmem:[%s1267] sm:$0x1]
    %v1270 = vperm.slane %v1268, 0
    %1272 = vmatpush.msra.mxu0 0.0
    %1273 = vmatpush.msra.mxu0 0.0
    %1274 = vmatpush.msra.mxu0 0.0
    %1275 = vmatpush.msra.mxu0 0.0
    %1276 = vmatpush.msra.mxu0 0.0
    %1277 = vmatpush.msra.mxu0 0.0
    %1278 = vmatpush.msra.mxu0 0.0
    %1279 = vmatpush.msra.mxu0 0.0
    %1280 = vmatpush.msra.mxu0 0.0
    %1281 = vmatpush.msra.mxu0 0.0
    %1282 = vmatpush.msra.mxu0 0.0
    %1283 = vmatpush.msra.mxu0 0.0
    %1284 = vmatpush.msra.mxu0 %v1266
    %1285 = vmatpush.msra.mxu0 %v1265
    %1286 = vmatpush.msra.mxu0 %v1264
    %1287 = vmatpush.msra.mxu0 %v1263
    %1288 = vmatmul.f32.gmra.mxu0 %v1008
    %v1289 = vpop.f32.mrf.mxu0
    %v1290 = vadd.f32 %v1270, %v1289
    %1291 = vmatmul.f32.gmra.mxu0 %v1011
    %v1292 = vpop.f32.mrf.mxu0
    %v1293 = vadd.f32 %v1270, %v1292
    %1294 = vdwg.mxu0
    %s1295 = scalar_lea.vmem %s12, 96
    %v1296 = vld [vmem:[%s1295] sm:$0xff]
    %v1297 = vld [vmem:[%s1295 + $0x8] sm:$0xff]
    %v1298 = vld [vmem:[%s1295 + $0x10] sm:$0xff]
    %v1299 = vld [vmem:[%s1295 + $0x18] sm:$0xff]
    %s1300 = scalar_lea.vmem %s13, 3
    %v1301 = vld [vmem:[%s1300] sm:$0x1]
    %v1303 = vperm.slane %v1301, 0
    %1305 = vmatpush.msra.mxu0 0.0
    %1306 = vmatpush.msra.mxu0 0.0
    %1307 = vmatpush.msra.mxu0 0.0
    %1308 = vmatpush.msra.mxu0 0.0
    %1309 = vmatpush.msra.mxu0 0.0
    %1310 = vmatpush.msra.mxu0 0.0
    %1311 = vmatpush.msra.mxu0 0.0
    %1312 = vmatpush.msra.mxu0 0.0
    %1313 = vmatpush.msra.mxu0 0.0
    %1314 = vmatpush.msra.mxu0 0.0
    %1315 = vmatpush.msra.mxu0 0.0
    %1316 = vmatpush.msra.mxu0 0.0
    %1317 = vmatpush.msra.mxu0 %v1299
    %1318 = vmatpush.msra.mxu0 %v1298
    %1319 = vmatpush.msra.mxu0 %v1297
    %1320 = vmatpush.msra.mxu0 %v1296
    %1321 = vmatmul.f32.gmra.mxu0 %v1008
    %v1322 = vpop.f32.mrf.mxu0
    %v1323 = vadd.f32 %v1303, %v1322
    %1324 = vmatmul.f32.gmra.mxu0 %v1011
    %v1325 = vpop.f32.mrf.mxu0
    %v1326 = vadd.f32 %v1303, %v1325
    %1327 = vdwg.mxu0
    %v1329 = vsel %vm130, %v1257, 0
    %v1332 = vsel %vm130, %v1290, 0
    %1334 = vmatpush.xpose.msra.mxu0 0.0
    %1335 = vmatpush.xpose.msra.mxu0 0.0
    %1336 = vmatpush.xpose.msra.mxu0 0.0
    %1337 = vmatpush.xpose.msra.mxu0 0.0
    %1338 = vmatpush.xpose.msra.mxu0 0.0
    %1339 = vmatpush.xpose.msra.mxu0 0.0
    %1340 = vmatpush.xpose.msra.mxu0 0.0
    %1341 = vmatpush.xpose.msra.mxu0 0.0
    %1342 = vmatpush.xpose.msra.mxu0 0.0
    %1343 = vmatpush.xpose.msra.mxu0 0.0
    %1344 = vmatpush.xpose.msra.mxu0 0.0
    %1345 = vmatpush.xpose.msra.mxu0 0.0
    %1346 = vmatpush.xpose.msra.mxu0 0.0
    %1347 = vmatpush.xpose.msra.mxu0 0.0
    %1348 = vmatpush.xpose.msra.mxu0 0.0
    %1349 = vmatpush.xpose.msra.mxu0 %v1332
    %1350 = vmatmul.f32.gmra.mxu0 %v1329
    %v1351 = vpop.f32.mrf.mxu0
    %v1352 = vadd.f32 0.0, %v1351
    %1353 = vdwg.mxu0
    %v1354 = vmul.f32 %v1352, 0.25
    %v1355 = vadd.f32 %v1354, %v388
    %v1356 = vsel %vm391, %v1355, -inf
    %1357 = vmax.xlane.f32.xlu0 %v1356
    %v1358 = vpop.xlane.xlu0 %1357
    %v1359 = vsub.f32 %v1355, %v1358
    %v1360 = vmul.f32 %v1359, 1.442695
    %v1361 = vpow.pop %v1360
    %v1362 = vsel %vm391, %v1361, 0.0
    %1363 = vadd.xlane.f32.xlu0 %v1362
    %v1364 = vpop.xlane.xlu0 %1363
    %v1365 = vrcp.pop %v1364
    %v1366 = vmul.f32 %v1361, %v1365
    %v1368 = vsel %vm391, %v1366, 0
    %1370 = vmatpush.msra.mxu0 0.0
    %1371 = vmatpush.msra.mxu0 0.0
    %1372 = vmatpush.msra.mxu0 0.0
    %1373 = vmatpush.msra.mxu0 0.0
    %1374 = vmatpush.msra.mxu0 0.0
    %1375 = vmatpush.msra.mxu0 0.0
    %1376 = vmatpush.msra.mxu0 0.0
    %1377 = vmatpush.msra.mxu0 0.0
    %1378 = vmatpush.msra.mxu0 0.0
    %1379 = vmatpush.msra.mxu0 0.0
    %1380 = vmatpush.msra.mxu0 0.0
    %1381 = vmatpush.msra.mxu0 0.0
    %1382 = vmatpush.msra.mxu0 0.0
    %1383 = vmatpush.msra.mxu0 0.0
    %1384 = vmatpush.msra.mxu0 0.0
    %1385 = vmatpush.msra.mxu0 %v1323
    %1386 = vmatmul.f32.gmra.mxu0 %v1368
    %v1387 = vpop.f32.mrf.mxu0
    %v1388 = vadd.f32 0.0, %v1387
    %1389 = vdwg.mxu0
    %v1391 = vsel %vm130, %v1260, 0
    %v1394 = vsel %vm130, %v1293, 0
    %1396 = vmatpush.xpose.msra.mxu0 0.0
    %1397 = vmatpush.xpose.msra.mxu0 0.0
    %1398 = vmatpush.xpose.msra.mxu0 0.0
    %1399 = vmatpush.xpose.msra.mxu0 0.0
    %1400 = vmatpush.xpose.msra.mxu0 0.0
    %1401 = vmatpush.xpose.msra.mxu0 0.0
    %1402 = vmatpush.xpose.msra.mxu0 0.0
    %1403 = vmatpush.xpose.msra.mxu0 0.0
    %1404 = vmatpush.xpose.msra.mxu0 0.0
    %1405 = vmatpush.xpose.msra.mxu0 0.0
    %1406 = vmatpush.xpose.msra.mxu0 0.0
    %1407 = vmatpush.xpose.msra.mxu0 0.0
    %1408 = vmatpush.xpose.msra.mxu0 0.0
    %1409 = vmatpush.xpose.msra.mxu0 0.0
    %1410 = vmatpush.xpose.msra.mxu0 0.0
    %1411 = vmatpush.xpose.msra.mxu0 %v1394
    %1412 = vmatmul.f32.gmra.mxu0 %v1391
    %v1413 = vpop.f32.mrf.mxu0
    %v1414 = vadd.f32 0.0, %v1413
    %1415 = vdwg.mxu0
    %v1416 = vmul.f32 %v1414, 0.25
    %v1417 = vadd.f32 %v1416, %v456
    %v1418 = vsel %vm391, %v1417, -inf
    %1419 = vmax.xlane.f32.xlu0 %v1418
    %v1420 = vpop.xlane.xlu0 %1419
    %v1421 = vsub.f32 %v1417, %v1420
    %v1422 = vmul.f32 %v1421, 1.442695
    %v1423 = vpow.pop %v1422
    %v1424 = vsel %vm391, %v1423, 0.0
    %1425 = vadd.xlane.f32.xlu0 %v1424
    %v1426 = vpop.xlane.xlu0 %1425
    %v1427 = vrcp.pop %v1426
    %v1428 = vmul.f32 %v1423, %v1427
    %v1430 = vsel %vm391, %v1428, 0
    %1432 = vmatpush.msra.mxu0 0.0
    %1433 = vmatpush.msra.mxu0 0.0
    %1434 = vmatpush.msra.mxu0 0.0
    %1435 = vmatpush.msra.mxu0 0.0
    %1436 = vmatpush.msra.mxu0 0.0
    %1437 = vmatpush.msra.mxu0 0.0
    %1438 = vmatpush.msra.mxu0 0.0
    %1439 = vmatpush.msra.mxu0 0.0
    %1440 = vmatpush.msra.mxu0 0.0
    %1441 = vmatpush.msra.mxu0 0.0
    %1442 = vmatpush.msra.mxu0 0.0
    %1443 = vmatpush.msra.mxu0 0.0
    %1444 = vmatpush.msra.mxu0 0.0
    %1445 = vmatpush.msra.mxu0 0.0
    %1446 = vmatpush.msra.mxu0 0.0
    %1447 = vmatpush.msra.mxu0 %v1326
    %1448 = vmatmul.f32.gmra.mxu0 %v1430
    %v1449 = vpop.f32.mrf.mxu0
    %v1450 = vadd.f32 0.0, %v1449
    %1451 = vdwg.mxu0
    %s1452 = scalar_lea.vmem %s14, 48
    %v1453 = vld [vmem:[%s1452] sm:$0xff]
    %v1454 = vld [vmem:[%s1452 + $0x8] sm:$0xff]
    %v1456 = vsel %vm130, %v1388, 0
    %v1459 = vsel %vm130, %v1450, 0
    %1461 = vmatpush.msra.mxu0 0.0
    %1462 = vmatpush.msra.mxu0 0.0
    %1463 = vmatpush.msra.mxu0 0.0
    %1464 = vmatpush.msra.mxu0 0.0
    %1465 = vmatpush.msra.mxu0 0.0
    %1466 = vmatpush.msra.mxu0 0.0
    %1467 = vmatpush.msra.mxu0 0.0
    %1468 = vmatpush.msra.mxu0 0.0
    %1469 = vmatpush.msra.mxu0 0.0
    %1470 = vmatpush.msra.mxu0 0.0
    %1471 = vmatpush.msra.mxu0 0.0
    %1472 = vmatpush.msra.mxu0 0.0
    %1473 = vmatpush.msra.mxu0 0.0
    %1474 = vmatpush.msra.mxu0 0.0
    %1475 = vmatpush.msra.mxu0 %v1454
    %1476 = vmatpush.msra.mxu0 %v1453
    %1477 = vmatmul.f32.gmra.mxu0 %v1456
    %v1478 = vpop.f32.mrf.mxu0
    %v1479 = vadd.f32 0.0, %v1478
    %1480 = vmatmul.f32.gmra.mxu0 %v1459
    %v1481 = vpop.f32.mrf.mxu0
    %v1482 = vadd.f32 0.0, %v1481
    %1483 = vdwg.mxu0
    %v1485 = vsel %vm130, %v1162, 0
    %v1488 = vsel %vm130, %v1224, 0
    %1490 = vmatpush.msra.mxu0 0.0
    %1491 = vmatpush.msra.mxu0 0.0
    %1492 = vmatpush.msra.mxu0 0.0
    %1493 = vmatpush.msra.mxu0 0.0
    %1494 = vmatpush.msra.mxu0 0.0
    %1495 = vmatpush.msra.mxu0 0.0
    %1496 = vmatpush.msra.mxu0 0.0
    %1497 = vmatpush.msra.mxu0 0.0
    %1498 = vmatpush.msra.mxu0 0.0
    %1499 = vmatpush.msra.mxu0 0.0
    %1500 = vmatpush.msra.mxu0 0.0
    %1501 = vmatpush.msra.mxu0 0.0
    %1502 = vmatpush.msra.mxu0 0.0
    %1503 = vmatpush.msra.mxu0 0.0
    %1504 = vmatpush.msra.mxu0 %v1228
    %1505 = vmatpush.msra.mxu0 %v1227
    %1506 = vmatmul.f32.gmra.mxu0 %v1485
    %v1507 = vpop.f32.mrf.mxu0
    %v1508 = vadd.f32 %v1479, %v1507
    %1509 = vmatmul.f32.gmra.mxu0 %v1488
    %v1510 = vpop.f32.mrf.mxu0
    %v1511 = vadd.f32 %v1482, %v1510
    %1512 = vdwg.mxu0
    %s1513 = scalar_lea.vmem %s15, 1
    %v1514 = vld [vmem:[%s1513] sm:$0x1]
    %v1516 = vperm.slane %v1514, 0
    %v1518 = vadd.f32 %v1508, %v1516
    %v1519 = vadd.f32 %v1511, %v1516
    %v1520 = vadd.f32 %v995, %v1518
    %v1521 = vadd.f32 %v996, %v1519
    %s1522 = scalar_lea.vmem %s16, 1
    %v1523 = vld [vmem:[%s1522] sm:$0x1]
    %s1524 = scalar_lea.vmem %s17, 1
    %v1525 = vld [vmem:[%s1524] sm:$0x1]
    %v1526 = vsel %vm198, %v1520, 0.0
    %1527 = vadd.xlane.f32.xlu0 %v1526
    %v1528 = vpop.xlane.xlu0 %1527
    %v1529 = vsel %vm198, %v1521, 0.0
    %1530 = vadd.xlane.f32.xlu0 %v1529
    %v1531 = vpop.xlane.xlu0 %1530
    %v1532 = vmul.f32 %v1528, %v211
    %v1533 = vmul.f32 %v1531, %v211
    %v1534 = vsub.f32 %v1520, %v1532
    %v1535 = vsub.f32 %v1521, %v1533
    %v1536 = vmul.f32 %v1534, %v1534
    %v1537 = vmul.f32 %v1535, %v1535
    %v1538 = vsel %vm198, %v1536, 0.0
    %1539 = vadd.xlane.f32.xlu0 %v1538
    %v1540 = vpop.xlane.xlu0 %1539
    %v1541 = vsel %vm198, %v1537, 0.0
    %1542 = vadd.xlane.f32.xlu0 %v1541
    %v1543 = vpop.xlane.xlu0 %1542
    %v1544 = vmul.f32 %v1540, %v211
    %v1545 = vmul.f32 %v1543, %v211
    %v1546 = vadd.f32 %v1544, 1e-05
    %v1547 = vadd.f32 %v1545, 1e-05
    %v1548 = vrsqrt.pop %v1546
    %v1549 = vmul.f32 %v1548, %v1546
    %v1550 = vmul.f32 %v1549, %v1548
    %v1551 = vmul.f32 0.5, %v1550
    %v1552 = vsub.f32 1.5, %v1551
    %v1553 = vmul.f32 %v1548, %v1552
    %vm1554 = vweird.f32 %v1546
    %vm1555 = vweird.f32 %v1548
    %vm1556 = vmor %vm1554, %vm1555
    %v1557 = vsel %vm1556, %v1548, %v1553
    %v1558 = vrsqrt.pop %v1547
    %v1559 = vmul.f32 %v1558, %v1547
    %v1560 = vmul.f32 %v1559, %v1558
    %v1561 = vmul.f32 0.5, %v1560
    %v1562 = vsub.f32 1.5, %v1561
    %v1563 = vmul.f32 %v1558, %v1562
    %vm1564 = vweird.f32 %v1547
    %vm1565 = vweird.f32 %v1558
    %vm1566 = vmor %vm1564, %vm1565
    %v1567 = vsel %vm1566, %v1558, %v1563
    %v1568 = vmul.f32 %v1534, %v1557
    %v1569 = vmul.f32 %v1535, %v1567
    %v1571 = vperm.slane %v1523, 0
    %v1573 = vmul.f32 %v1568, %v1571
    %v1574 = vmul.f32 %v1569, %v1571
    %v1576 = vperm.slane %v1525, 0
    %v1578 = vadd.f32 %v1573, %v1576
    %v1579 = vadd.f32 %v1574, %v1576
    %s1580 = scalar_lea.vmem %s18, 32
    %v1581 = vld [vmem:[%s1580] sm:$0xff]
    %v1582 = vld [vmem:[%s1580 + $0x8] sm:$0xff]
    %v1583 = vld [vmem:[%s1580 + $0x10] sm:$0xff]
    %v1584 = vld [vmem:[%s1580 + $0x18] sm:$0xff]
    %s1585 = scalar_lea.vmem %s19, 1
    %v1586 = vld [vmem:[%s1585] sm:$0x1]
    %v1588 = vperm.slane %v1586, 0
    %v1591 = vsel %vm198, %v1578, 0
    %v1594 = vsel %vm198, %v1579, 0
    %1596 = vmatpush.msra.mxu0 0.0
    %1597 = vmatpush.msra.mxu0 0.0
    %1598 = vmatpush.msra.mxu0 0.0
    %1599 = vmatpush.msra.mxu0 0.0
    %1600 = vmatpush.msra.mxu0 0.0
    %1601 = vmatpush.msra.mxu0 0.0
    %1602 = vmatpush.msra.mxu0 0.0
    %1603 = vmatpush.msra.mxu0 0.0
    %1604 = vmatpush.msra.mxu0 0.0
    %1605 = vmatpush.msra.mxu0 0.0
    %1606 = vmatpush.msra.mxu0 0.0
    %1607 = vmatpush.msra.mxu0 0.0
    %1608 = vmatpush.msra.mxu0 %v1584
    %1609 = vmatpush.msra.mxu0 %v1583
    %1610 = vmatpush.msra.mxu0 %v1582
    %1611 = vmatpush.msra.mxu0 %v1581
    %1612 = vmatmul.f32.gmra.mxu0 %v1591
    %v1613 = vpop.f32.mrf.mxu0
    %v1614 = vadd.f32 %v1588, %v1613
    %1615 = vmatmul.f32.gmra.mxu0 %v1594
    %v1616 = vpop.f32.mrf.mxu0
    %v1617 = vadd.f32 %v1588, %v1616
    %1618 = vdwg.mxu0
    %v1619 = vmul.f32 %v1614, %v1614
    %v1620 = vmul.f32 %v1617, %v1617
    %v1621 = vmul.f32 %v1614, %v1619
    %v1622 = vmul.f32 %v1617, %v1620
    %v1623 = vmul.f32 %v1621, 0.044715
    %v1624 = vmul.f32 %v1622, 0.044715
    %v1625 = vadd.f32 %v1614, %v1623
    %v1626 = vadd.f32 %v1617, %v1624
    %v1627 = vmul.f32 %v1625, 0.7978846
    %v1628 = vmul.f32 %v1626, 0.7978846
    %v1629 = vtanh.pop %v1627
    %v1630 = vtanh.pop %v1628
    %v1631 = vadd.f32 %v1629, 1.0
    %v1632 = vadd.f32 %v1630, 1.0
    %v1633 = vmul.f32 %v1631, 0.5
    %v1634 = vmul.f32 %v1632, 0.5
    %v1635 = vmul.f32 %v1614, %v1633
    %v1636 = vmul.f32 %v1617, %v1634
    %s1637 = scalar_lea.vmem %s20, 64
    %v1638 = vld [vmem:[%s1637] sm:$0xff]
    %v1639 = vld [vmem:[%s1637 + $0x8] sm:$0xff]
    %v1640 = vld [vmem:[%s1637 + $0x10] sm:$0xff]
    %v1641 = vld [vmem:[%s1637 + $0x18] sm:$0xff]
    %v1642 = vld [vmem:[%s1637 + $0x20] sm:$0xff]
    %v1643 = vld [vmem:[%s1637 + $0x28] sm:$0xff]
    %v1644 = vld [vmem:[%s1637 + $0x30] sm:$0xff]
    %v1645 = vld [vmem:[%s1637 + $0x38] sm:$0xff]
    %s1646 = scalar_lea.vmem %s21, 1
    %v1647 = vld [vmem:[%s1646] sm:$0x1]
    %v1649 = vperm.slane %v1647, 0
    %v1652 = vsel %vm160, %v1635, 0
    %v1655 = vsel %vm160, %v1636, 0
    %1657 = vmatpush.msra.mxu0 0.0
    %1658 = vmatpush.msra.mxu0 0.0
    %1659 = vmatpush.msra.mxu0 0.0
    %1660 = vmatpush.msra.mxu0 0.0
    %1661 = vmatpush.msra.mxu0 0.0
    %1662 = vmatpush.msra.mxu0 0.0
    %1663 = vmatpush.msra.mxu0 0.0
    %1664 = vmatpush.msra.mxu0 0.0
    %1665 = vmatpush.msra.mxu0 %v1645
    %1666 = vmatpush.msra.mxu0 %v1644
    %1667 = vmatpush.msra.mxu0 %v1643
    %1668 = vmatpush.msra.mxu0 %v1642
    %1669 = vmatpush.msra.mxu0 %v1641
    %1670 = vmatpush.msra.mxu0 %v1640
    %1671 = vmatpush.msra.mxu0 %v1639
    %1672 = vmatpush.msra.mxu0 %v1638
    %1673 = vmatmul.f32.gmra.mxu0 %v1652
    %v1674 = vpop.f32.mrf.mxu0
    %v1675 = vadd.f32 %v1649, %v1674
    %1676 = vmatmul.f32.gmra.mxu0 %v1655
    %v1677 = vpop.f32.mrf.mxu0
    %v1678 = vadd.f32 %v1649, %v1677
    %1679 = vdwg.mxu0
    %v1680 = vadd.f32 %v1578, %v1675
    %v1681 = vadd.f32 %v1579, %v1678
    %s1682 = scalar_lea.vmem %s22, 1
    %v1683 = vld [vmem:[%s1682] sm:$0x1]
    %s1684 = scalar_lea.vmem %s23, 1
    %v1685 = vld [vmem:[%s1684] sm:$0x1]
    %v1686 = vsel %vm198, %v1680, 0.0
    %1687 = vadd.xlane.f32.xlu0 %v1686
    %v1688 = vpop.xlane.xlu0 %1687
    %v1689 = vsel %vm198, %v1681, 0.0
    %1690 = vadd.xlane.f32.xlu0 %v1689
    %v1691 = vpop.xlane.xlu0 %1690
    %v1692 = vmul.f32 %v1688, %v211
    %v1693 = vmul.f32 %v1691, %v211
    %v1694 = vsub.f32 %v1680, %v1692
    %v1695 = vsub.f32 %v1681, %v1693
    %v1696 = vmul.f32 %v1694, %v1694
    %v1697 = vmul.f32 %v1695, %v1695
    %v1698 = vsel %vm198, %v1696, 0.0
    %1699 = vadd.xlane.f32.xlu0 %v1698
    %v1700 = vpop.xlane.xlu0 %1699
    %v1701 = vsel %vm198, %v1697, 0.0
    %1702 = vadd.xlane.f32.xlu0 %v1701
    %v1703 = vpop.xlane.xlu0 %1702
    %v1704 = vmul.f32 %v1700, %v211
    %v1705 = vmul.f32 %v1703, %v211
    %v1706 = vadd.f32 %v1704, 1e-05
    %v1707 = vadd.f32 %v1705, 1e-05
    %v1708 = vrsqrt.pop %v1706
    %v1709 = vmul.f32 %v1708, %v1706
    %v1710 = vmul.f32 %v1709, %v1708
    %v1711 = vmul.f32 0.5, %v1710
    %v1712 = vsub.f32 1.5, %v1711
    %v1713 = vmul.f32 %v1708, %v1712
    %vm1714 = vweird.f32 %v1706
    %vm1715 = vweird.f32 %v1708
    %vm1716 = vmor %vm1714, %vm1715
    %v1717 = vsel %vm1716, %v1708, %v1713
    %v1718 = vrsqrt.pop %v1707
    %v1719 = vmul.f32 %v1718, %v1707
    %v1720 = vmul.f32 %v1719, %v1718
    %v1721 = vmul.f32 0.5, %v1720
    %v1722 = vsub.f32 1.5, %v1721
    %v1723 = vmul.f32 %v1718, %v1722
    %vm1724 = vweird.f32 %v1707
    %vm1725 = vweird.f32 %v1718
    %vm1726 = vmor %vm1724, %vm1725
    %v1727 = vsel %vm1726, %v1718, %v1723
    %v1728 = vmul.f32 %v1694, %v1717
    %v1729 = vmul.f32 %v1695, %v1727
    %v1731 = vperm.slane %v1683, 0
    %v1733 = vmul.f32 %v1728, %v1731
    %v1734 = vmul.f32 %v1729, %v1731
    %v1736 = vperm.slane %v1685, 0
    %v1738 = vadd.f32 %v1733, %v1736
    %v1739 = vadd.f32 %v1734, %v1736
    %v1740 = vlaneseq
    %v1741 = vshrl.u32 %v1740, 7
    %v1742 = vmul.u32 %v1741, 8
    %vm1743 = vcmp.eq.s32.totalorder %v95, %v1742
    %v1744 = vsel %vm1743, 1, 0
    %v1745 = vcvt.s32.f32 %v1744
    %v1747 = vsel %vm130, %v1745, 0
    %1749 = vmatpush.msra.mxu0 0.0
    %1750 = vmatpush.msra.mxu0 0.0
    %1751 = vmatpush.msra.mxu0 0.0
    %1752 = vmatpush.msra.mxu0 0.0
    %1753 = vmatpush.msra.mxu0 0.0
    %1754 = vmatpush.msra.mxu0 0.0
    %1755 = vmatpush.msra.mxu0 0.0
    %1756 = vmatpush.msra.mxu0 0.0
    %1757 = vmatpush.msra.mxu0 0.0
    %1758 = vmatpush.msra.mxu0 0.0
    %1759 = vmatpush.msra.mxu0 0.0
    %1760 = vmatpush.msra.mxu0 0.0
    %1761 = vmatpush.msra.mxu0 0.0
    %1762 = vmatpush.msra.mxu0 0.0
    %1763 = vmatpush.msra.mxu0 %v1739
    %1764 = vmatpush.msra.mxu0 %v1738
    %1765 = vmatmul.f32.gmra.mxu0 %v1747
    %v1766 = vpop.f32.mrf.mxu0
    %v1767 = vadd.f32 0.0, %v1766
    %1768 = vdwg.mxu0
    %v1769 = vld [vmem:[%s24] sm:$0xff]
    %v1770 = vld [vmem:[%s24 + $0x8] sm:$0xff]
    %v1771 = vld [vmem:[%s24 + $0x10] sm:$0xff]
    %v1772 = vld [vmem:[%s24 + $0x18] sm:$0xff]
    %v1773 = vld [vmem:[%s25] sm:$0x1]
    %v1775 = vperm.slane %v1773, 0
    %v1778 = vsel %vm198, %v1767, 0
    %1780 = vmatpush.msra.mxu0 0.0
    %1781 = vmatpush.msra.mxu0 0.0
    %1782 = vmatpush.msra.mxu0 0.0
    %1783 = vmatpush.msra.mxu0 0.0
    %1784 = vmatpush.msra.mxu0 0.0
    %1785 = vmatpush.msra.mxu0 0.0
    %1786 = vmatpush.msra.mxu0 0.0
    %1787 = vmatpush.msra.mxu0 0.0
    %1788 = vmatpush.msra.mxu0 0.0
    %1789 = vmatpush.msra.mxu0 0.0
    %1790 = vmatpush.msra.mxu0 0.0
    %1791 = vmatpush.msra.mxu0 0.0
    %1792 = vmatpush.msra.mxu0 %v1772
    %1793 = vmatpush.msra.mxu0 %v1771
    %1794 = vmatpush.msra.mxu0 %v1770
    %1795 = vmatpush.msra.mxu0 %v1769
    %1796 = vmatmul.f32.gmra.mxu0 %v1778
    %v1797 = vpop.f32.mrf.mxu0
    %v1798 = vadd.f32 %v1775, %v1797
    %1799 = vdwg.mxu0
    %v1800 = vtanh.pop %v1798
    %v1801 = vld [vmem:[%s26] sm:$0xff]
    %v1802 = vld [vmem:[%s26 + $0x8] sm:$0xff]
    %v1803 = vld [vmem:[%s26 + $0x10] sm:$0xff]
    %v1804 = vld [vmem:[%s26 + $0x18] sm:$0xff]
    %v1805 = vld [vmem:[%s27] sm:$0x1]
    %v1807 = vperm.slane %v1805, 0
    %v1810 = vsel %vm198, %v1800, 0
    %1812 = vmatpush.msra.mxu0 0.0
    %1813 = vmatpush.msra.mxu0 0.0
    %1814 = vmatpush.msra.mxu0 0.0
    %1815 = vmatpush.msra.mxu0 0.0
    %1816 = vmatpush.msra.mxu0 0.0
    %1817 = vmatpush.msra.mxu0 0.0
    %1818 = vmatpush.msra.mxu0 0.0
    %1819 = vmatpush.msra.mxu0 0.0
    %1820 = vmatpush.msra.mxu0 0.0
    %1821 = vmatpush.msra.mxu0 0.0
    %1822 = vmatpush.msra.mxu0 0.0
    %1823 = vmatpush.msra.mxu0 0.0
    %1824 = vmatpush.msra.mxu0 %v1804
    %1825 = vmatpush.msra.mxu0 %v1803
    %1826 = vmatpush.msra.mxu0 %v1802
    %1827 = vmatpush.msra.mxu0 %v1801
    %1828 = vmatmul.f32.gmra.mxu0 %v1810
    %v1829 = vpop.f32.mrf.mxu0
    %v1830 = vadd.f32 %v1807, %v1829
    %1831 = vdwg.mxu0
    %vm1832 = vcmask 9216
    %1833 = vst.msk [vmem:[#allocation2] sm:$0x3] %vm1832, %v1830
    // Predicated region
    $region114: #{roberta_pair_forward.1} parent=1 // pred_check
      _
    $region115: #{roberta_pair_forward.1} parent=1 // pred_check_branch
      %1835 = sbr.rel (0) target = $region117
    $region116: #{roberta_pair_forward.1} parent=1 // pred_region
      %1837 = vsyncadd [#allocation3], 0
      %s1839 = sshll.u32 [#allocation2], 4
      %s1840 = int_to_ptr.vmem [resolvable:$true] %s1839
      %s1841 = sshll.u32 %s28, 4
      %s1842 = int_to_ptr.hbm [resolvable:$true] %s1841
      %1844 = dma.vmem_to_hbm [thread:$0]  %s1840, 32, %s1842, [#allocation3]
    $region117: #{roberta_pair_forward.1} parent=1 // pred_fallthru
      _
    // Predicated region
    $region118: #{roberta_pair_forward.1} parent=1 // pred_check
      _
    $region119: #{roberta_pair_forward.1} parent=1 // pred_check_branch
      %1846 = sbr.rel (0) target = $region121
    $region120: #{roberta_pair_forward.1} parent=1 // pred_region
      %1848 = dma.done [#allocation3], 32
    $region121: #{roberta_pair_forward.1} parent=1 // pred_fallthru
      _
    %1849 = vsyncpa [#allocation3], 1

</llo_original>
